<compile_context>
chip_gen: v7x
topology: tpu7x:2x2x1
jax: 0.10.0
libtpu: 0.0.40
codegen_flags: <defaults>
</compile_context>

<pallas_src>
import functools

import jax
import jax.numpy as jnp
from jax import lax
from jax.experimental import pallas as pl
from jax.experimental.pallas import tpu as pltpu

EPS = 1e-5
LANE = 128


def _round_up(x, m):
    return (x + m - 1) // m * m


# ---------------------------------------------------------------------------
# Shared conv body: yields the f32 conv accumulator for each of the 4
# max-pool positions (dy, dx). K per dot = 4*Cin (full patch row, aligned).
# ---------------------------------------------------------------------------
def _conv_accs(xs_ref, w_ref, cin, cout_pad):
    tile_r = xs_ref.shape[0]
    for dy in range(2):
        # ref-slice loads (no value slicing); reused across the two dx positions
        rows = [xs_ref[:, pl.ds((dy + ky) * 4 * cin, 4 * cin)] for ky in range(3)]
        for dx in range(2):
            acc = jnp.zeros((tile_r, cout_pad), jnp.float32)
            for ky in range(3):
                acc = acc + jnp.dot(rows[ky], w_ref[ky, dx],
                                    preferred_element_type=jnp.float32)
            yield acc


# ---------------------------------------------------------------------------
# Phase 1: conv + per-channel sum / sum-of-squares (per-core partials).
# ---------------------------------------------------------------------------
def _stats_kernel(xs_ref, w_ref, stat_ref, *, cin, cout_pad):
    # xs_ref:   (TILE_R, 16*cin) bf16 -- 4x4 input patch per pooled pixel,
    #                                    columns ordered (py, px, cin).
    # w_ref:    (3, 2, 4*cin, cout_pad) bf16 -- per (ky, dx) row-aligned slab.
    # stat_ref: (1, 2, cout_pad) f32 -- [sum; sum of squares] (resident per core).
    @pl.when(pl.program_id(1) == 0)
    def _():
        stat_ref[...] = jnp.zeros_like(stat_ref)

    s = jnp.zeros((1, cout_pad), jnp.float32)
    ss = jnp.zeros((1, cout_pad), jnp.float32)
    for acc in _conv_accs(xs_ref, w_ref, cin, cout_pad):
        # conv bias omitted: exactly cancelled by train-mode BatchNorm.
        s = s + jnp.sum(acc, axis=0, keepdims=True)
        ss = ss + jnp.sum(acc * acc, axis=0, keepdims=True)
    stat_ref[...] += jnp.concatenate([s, ss], axis=0)[None]


# ---------------------------------------------------------------------------
# Phase 2: conv again + BN affine (precomputed scale/shift) + ReLU + 2x2 max.
# ---------------------------------------------------------------------------
def _apply_kernel(xs_ref, w_ref, scale_ref, shift_ref, o_ref, *, cin, cout_pad):
    tile_r = o_ref.shape[0]
    # hoist the broadcasts out of the unrolled dy/dx loop (no CSE in JAX)
    scale = jnp.broadcast_to(scale_ref[...], (tile_r, cout_pad))
    shift = jnp.broadcast_to(shift_ref[...], (tile_r, cout_pad))
    pooled = None
    for acc in _conv_accs(xs_ref, w_ref, cin, cout_pad):
        y = jnp.maximum(acc * scale + shift, 0.0)
        pooled = y if pooled is None else jnp.maximum(pooled, y)
    o_ref[...] = pooled.astype(o_ref.dtype)


# ---------------------------------------------------------------------------
# Wrapper glue
# ---------------------------------------------------------------------------
def _patches_bf16(x_nhwc):
    """(N, H, W, Cin) -> (N*Ho*Wo, 16*Cin) bf16 4x4 patches per pooled pixel."""
    x = x_nhwc.astype(jnp.bfloat16)                 # cast BEFORE materializing 4x
    N, H, W, Cin = x.shape
    Ho, Wo = H // 2, W // 2
    x_p = jnp.pad(x, ((0, 0), (1, 1), (1, 1), (0, 0)))
    cols = [x_p[:, py:py + 2 * Ho:2, px:px + 2 * Wo:2, :]
            for py in range(4) for px in range(4)]
    patches = jnp.stack(cols, axis=3)               # (N, Ho, Wo, 16, Cin)
    return patches.reshape(N * Ho * Wo, 16 * Cin)


def proto_block_forward_nhwc(x_nhwc, w_oihw, bias, gamma, beta, *, tile_r=1024):
    """ProtoBlock.forward, NHWC in -> NHWC bf16 out (chain-friendly)."""
    # Conv bias accepted for parity with nn.Conv2d but is a no-op under
    # train-mode BatchNorm (shift = beta - mean*scale cancels it).
    del bias
    N, H, W, Cin = x_nhwc.shape
    assert H % 2 == 0 and W % 2 == 0, "MaxPool2d(2) path assumes even H and W"
    Cout = w_oihw.shape[0]
    Ho, Wo = H // 2, W // 2
    R = N * Ho * Wo
    Cout_pad = _round_up(Cout, LANE)

    tile_r = max(16, min(tile_r, _round_up(R, 16)))   # multiple of 16 (bf16 packing)
    R_pad = _round_up(R, 2 * tile_r)                  # even tile count for 2-core split
    n_tiles = R_pad // tile_r
    n_half = n_tiles // 2

    xs = _patches_bf16(x_nhwc)
    xs = jnp.pad(xs, ((0, R_pad - R), (0, 0)))        # zero rows: no effect on stats

    # weights: (ky, dx, 4*Cin, Cout_pad) bf16; for pool offset dx the 3x3 taps are
    # placed at rows (dx+kx)*Cin + c, zeros elsewhere -> aligned K = 4*Cin dots.
    w_t = jnp.transpose(w_oihw, (2, 3, 1, 0)).reshape(3, 3 * Cin, Cout)
    w_rows = jnp.stack(
        [jnp.pad(w_t, ((0, 0), (dx * Cin, (1 - dx) * Cin), (0, 0))) for dx in range(2)],
        axis=1)
    w_rows = jnp.pad(w_rows, ((0, 0), (0, 0), (0, 0), (0, Cout_pad - Cout)))
    w_rows = w_rows.astype(jnp.bfloat16)

    flops = 2 * R_pad * 12 * (4 * Cin) * Cout_pad
    read_bytes = xs.size * 2 + w_rows.size * 2

    # ---- phase 1: per-channel sum / sum-of-squares of the conv outputs ------
    partials = pl.pallas_call(
        functools.partial(_stats_kernel, cin=Cin, cout_pad=Cout_pad),
        out_shape=jax.ShapeDtypeStruct((2, 2, Cout_pad), jnp.float32),
        grid=(2, n_half),
        in_specs=[pl.BlockSpec((tile_r, 16 * Cin), lambda c, i: (c * n_half + i, 0)),
                  pl.BlockSpec((3, 2, 4 * Cin, Cout_pad), lambda c, i: (0, 0, 0, 0))],
        out_specs=pl.BlockSpec((1, 2, Cout_pad), lambda c, i: (c, 0, 0)),
        compiler_params=pltpu.CompilerParams(
            dimension_semantics=("parallel", "arbitrary")),
        cost_estimate=pl.CostEstimate(flops=flops, transcendentals=0,
                                      bytes_accessed=read_bytes + 4 * Cout_pad * 4),
    )(xs, w_rows)
    stats = partials[0] + partials[1]                 # sum the two core partials

    # BN batch stats (biased variance, as in train-mode nn.BatchNorm2d).
    # TODO(synk): single-pass E[x^2]-mean^2 can lose precision for very large
    # batches; switch to per-tile (count, mean, M2) merging if that matters.
    n_tot = 4.0 * R                                   # == N*H*W
    mean = stats[0:1] / n_tot                         # (1, Cout_pad)
    var = stats[1:2] / n_tot - mean * mean
    inv = lax.rsqrt(jnp.maximum(var, 0.0) + EPS)
    g_pad = jnp.pad(gamma.astype(jnp.float32).reshape(1, Cout),
                    ((0, 0), (0, Cout_pad - Cout)))
    b_pad = jnp.pad(beta.astype(jnp.float32).reshape(1, Cout),
                    ((0, 0), (0, Cout_pad - Cout)))
    scale = g_pad * inv
    shift = b_pad - mean * scale

    # ---- phase 2: conv + BN affine + ReLU + 2x2 max, lane-dense bf16 stores --
    out_flat = pl.pallas_call(
        functools.partial(_apply_kernel, cin=Cin, cout_pad=Cout_pad),
        out_shape=jax.ShapeDtypeStruct((R_pad, Cout_pad), jnp.bfloat16),
        grid=(n_tiles,),
        in_specs=[pl.BlockSpec((tile_r, 16 * Cin), lambda i: (i, 0)),
                  pl.BlockSpec((3, 2, 4 * Cin, Cout_pad), lambda i: (0, 0, 0, 0)),
                  pl.BlockSpec((1, Cout_pad), lambda i: (0, 0)),
                  pl.BlockSpec((1, Cout_pad), lambda i: (0, 0))],
        out_specs=pl.BlockSpec((tile_r, Cout_pad), lambda i: (i, 0)),
        compiler_params=pltpu.CompilerParams(dimension_semantics=("parallel",)),
        cost_estimate=pl.CostEstimate(flops=flops, transcendentals=0,
                                      bytes_accessed=read_bytes + R_pad * Cout_pad * 2),
    )(xs, w_rows, scale, shift)

    return out_flat[:R, :Cout].reshape(N, Ho, Wo, Cout)   # bf16, NHWC


def proto_block_forward(x_nchw, w_oihw, bias, gamma, beta, *, tile_r=1024):
    """Single-block NCHW API: (N, Cin, H, W) f32 -> (N, Cout, H//2, W//2) f32."""
    x_nhwc = jnp.transpose(x_nchw, (0, 2, 3, 1))
    y = proto_block_forward_nhwc(x_nhwc, w_oihw, bias, gamma, beta, tile_r=tile_r)
    return jnp.transpose(y, (0, 3, 1, 2)).astype(jnp.float32)


def proto_net_embedding(x_nchw, block_params, *, tile_r=1024):
    """ProtoNet.embedding: chain of ProtoBlocks (NHWC/bf16 between blocks),
    then flatten in NCHW order to match torch's x.view(N, -1)."""
    y = jnp.transpose(x_nchw, (0, 2, 3, 1))           # NHWC once, at the boundary
    for (w, b, g, be) in block_params:
        y = proto_block_forward_nhwc(y, w, b, g, be, tile_r=tile_r)
    y = jnp.transpose(y, (0, 3, 1, 2))                # back to NCHW for flatten order
    return y.reshape(y.shape[0], -1).astype(jnp.float32)


# TODO(synk): ProtoNet.proto_compute / loss / accuracy use torch.unique and
# boolean masking (data-dependent shapes) -- host-side logic, not a Pallas kernel.


# ---------------------------------------------------------------------------
# Pure-JAX f32 references (train-mode BN) for validation
# ---------------------------------------------------------------------------
def proto_block_reference(x_nchw, w_oihw, bias, gamma, beta):
    N, Cin, H, W = x_nchw.shape
    Cout = w_oihw.shape[0]
    y = lax.conv_general_dilated(
        x_nchw, w_oihw, window_strides=(1, 1), padding=((1, 1), (1, 1)),
        dimension_numbers=("NCHW", "OIHW", "NCHW"),
    ) + bias.reshape(1, Cout, 1, 1)
    mean = jnp.mean(y, axis=(0, 2, 3), keepdims=True)
    var = jnp.mean((y - mean) ** 2, axis=(0, 2, 3), keepdims=True)
    y = (y - mean) / jnp.sqrt(var + EPS)
    y = y * gamma.reshape(1, Cout, 1, 1) + beta.reshape(1, Cout, 1, 1)
    y = jnp.maximum(y, 0.0)
    return y.reshape(N, Cout, H // 2, 2, W // 2, 2).max(axis=(3, 5))


def proto_net_embedding_reference(x_nchw, block_params):
    y = x_nchw
    for (w, b, g, be) in block_params:
        y = proto_block_reference(y, w, b, g, be)
    return y.reshape(y.shape[0], -1)


if __name__ == "__main__":
    N, Cin, Cout, H, W = 2, 4, 8, 16, 16

    key = jax.random.PRNGKey(0)
    kx, kw, kb, kchain = jax.random.split(key, 4)

    x = jax.random.normal(kx, (N, Cin, H, W), dtype=jnp.float32)
    w = 0.1 * jax.random.normal(kw, (Cout, Cin, 3, 3), dtype=jnp.float32)
    b = 0.1 * jax.random.normal(kb, (Cout,), dtype=jnp.float32)
    gamma = jnp.ones((Cout,), jnp.float32)    # BatchNorm2d weight init
    beta = jnp.zeros((Cout,), jnp.float32)    # BatchNorm2d bias init

    fwd = jax.jit(proto_block_forward)
    out = jax.block_until_ready(fwd(x, w, b, gamma, beta))
    ref = jax.block_until_ready(proto_block_reference(x, w, b, gamma, beta))

    assert out.shape == (N, Cout, H // 2, W // 2), out.shape
    max_err = float(jnp.max(jnp.abs(out - ref)))
    assert jnp.allclose(out, ref, atol=5e-2, rtol=5e-2), max_err

    # ProtoNet.extractor: 4 chained ProtoBlocks (in->hidden->hidden->hidden->out),
    # then flatten to the embedding. 16x16 -> 1x1 spatial after 4 pools.
    hidden = 8
    chans = [(Cin, hidden), (hidden, hidden), (hidden, hidden), (hidden, Cout)]
    params = []
    ks = jax.random.split(kchain, len(chans))
    for kk, (ci, co) in zip(ks, chans):
        kw_i, kb_i = jax.random.split(kk)
        params.append((0.1 * jax.random.normal(kw_i, (co, ci, 3, 3), jnp.float32),
                       0.1 * jax.random.normal(kb_i, (co,), jnp.float32),
                       jnp.ones((co,), jnp.float32),
                       jnp.zeros((co,), jnp.float32)))

    emb = jax.block_until_ready(jax.jit(proto_net_embedding)(x, params))
    emb_ref = jax.block_until_ready(proto_net_embedding_reference(x, params))
    assert emb.shape == (N, Cout), emb.shape
    assert bool(jnp.all(jnp.isfinite(emb)))
    chain_err = float(jnp.max(jnp.abs(emb - emb_ref)))
    chain_tol = 0.1 + 0.1 * float(jnp.max(jnp.abs(emb_ref)))
    assert chain_err < chain_tol, (chain_err, chain_tol)

    print("KERNEL_OK")
</pallas_src>

<mosaic_0001>
module attributes {stable_mosaic.version = 11 : i64} {
  func.func @_stats_kernel(%arg0: i32, %arg1: i32, %arg2: memref<128x64xbf16, #tpu.memory_space<vmem>>, %arg3: memref<3x2x16x128xbf16, #tpu.memory_space<vmem>>, %arg4: memref<1x2x128xf32, #tpu.memory_space<vmem>>) attributes {dimension_semantics = [#tpu.dimension_semantics<parallel>, #tpu.dimension_semantics<arbitrary>], iteration_bounds = array<i64: 2, 1>, scalar_prefetch = 0 : i64, scratch_operands = 0 : i64, tpu.core_type = #tpu.core_type<tc>, window_params = [{transform_indices = @transform_0, window_bounds = array<i64: 128, 64>}, {pipeline_mode = #tpu.pipeline_mode<synchronous>, transform_indices = @transform_1, window_bounds = array<i64: 3, 2, 16, 128>}, {transform_indices = @transform_2, window_bounds = array<i64: 1, 2, 128>}]} {
    %c0_i32 = arith.constant 0 : i32
    %0 = arith.cmpi eq, %arg1, %c0_i32 : i32
    %1 = arith.extui %0 : i1 to i32
    %c0_i32_0 = arith.constant 0 : i32
    %2 = arith.cmpi ne, %1, %c0_i32_0 : i32
    scf.if %2 {
      %cst_86 = arith.constant 0.000000e+00 : f32
      %96 = vector.broadcast %cst_86 : f32 to vector<1x2x128xf32>
      %c0_87 = arith.constant 0 : index
      %c0_88 = arith.constant 0 : index
      %c0_89 = arith.constant 0 : index
      %97 = vector.load %arg4[%c0_87, %c0_88, %c0_89] : memref<1x2x128xf32, #tpu.memory_space<vmem>>, vector<1x2x128xf32>
      tpu.vector_store %arg4[%c0_87, %c0_88, %c0_89], %96 {strides = array<i32>} : memref<1x2x128xf32, #tpu.memory_space<vmem>>, vector<1x2x128xf32>,
    } else {
    }
    %cst = arith.constant 0.000000e+00 : f32
    %3 = vector.broadcast %cst : f32 to vector<1x128xf32>
    %cst_1 = arith.constant 0.000000e+00 : f32
    %4 = vector.broadcast %cst_1 : f32 to vector<1x128xf32>
    %c0 = arith.constant 0 : index
    %c0_2 = arith.constant 0 : index
    %5 = vector.load %arg2[%c0, %c0_2] : memref<128x64xbf16, #tpu.memory_space<vmem>>, vector<128x16xbf16>
    %c0_3 = arith.constant 0 : index
    %c16 = arith.constant 16 : index
    %6 = vector.load %arg2[%c0_3, %c16] : memref<128x64xbf16, #tpu.memory_space<vmem>>, vector<128x16xbf16>
    %c0_4 = arith.constant 0 : index
    %c32 = arith.constant 32 : index
    %7 = vector.load %arg2[%c0_4, %c32] : memref<128x64xbf16, #tpu.memory_space<vmem>>, vector<128x16xbf16>
    %cst_5 = arith.constant 0.000000e+00 : f32
    %8 = vector.broadcast %cst_5 : f32 to vector<128x128xf32>
    %c0_6 = arith.constant 0 : index
    %c0_7 = arith.constant 0 : index
    %c0_8 = arith.constant 0 : index
    %c0_9 = arith.constant 0 : index
    %9 = vector.load %arg3[%c0_6, %c0_7, %c0_8, %c0_9] : memref<3x2x16x128xbf16, #tpu.memory_space<vmem>>, vector<1x1x16x128xbf16>
    %10 = vector.shape_cast %9 : vector<1x1x16x128xbf16> to vector<16x128xbf16>
    %cst_10 = arith.constant dense<0.000000e+00> : vector<128x128xf32>
    %11 = tpu.matmul %5, %10, %cst_10 {dimension_numbers = #tpu.dot_dimension_numbers<[1], [0], [0], [1], [0, 0, 1, 1], [], []>} : vector<128x16xbf16>, vector<16x128xbf16>, vector<128x128xf32> -> vector<128x128xf32>
    %12 = arith.addf %8, %11 : vector<128x128xf32>
    %c1 = arith.constant 1 : index
    %c0_11 = arith.constant 0 : index
    %c0_12 = arith.constant 0 : index
    %c0_13 = arith.constant 0 : index
    %13 = vector.load %arg3[%c1, %c0_11, %c0_12, %c0_13] : memref<3x2x16x128xbf16, #tpu.memory_space<vmem>>, vector<1x1x16x128xbf16>
    %14 = vector.shape_cast %13 : vector<1x1x16x128xbf16> to vector<16x128xbf16>
    %cst_14 = arith.constant dense<0.000000e+00> : vector<128x128xf32>
    %15 = tpu.matmul %6, %14, %cst_14 {dimension_numbers = #tpu.dot_dimension_numbers<[1], [0], [0], [1], [0, 0, 1, 1], [], []>} : vector<128x16xbf16>, vector<16x128xbf16>, vector<128x128xf32> -> vector<128x128xf32>
    %16 = arith.addf %12, %15 : vector<128x128xf32>
    %c2 = arith.constant 2 : index
    %c0_15 = arith.constant 0 : index
    %c0_16 = arith.constant 0 : index
    %c0_17 = arith.constant 0 : index
    %17 = vector.load %arg3[%c2, %c0_15, %c0_16, %c0_17] : memref<3x2x16x128xbf16, #tpu.memory_space<vmem>>, vector<1x1x16x128xbf16>
    %18 = vector.shape_cast %17 : vector<1x1x16x128xbf16> to vector<16x128xbf16>
    %cst_18 = arith.constant dense<0.000000e+00> : vector<128x128xf32>
    %19 = tpu.matmul %7, %18, %cst_18 {dimension_numbers = #tpu.dot_dimension_numbers<[1], [0], [0], [1], [0, 0, 1, 1], [], []>} : vector<128x16xbf16>, vector<16x128xbf16>, vector<128x128xf32> -> vector<128x128xf32>
    %20 = arith.addf %16, %19 : vector<128x128xf32>
    %cst_19 = arith.constant dense<0.000000e+00> : vector<128xf32>
    %21 = vector.multi_reduction <add>, %20, %cst_19 [0] : vector<128x128xf32> to vector<128xf32>
    %22 = vector.shape_cast %21 : vector<128xf32> to vector<1x128xf32>
    %23 = arith.addf %3, %22 : vector<1x128xf32>
    %24 = arith.mulf %20, %20 : vector<128x128xf32>
    %cst_20 = arith.constant dense<0.000000e+00> : vector<128xf32>
    %25 = vector.multi_reduction <add>, %24, %cst_20 [0] : vector<128x128xf32> to vector<128xf32>
    %26 = vector.shape_cast %25 : vector<128xf32> to vector<1x128xf32>
    %27 = arith.addf %4, %26 : vector<1x128xf32>
    %cst_21 = arith.constant 0.000000e+00 : f32
    %28 = vector.broadcast %cst_21 : f32 to vector<128x128xf32>
    %c0_22 = arith.constant 0 : index
    %c1_23 = arith.constant 1 : index
    %c0_24 = arith.constant 0 : index
    %c0_25 = arith.constant 0 : index
    %29 = vector.load %arg3[%c0_22, %c1_23, %c0_24, %c0_25] : memref<3x2x16x128xbf16, #tpu.memory_space<vmem>>, vector<1x1x16x128xbf16>
    %30 = vector.shape_cast %29 : vector<1x1x16x128xbf16> to vector<16x128xbf16>
    %cst_26 = arith.constant dense<0.000000e+00> : vector<128x128xf32>
    %31 = tpu.matmul %5, %30, %cst_26 {dimension_numbers = #tpu.dot_dimension_numbers<[1], [0], [0], [1], [0, 0, 1, 1], [], []>} : vector<128x16xbf16>, vector<16x128xbf16>, vector<128x128xf32> -> vector<128x128xf32>
    %32 = arith.addf %28, %31 : vector<128x128xf32>
    %c1_27 = arith.constant 1 : index
    %c1_28 = arith.constant 1 : index
    %c0_29 = arith.constant 0 : index
    %c0_30 = arith.constant 0 : index
    %33 = vector.load %arg3[%c1_27, %c1_28, %c0_29, %c0_30] : memref<3x2x16x128xbf16, #tpu.memory_space<vmem>>, vector<1x1x16x128xbf16>
    %34 = vector.shape_cast %33 : vector<1x1x16x128xbf16> to vector<16x128xbf16>
    %cst_31 = arith.constant dense<0.000000e+00> : vector<128x128xf32>
    %35 = tpu.matmul %6, %34, %cst_31 {dimension_numbers = #tpu.dot_dimension_numbers<[1], [0], [0], [1], [0, 0, 1, 1], [], []>} : vector<128x16xbf16>, vector<16x128xbf16>, vector<128x128xf32> -> vector<128x128xf32>
    %36 = arith.addf %32, %35 : vector<128x128xf32>
    %c2_32 = arith.constant 2 : index
    %c1_33 = arith.constant 1 : index
    %c0_34 = arith.constant 0 : index
    %c0_35 = arith.constant 0 : index
    %37 = vector.load %arg3[%c2_32, %c1_33, %c0_34, %c0_35] : memref<3x2x16x128xbf16, #tpu.memory_space<vmem>>, vector<1x1x16x128xbf16>
    %38 = vector.shape_cast %37 : vector<1x1x16x128xbf16> to vector<16x128xbf16>
    %cst_36 = arith.constant dense<0.000000e+00> : vector<128x128xf32>
    %39 = tpu.matmul %7, %38, %cst_36 {dimension_numbers = #tpu.dot_dimension_numbers<[1], [0], [0], [1], [0, 0, 1, 1], [], []>} : vector<128x16xbf16>, vector<16x128xbf16>, vector<128x128xf32> -> vector<128x128xf32>
    %40 = arith.addf %36, %39 : vector<128x128xf32>
    %cst_37 = arith.constant dense<0.000000e+00> : vector<128xf32>
    %41 = vector.multi_reduction <add>, %40, %cst_37 [0] : vector<128x128xf32> to vector<128xf32>
    %42 = vector.shape_cast %41 : vector<128xf32> to vector<1x128xf32>
    %43 = arith.addf %23, %42 : vector<1x128xf32>
    %44 = arith.mulf %40, %40 : vector<128x128xf32>
    %cst_38 = arith.constant dense<0.000000e+00> : vector<128xf32>
    %45 = vector.multi_reduction <add>, %44, %cst_38 [0] : vector<128x128xf32> to vector<128xf32>
    %46 = vector.shape_cast %45 : vector<128xf32> to vector<1x128xf32>
    %47 = arith.addf %27, %46 : vector<1x128xf32>
    %c0_39 = arith.constant 0 : index
    %c16_40 = arith.constant 16 : index
    %48 = vector.load %arg2[%c0_39, %c16_40] : memref<128x64xbf16, #tpu.memory_space<vmem>>, vector<128x16xbf16>
    %c0_41 = arith.constant 0 : index
    %c32_42 = arith.constant 32 : index
    %49 = vector.load %arg2[%c0_41, %c32_42] : memref<128x64xbf16, #tpu.memory_space<vmem>>, vector<128x16xbf16>
    %c0_43 = arith.constant 0 : index
    %c48 = arith.constant 48 : index
    %50 = vector.load %arg2[%c0_43, %c48] : memref<128x64xbf16, #tpu.memory_space<vmem>>, vector<128x16xbf16>
    %cst_44 = arith.constant 0.000000e+00 : f32
    %51 = vector.broadcast %cst_44 : f32 to vector<128x128xf32>
    %c0_45 = arith.constant 0 : index
    %c0_46 = arith.constant 0 : index
    %c0_47 = arith.constant 0 : index
    %c0_48 = arith.constant 0 : index
    %52 = vector.load %arg3[%c0_45, %c0_46, %c0_47, %c0_48] : memref<3x2x16x128xbf16, #tpu.memory_space<vmem>>, vector<1x1x16x128xbf16>
    %53 = vector.shape_cast %52 : vector<1x1x16x128xbf16> to vector<16x128xbf16>
    %cst_49 = arith.constant dense<0.000000e+00> : vector<128x128xf32>
    %54 = tpu.matmul %48, %53, %cst_49 {dimension_numbers = #tpu.dot_dimension_numbers<[1], [0], [0], [1], [0, 0, 1, 1], [], []>} : vector<128x16xbf16>, vector<16x128xbf16>, vector<128x128xf32> -> vector<128x128xf32>
    %55 = arith.addf %51, %54 : vector<128x128xf32>
    %c1_50 = arith.constant 1 : index
    %c0_51 = arith.constant 0 : index
    %c0_52 = arith.constant 0 : index
    %c0_53 = arith.constant 0 : index
    %56 = vector.load %arg3[%c1_50, %c0_51, %c0_52, %c0_53] : memref<3x2x16x128xbf16, #tpu.memory_space<vmem>>, vector<1x1x16x128xbf16>
    %57 = vector.shape_cast %56 : vector<1x1x16x128xbf16> to vector<16x128xbf16>
    %cst_54 = arith.constant dense<0.000000e+00> : vector<128x128xf32>
    %58 = tpu.matmul %49, %57, %cst_54 {dimension_numbers = #tpu.dot_dimension_numbers<[1], [0], [0], [1], [0, 0, 1, 1], [], []>} : vector<128x16xbf16>, vector<16x128xbf16>, vector<128x128xf32> -> vector<128x128xf32>
    %59 = arith.addf %55, %58 : vector<128x128xf32>
    %c2_55 = arith.constant 2 : index
    %c0_56 = arith.constant 0 : index
    %c0_57 = arith.constant 0 : index
    %c0_58 = arith.constant 0 : index
    %60 = vector.load %arg3[%c2_55, %c0_56, %c0_57, %c0_58] : memref<3x2x16x128xbf16, #tpu.memory_space<vmem>>, vector<1x1x16x128xbf16>
    %61 = vector.shape_cast %60 : vector<1x1x16x128xbf16> to vector<16x128xbf16>
    %cst_59 = arith.constant dense<0.000000e+00> : vector<128x128xf32>
    %62 = tpu.matmul %50, %61, %cst_59 {dimension_numbers = #tpu.dot_dimension_numbers<[1], [0], [0], [1], [0, 0, 1, 1], [], []>} : vector<128x16xbf16>, vector<16x128xbf16>, vector<128x128xf32> -> vector<128x128xf32>
    %63 = arith.addf %59, %62 : vector<128x128xf32>
    %cst_60 = arith.constant dense<0.000000e+00> : vector<128xf32>
    %64 = vector.multi_reduction <add>, %63, %cst_60 [0] : vector<128x128xf32> to vector<128xf32>
    %65 = vector.shape_cast %64 : vector<128xf32> to vector<1x128xf32>
    %66 = arith.addf %43, %65 : vector<1x128xf32>
    %67 = arith.mulf %63, %63 : vector<128x128xf32>
    %cst_61 = arith.constant dense<0.000000e+00> : vector<128xf32>
    %68 = vector.multi_reduction <add>, %67, %cst_61 [0] : vector<128x128xf32> to vector<128xf32>
    %69 = vector.shape_cast %68 : vector<128xf32> to vector<1x128xf32>
    %70 = arith.addf %47, %69 : vector<1x128xf32>
    %cst_62 = arith.constant 0.000000e+00 : f32
    %71 = vector.broadcast %cst_62 : f32 to vector<128x128xf32>
    %c0_63 = arith.constant 0 : index
    %c1_64 = arith.constant 1 : index
    %c0_65 = arith.constant 0 : index
    %c0_66 = arith.constant 0 : index
    %72 = vector.load %arg3[%c0_63, %c1_64, %c0_65, %c0_66] : memref<3x2x16x128xbf16, #tpu.memory_space<vmem>>, vector<1x1x16x128xbf16>
    %73 = vector.shape_cast %72 : vector<1x1x16x128xbf16> to vector<16x128xbf16>
    %cst_67 = arith.constant dense<0.000000e+00> : vector<128x128xf32>
    %74 = tpu.matmul %48, %73, %cst_67 {dimension_numbers = #tpu.dot_dimension_numbers<[1], [0], [0], [1], [0, 0, 1, 1], [], []>} : vector<128x16xbf16>, vector<16x128xbf16>, vector<128x128xf32> -> vector<128x128xf32>
    %75 = arith.addf %71, %74 : vector<128x128xf32>
    %c1_68 = arith.constant 1 : index
    %c1_69 = arith.constant 1 : index
    %c0_70 = arith.constant 0 : index
    %c0_71 = arith.constant 0 : index
    %76 = vector.load %arg3[%c1_68, %c1_69, %c0_70, %c0_71] : memref<3x2x16x128xbf16, #tpu.memory_space<vmem>>, vector<1x1x16x128xbf16>
    %77 = vector.shape_cast %76 : vector<1x1x16x128xbf16> to vector<16x128xbf16>
    %cst_72 = arith.constant dense<0.000000e+00> : vector<128x128xf32>
    %78 = tpu.matmul %49, %77, %cst_72 {dimension_numbers = #tpu.dot_dimension_numbers<[1], [0], [0], [1], [0, 0, 1, 1], [], []>} : vector<128x16xbf16>, vector<16x128xbf16>, vector<128x128xf32> -> vector<128x128xf32>
    %79 = arith.addf %75, %78 : vector<128x128xf32>
    %c2_73 = arith.constant 2 : index
    %c1_74 = arith.constant 1 : index
    %c0_75 = arith.constant 0 : index
    %c0_76 = arith.constant 0 : index
    %80 = vector.load %arg3[%c2_73, %c1_74, %c0_75, %c0_76] : memref<3x2x16x128xbf16, #tpu.memory_space<vmem>>, vector<1x1x16x128xbf16>
    %81 = vector.shape_cast %80 : vector<1x1x16x128xbf16> to vector<16x128xbf16>
    %cst_77 = arith.constant dense<0.000000e+00> : vector<128x128xf32>
    %82 = tpu.matmul %50, %81, %cst_77 {dimension_numbers = #tpu.dot_dimension_numbers<[1], [0], [0], [1], [0, 0, 1, 1], [], []>} : vector<128x16xbf16>, vector<16x128xbf16>, vector<128x128xf32> -> vector<128x128xf32>
    %83 = arith.addf %79, %82 : vector<128x128xf32>
    %cst_78 = arith.constant dense<0.000000e+00> : vector<128xf32>
    %84 = vector.multi_reduction <add>, %83, %cst_78 [0] : vector<128x128xf32> to vector<128xf32>
    %85 = vector.shape_cast %84 : vector<128xf32> to vector<1x128xf32>
    %86 = arith.addf %66, %85 : vector<1x128xf32>
    %87 = arith.mulf %83, %83 : vector<128x128xf32>
    %cst_79 = arith.constant dense<0.000000e+00> : vector<128xf32>
    %88 = vector.multi_reduction <add>, %87, %cst_79 [0] : vector<128x128xf32> to vector<128xf32>
    %89 = vector.shape_cast %88 : vector<128xf32> to vector<1x128xf32>
    %90 = arith.addf %70, %89 : vector<1x128xf32>
    %c0_80 = arith.constant 0 : index
    %c0_81 = arith.constant 0 : index
    %c0_82 = arith.constant 0 : index
    %91 = vector.load %arg4[%c0_80, %c0_81, %c0_82] : memref<1x2x128xf32, #tpu.memory_space<vmem>>, vector<1x2x128xf32>
    %92 = tpu.concatenate %86, %90 in 0 : vector<1x128xf32>, vector<1x128xf32> -> vector<2x128xf32>
    %93 = vector.shape_cast %92 : vector<2x128xf32> to vector<1x2x128xf32>
    %94 = arith.addf %91, %93 : vector<1x2x128xf32>
    %c0_83 = arith.constant 0 : index
    %c0_84 = arith.constant 0 : index
    %c0_85 = arith.constant 0 : index
    %95 = vector.load %arg4[%c0_83, %c0_84, %c0_85] : memref<1x2x128xf32, #tpu.memory_space<vmem>>, vector<1x2x128xf32>
    tpu.vector_store %arg4[%c0_83, %c0_84, %c0_85], %94 {strides = array<i32>} : memref<1x2x128xf32, #tpu.memory_space<vmem>>, vector<1x2x128xf32>,
    return
  }
  func.func @transform_0(%arg0: i32, %arg1: i32) -> (i32, i32) {
    %c1_i32 = arith.constant 1 : i32
    %0 = arith.muli %arg0, %c1_i32 : i32
    %1 = arith.addi %0, %arg1 : i32
    %c0_i32 = arith.constant 0 : i32
    %c0_i32_0 = arith.constant 0 : i32
    return %1, %c0_i32 : i32, i32
  }
  func.func @transform_1(%arg0: i32, %arg1: i32) -> (i32, i32, i32, i32) {
    %c0_i32 = arith.constant 0 : i32
    %c0_i32_0 = arith.constant 0 : i32
    %c0_i32_1 = arith.constant 0 : i32
    %c0_i32_2 = arith.constant 0 : i32
    %c0_i32_3 = arith.constant 0 : i32
    return %c0_i32, %c0_i32_0, %c0_i32_1, %c0_i32_2 : i32, i32, i32, i32
  }
  func.func @transform_2(%arg0: i32, %arg1: i32) -> (i32, i32, i32) {
    %c0_i32 = arith.constant 0 : i32
    %c0_i32_0 = arith.constant 0 : i32
    %c0_i32_1 = arith.constant 0 : i32
    return %arg0, %c0_i32, %c0_i32_0 : i32, i32, i32
  }
}

module attributes {stable_mosaic.version = 11 : i64} {
  func.func @_apply_kernel(%arg0: i32, %arg1: memref<128x64xbf16, #tpu.memory_space<vmem>>, %arg2: memref<3x2x16x128xbf16, #tpu.memory_space<vmem>>, %arg3: memref<1x128xf32, #tpu.memory_space<vmem>>, %arg4: memref<1x128xf32, #tpu.memory_space<vmem>>, %arg5: memref<128x128xbf16, #tpu.memory_space<vmem>>) attributes {dimension_semantics = [#tpu.dimension_semantics<parallel>], iteration_bounds = array<i64: 2>, scalar_prefetch = 0 : i64, scratch_operands = 0 : i64, tpu.core_type = #tpu.core_type<tc>, window_params = [{transform_indices = @transform_0, window_bounds = array<i64: 128, 64>}, {pipeline_mode = #tpu.pipeline_mode<synchronous>, transform_indices = @transform_1, window_bounds = array<i64: 3, 2, 16, 128>}, {pipeline_mode = #tpu.pipeline_mode<synchronous>, transform_indices = @transform_2, window_bounds = array<i64: 1, 128>}, {pipeline_mode = #tpu.pipeline_mode<synchronous>, transform_indices = @transform_3, window_bounds = array<i64: 1, 128>}, {transform_indices = @transform_4, window_bounds = array<i64: 128, 128>}]} {
    %c0 = arith.constant 0 : index
    %c0_0 = arith.constant 0 : index
    %0 = vector.load %arg3[%c0, %c0_0] : memref<1x128xf32, #tpu.memory_space<vmem>>, vector<1x128xf32>
    %1 = vector.shape_cast %0 : vector<1x128xf32> to vector<1x128xf32>
    %2 = vector.broadcast %1 : vector<1x128xf32> to vector<128x128xf32>
    %c0_1 = arith.constant 0 : index
    %c0_2 = arith.constant 0 : index
    %3 = vector.load %arg4[%c0_1, %c0_2] : memref<1x128xf32, #tpu.memory_space<vmem>>, vector<1x128xf32>
    %4 = vector.shape_cast %3 : vector<1x128xf32> to vector<1x128xf32>
    %5 = vector.broadcast %4 : vector<1x128xf32> to vector<128x128xf32>
    %c0_3 = arith.constant 0 : index
    %c0_4 = arith.constant 0 : index
    %6 = vector.load %arg1[%c0_3, %c0_4] : memref<128x64xbf16, #tpu.memory_space<vmem>>, vector<128x16xbf16>
    %c0_5 = arith.constant 0 : index
    %c16 = arith.constant 16 : index
    %7 = vector.load %arg1[%c0_5, %c16] : memref<128x64xbf16, #tpu.memory_space<vmem>>, vector<128x16xbf16>
    %c0_6 = arith.constant 0 : index
    %c32 = arith.constant 32 : index
    %8 = vector.load %arg1[%c0_6, %c32] : memref<128x64xbf16, #tpu.memory_space<vmem>>, vector<128x16xbf16>
    %cst = arith.constant 0.000000e+00 : f32
    %9 = vector.broadcast %cst : f32 to vector<128x128xf32>
    %c0_7 = arith.constant 0 : index
    %c0_8 = arith.constant 0 : index
    %c0_9 = arith.constant 0 : index
    %c0_10 = arith.constant 0 : index
    %10 = vector.load %arg2[%c0_7, %c0_8, %c0_9, %c0_10] : memref<3x2x16x128xbf16, #tpu.memory_space<vmem>>, vector<1x1x16x128xbf16>
    %11 = vector.shape_cast %10 : vector<1x1x16x128xbf16> to vector<16x128xbf16>
    %cst_11 = arith.constant dense<0.000000e+00> : vector<128x128xf32>
    %12 = tpu.matmul %6, %11, %cst_11 {dimension_numbers = #tpu.dot_dimension_numbers<[1], [0], [0], [1], [0, 0, 1, 1], [], []>} : vector<128x16xbf16>, vector<16x128xbf16>, vector<128x128xf32> -> vector<128x128xf32>
    %13 = arith.addf %9, %12 : vector<128x128xf32>
    %c1 = arith.constant 1 : index
    %c0_12 = arith.constant 0 : index
    %c0_13 = arith.constant 0 : index
    %c0_14 = arith.constant 0 : index
    %14 = vector.load %arg2[%c1, %c0_12, %c0_13, %c0_14] : memref<3x2x16x128xbf16, #tpu.memory_space<vmem>>, vector<1x1x16x128xbf16>
    %15 = vector.shape_cast %14 : vector<1x1x16x128xbf16> to vector<16x128xbf16>
    %cst_15 = arith.constant dense<0.000000e+00> : vector<128x128xf32>
    %16 = tpu.matmul %7, %15, %cst_15 {dimension_numbers = #tpu.dot_dimension_numbers<[1], [0], [0], [1], [0, 0, 1, 1], [], []>} : vector<128x16xbf16>, vector<16x128xbf16>, vector<128x128xf32> -> vector<128x128xf32>
    %17 = arith.addf %13, %16 : vector<128x128xf32>
    %c2 = arith.constant 2 : index
    %c0_16 = arith.constant 0 : index
    %c0_17 = arith.constant 0 : index
    %c0_18 = arith.constant 0 : index
    %18 = vector.load %arg2[%c2, %c0_16, %c0_17, %c0_18] : memref<3x2x16x128xbf16, #tpu.memory_space<vmem>>, vector<1x1x16x128xbf16>
    %19 = vector.shape_cast %18 : vector<1x1x16x128xbf16> to vector<16x128xbf16>
    %cst_19 = arith.constant dense<0.000000e+00> : vector<128x128xf32>
    %20 = tpu.matmul %8, %19, %cst_19 {dimension_numbers = #tpu.dot_dimension_numbers<[1], [0], [0], [1], [0, 0, 1, 1], [], []>} : vector<128x16xbf16>, vector<16x128xbf16>, vector<128x128xf32> -> vector<128x128xf32>
    %21 = arith.addf %17, %20 : vector<128x128xf32>
    %22 = arith.mulf %21, %2 : vector<128x128xf32>
    %23 = arith.addf %22, %5 : vector<128x128xf32>
    %cst_20 = arith.constant 0.000000e+00 : f32
    %24 = vector.broadcast %cst_20 : f32 to vector<128x128xf32>
    %25 = arith.maximumf %23, %24 : vector<128x128xf32>
    %cst_21 = arith.constant 0.000000e+00 : f32
    %26 = vector.broadcast %cst_21 : f32 to vector<128x128xf32>
    %c0_22 = arith.constant 0 : index
    %c1_23 = arith.constant 1 : index
    %c0_24 = arith.constant 0 : index
    %c0_25 = arith.constant 0 : index
    %27 = vector.load %arg2[%c0_22, %c1_23, %c0_24, %c0_25] : memref<3x2x16x128xbf16, #tpu.memory_space<vmem>>, vector<1x1x16x128xbf16>
    %28 = vector.shape_cast %27 : vector<1x1x16x128xbf16> to vector<16x128xbf16>
    %cst_26 = arith.constant dense<0.000000e+00> : vector<128x128xf32>
    %29 = tpu.matmul %6, %28, %cst_26 {dimension_numbers = #tpu.dot_dimension_numbers<[1], [0], [0], [1], [0, 0, 1, 1], [], []>} : vector<128x16xbf16>, vector<16x128xbf16>, vector<128x128xf32> -> vector<128x128xf32>
    %30 = arith.addf %26, %29 : vector<128x128xf32>
    %c1_27 = arith.constant 1 : index
    %c1_28 = arith.constant 1 : index
    %c0_29 = arith.constant 0 : index
    %c0_30 = arith.constant 0 : index
    %31 = vector.load %arg2[%c1_27, %c1_28, %c0_29, %c0_30] : memref<3x2x16x128xbf16, #tpu.memory_space<vmem>>, vector<1x1x16x128xbf16>
    %32 = vector.shape_cast %31 : vector<1x1x16x128xbf16> to vector<16x128xbf16>
    %cst_31 = arith.constant dense<0.000000e+00> : vector<128x128xf32>
    %33 = tpu.matmul %7, %32, %cst_31 {dimension_numbers = #tpu.dot_dimension_numbers<[1], [0], [0], [1], [0, 0, 1, 1], [], []>} : vector<128x16xbf16>, vector<16x128xbf16>, vector<128x128xf32> -> vector<128x128xf32>
    %34 = arith.addf %30, %33 : vector<128x128xf32>
    %c2_32 = arith.constant 2 : index
    %c1_33 = arith.constant 1 : index
    %c0_34 = arith.constant 0 : index
    %c0_35 = arith.constant 0 : index
    %35 = vector.load %arg2[%c2_32, %c1_33, %c0_34, %c0_35] : memref<3x2x16x128xbf16, #tpu.memory_space<vmem>>, vector<1x1x16x128xbf16>
    %36 = vector.shape_cast %35 : vector<1x1x16x128xbf16> to vector<16x128xbf16>
    %cst_36 = arith.constant dense<0.000000e+00> : vector<128x128xf32>
    %37 = tpu.matmul %8, %36, %cst_36 {dimension_numbers = #tpu.dot_dimension_numbers<[1], [0], [0], [1], [0, 0, 1, 1], [], []>} : vector<128x16xbf16>, vector<16x128xbf16>, vector<128x128xf32> -> vector<128x128xf32>
    %38 = arith.addf %34, %37 : vector<128x128xf32>
    %39 = arith.mulf %38, %2 : vector<128x128xf32>
    %40 = arith.addf %39, %5 : vector<128x128xf32>
    %cst_37 = arith.constant 0.000000e+00 : f32
    %41 = vector.broadcast %cst_37 : f32 to vector<128x128xf32>
    %42 = arith.maximumf %40, %41 : vector<128x128xf32>
    %43 = arith.maximumf %25, %42 : vector<128x128xf32>
    %c0_38 = arith.constant 0 : index
    %c16_39 = arith.constant 16 : index
    %44 = vector.load %arg1[%c0_38, %c16_39] : memref<128x64xbf16, #tpu.memory_space<vmem>>, vector<128x16xbf16>
    %c0_40 = arith.constant 0 : index
    %c32_41 = arith.constant 32 : index
    %45 = vector.load %arg1[%c0_40, %c32_41] : memref<128x64xbf16, #tpu.memory_space<vmem>>, vector<128x16xbf16>
    %c0_42 = arith.constant 0 : index
    %c48 = arith.constant 48 : index
    %46 = vector.load %arg1[%c0_42, %c48] : memref<128x64xbf16, #tpu.memory_space<vmem>>, vector<128x16xbf16>
    %cst_43 = arith.constant 0.000000e+00 : f32
    %47 = vector.broadcast %cst_43 : f32 to vector<128x128xf32>
    %c0_44 = arith.constant 0 : index
    %c0_45 = arith.constant 0 : index
    %c0_46 = arith.constant 0 : index
    %c0_47 = arith.constant 0 : index
    %48 = vector.load %arg2[%c0_44, %c0_45, %c0_46, %c0_47] : memref<3x2x16x128xbf16, #tpu.memory_space<vmem>>, vector<1x1x16x128xbf16>
    %49 = vector.shape_cast %48 : vector<1x1x16x128xbf16> to vector<16x128xbf16>
    %cst_48 = arith.constant dense<0.000000e+00> : vector<128x128xf32>
    %50 = tpu.matmul %44, %49, %cst_48 {dimension_numbers = #tpu.dot_dimension_numbers<[1], [0], [0], [1], [0, 0, 1, 1], [], []>} : vector<128x16xbf16>, vector<16x128xbf16>, vector<128x128xf32> -> vector<128x128xf32>
    %51 = arith.addf %47, %50 : vector<128x128xf32>
    %c1_49 = arith.constant 1 : index
    %c0_50 = arith.constant 0 : index
    %c0_51 = arith.constant 0 : index
    %c0_52 = arith.constant 0 : index
    %52 = vector.load %arg2[%c1_49, %c0_50, %c0_51, %c0_52] : memref<3x2x16x128xbf16, #tpu.memory_space<vmem>>, vector<1x1x16x128xbf16>
    %53 = vector.shape_cast %52 : vector<1x1x16x128xbf16> to vector<16x128xbf16>
    %cst_53 = arith.constant dense<0.000000e+00> : vector<128x128xf32>
    %54 = tpu.matmul %45, %53, %cst_53 {dimension_numbers = #tpu.dot_dimension_numbers<[1], [0], [0], [1], [0, 0, 1, 1], [], []>} : vector<128x16xbf16>, vector<16x128xbf16>, vector<128x128xf32> -> vector<128x128xf32>
    %55 = arith.addf %51, %54 : vector<128x128xf32>
    %c2_54 = arith.constant 2 : index
    %c0_55 = arith.constant 0 : index
    %c0_56 = arith.constant 0 : index
    %c0_57 = arith.constant 0 : index
    %56 = vector.load %arg2[%c2_54, %c0_55, %c0_56, %c0_57] : memref<3x2x16x128xbf16, #tpu.memory_space<vmem>>, vector<1x1x16x128xbf16>
    %57 = vector.shape_cast %56 : vector<1x1x16x128xbf16> to vector<16x128xbf16>
    %cst_58 = arith.constant dense<0.000000e+00> : vector<128x128xf32>
    %58 = tpu.matmul %46, %57, %cst_58 {dimension_numbers = #tpu.dot_dimension_numbers<[1], [0], [0], [1], [0, 0, 1, 1], [], []>} : vector<128x16xbf16>, vector<16x128xbf16>, vector<128x128xf32> -> vector<128x128xf32>
    %59 = arith.addf %55, %58 : vector<128x128xf32>
    %60 = arith.mulf %59, %2 : vector<128x128xf32>
    %61 = arith.addf %60, %5 : vector<128x128xf32>
    %cst_59 = arith.constant 0.000000e+00 : f32
    %62 = vector.broadcast %cst_59 : f32 to vector<128x128xf32>
    %63 = arith.maximumf %61, %62 : vector<128x128xf32>
    %64 = arith.maximumf %43, %63 : vector<128x128xf32>
    %cst_60 = arith.constant 0.000000e+00 : f32
    %65 = vector.broadcast %cst_60 : f32 to vector<128x128xf32>
    %c0_61 = arith.constant 0 : index
    %c1_62 = arith.constant 1 : index
    %c0_63 = arith.constant 0 : index
    %c0_64 = arith.constant 0 : index
    %66 = vector.load %arg2[%c0_61, %c1_62, %c0_63, %c0_64] : memref<3x2x16x128xbf16, #tpu.memory_space<vmem>>, vector<1x1x16x128xbf16>
    %67 = vector.shape_cast %66 : vector<1x1x16x128xbf16> to vector<16x128xbf16>
    %cst_65 = arith.constant dense<0.000000e+00> : vector<128x128xf32>
    %68 = tpu.matmul %44, %67, %cst_65 {dimension_numbers = #tpu.dot_dimension_numbers<[1], [0], [0], [1], [0, 0, 1, 1], [], []>} : vector<128x16xbf16>, vector<16x128xbf16>, vector<128x128xf32> -> vector<128x128xf32>
    %69 = arith.addf %65, %68 : vector<128x128xf32>
    %c1_66 = arith.constant 1 : index
    %c1_67 = arith.constant 1 : index
    %c0_68 = arith.constant 0 : index
    %c0_69 = arith.constant 0 : index
    %70 = vector.load %arg2[%c1_66, %c1_67, %c0_68, %c0_69] : memref<3x2x16x128xbf16, #tpu.memory_space<vmem>>, vector<1x1x16x128xbf16>
    %71 = vector.shape_cast %70 : vector<1x1x16x128xbf16> to vector<16x128xbf16>
    %cst_70 = arith.constant dense<0.000000e+00> : vector<128x128xf32>
    %72 = tpu.matmul %45, %71, %cst_70 {dimension_numbers = #tpu.dot_dimension_numbers<[1], [0], [0], [1], [0, 0, 1, 1], [], []>} : vector<128x16xbf16>, vector<16x128xbf16>, vector<128x128xf32> -> vector<128x128xf32>
    %73 = arith.addf %69, %72 : vector<128x128xf32>
    %c2_71 = arith.constant 2 : index
    %c1_72 = arith.constant 1 : index
    %c0_73 = arith.constant 0 : index
    %c0_74 = arith.constant 0 : index
    %74 = vector.load %arg2[%c2_71, %c1_72, %c0_73, %c0_74] : memref<3x2x16x128xbf16, #tpu.memory_space<vmem>>, vector<1x1x16x128xbf16>
    %75 = vector.shape_cast %74 : vector<1x1x16x128xbf16> to vector<16x128xbf16>
    %cst_75 = arith.constant dense<0.000000e+00> : vector<128x128xf32>
    %76 = tpu.matmul %46, %75, %cst_75 {dimension_numbers = #tpu.dot_dimension_numbers<[1], [0], [0], [1], [0, 0, 1, 1], [], []>} : vector<128x16xbf16>, vector<16x128xbf16>, vector<128x128xf32> -> vector<128x128xf32>
    %77 = arith.addf %73, %76 : vector<128x128xf32>
    %78 = arith.mulf %77, %2 : vector<128x128xf32>
    %79 = arith.addf %78, %5 : vector<128x128xf32>
    %cst_76 = arith.constant 0.000000e+00 : f32
    %80 = vector.broadcast %cst_76 : f32 to vector<128x128xf32>
    %81 = arith.maximumf %79, %80 : vector<128x128xf32>
    %82 = arith.maximumf %64, %81 : vector<128x128xf32>
    %83 = arith.truncf %82 : vector<128x128xf32> to vector<128x128xbf16>
    %c0_77 = arith.constant 0 : index
    %c0_78 = arith.constant 0 : index
    %84 = vector.load %arg5[%c0_77, %c0_78] : memref<128x128xbf16, #tpu.memory_space<vmem>>, vector<128x128xbf16>
    tpu.vector_store %arg5[%c0_77, %c0_78], %83 {strides = array<i32>} : memref<128x128xbf16, #tpu.memory_space<vmem>>, vector<128x128xbf16>,
    return
  }
  func.func @transform_0(%arg0: i32) -> (i32, i32) {
    %c0_i32 = arith.constant 0 : i32
    %c0_i32_0 = arith.constant 0 : i32
    return %arg0, %c0_i32 : i32, i32
  }
  func.func @transform_1(%arg0: i32) -> (i32, i32, i32, i32) {
    %c0_i32 = arith.constant 0 : i32
    %c0_i32_0 = arith.constant 0 : i32
    %c0_i32_1 = arith.constant 0 : i32
    %c0_i32_2 = arith.constant 0 : i32
    %c0_i32_3 = arith.constant 0 : i32
    return %c0_i32, %c0_i32_0, %c0_i32_1, %c0_i32_2 : i32, i32, i32, i32
  }
  func.func @transform_2(%arg0: i32) -> (i32, i32) {
    %c0_i32 = arith.constant 0 : i32
    %c0_i32_0 = arith.constant 0 : i32
    %c0_i32_1 = arith.constant 0 : i32
    return %c0_i32, %c0_i32_0 : i32, i32
  }
  func.func @transform_3(%arg0: i32) -> (i32, i32) {
    %c0_i32 = arith.constant 0 : i32
    %c0_i32_0 = arith.constant 0 : i32
    %c0_i32_1 = arith.constant 0 : i32
    return %c0_i32, %c0_i32_0 : i32, i32
  }
  func.func @transform_4(%arg0: i32) -> (i32, i32) {
    %c0_i32 = arith.constant 0 : i32
    %c0_i32_0 = arith.constant 0 : i32
    return %arg0, %c0_i32 : i32, i32
  }
}

</mosaic_0001>

<llo_original>
// kernel: proto_block_forward.2
$region0: #{proto_block_forward.2}
  #allocation0 [shape = 'u32[]', space=smem, size = 0x4, offset = 0x4, fixed_abs, tag = 'smem constant byte address 0x4 - core index']
  #allocation1 [shape = 'u32[144,128]{1,0:T(1,128)}', space=vmem, size = 0x12000, scoped, tag = 'internal scratch']
  %s0 = inlined_call_operand.vmem [shape: bf16[256,64], index: 0, kind: input, shape index: {}]
  %s1 = inlined_call_operand.vmem [shape: bf16[3,2,16,128], index: 1, kind: input, shape index: {}]
  %s2 = inlined_call_operand.vmem [shape: f32[2,2,128], index: 2, kind: output, shape index: {}]
  %s3 = sld [smem:[#allocation0]]
  $region45: #{proto_block_forward.2} parent=0
    _
  %s5 = ssub.s32 1, %s3
  %s6 = scalar_select 0, %s5, %s3
  loop: start=0, step=1, limit=4
  $region2: #{proto_block_forward.2} parent=0 // loop_pre_header
    _
  $region3: #{proto_block_forward.2} parent=0 // loop_header
    %s8 = sphi 0, %s12
    %p9 = scmp.ge.s32.totalorder %s8, 4
    %s15 = sphi 0, %s27
    %s16 = sphi 0, %s23
    %s17 = sphi 0, %s15
    %s18 = sphi 0, %s16
    %s19 = sphi 0, %s17
    %s20 = sphi 0, %s18
    %s32 = sphi 0, %s34
    %s35 = sphi 0, %s32
    %s36 = sphi 0, %s35
    %s52 = sphi 0, %s36
    %s56 = sphi 0, %s56
    %s58 = sphi 0, %s56
    %s59 = sphi 0, %s58
    %s73 = sphi 0, %s59
    %s79 = sphi 0, %s81
    %s82 = sphi 0, %s79
    %s83 = sphi 0, %s82
    %s99 = sphi 0, %s83
  $region4: #{proto_block_forward.2} parent=0 // loop_header_branch
    %11 = sbr.rel (%p9) target = $region8
  $region5: #{proto_block_forward.2} parent=0 // loop_body
    %s13 = ssub.s32 %s8, 1
    %s14 = ssub.s32 %s8, 2
    %s21 = sadd.s32 1, %s16
    %p22 = scmp.ge.s32.totalorder %s21, 1
    %s23 = scalar_select %p22, 0, %s21
    %s24 = sadd.s32 1, %s15
    %s25 = scalar_select %p22, %s24, %s15
    %p26 = scmp.ge.s32.totalorder %s25, 2
    %s27 = scalar_select %p26, 0, %s25
    %s28 = sadd.s32 %s15, %s16
    %s29 = sadd.s32 %s27, %s23
    %s30 = ssub.s32 %s28, %s29
    %p31 = scmp.eq.s32.totalorder %s30, 0
    %s33 = sadd.s32 %s32, 1
    %s34 = scalar_select %p31, %s32, %s33
    %p37 = pneg %p31
    %p38 = scmp.eq.s32.totalorder %s8, 1
    %p39 = por %p37, %p38
    %p40 = scmp.ne.s32.totalorder %s32, %s35
    %p41 = scmp.eq.s32.totalorder %s8, 0
    %p42 = por %p40, %p41
    %p43 = scmp.ne.s32.totalorder %s32, %s35
    %p44 = scmp.eq.s32.totalorder %s13, 1
    %p45 = por %p43, %p44
    %p46 = scmp.ne.s32.totalorder %s35, %s36
    %p47 = scmp.eq.s32.totalorder %s13, 0
    %p48 = por %p46, %p47
    %p49 = scmp.ne.s32.totalorder %s35, %s36
    %p50 = scmp.eq.s32.totalorder %s14, 1
    %p51 = por %p49, %p50
    %p53 = scmp.ne.s32.totalorder %s36, %s52
    %p54 = scmp.eq.s32.totalorder %s14, 0
    %p55 = por %p53, %p54
    %s57 = sadd.s32 %s56, 1
    %p60 = scmp.eq.s32.totalorder %s8, 1
    %p61 = scmp.ne.s32.totalorder %s56, %s58
    %p62 = scmp.eq.s32.totalorder %s8, 0
    %p63 = por %p61, %p62
    %p64 = scmp.ne.s32.totalorder %s56, %s58
    %p65 = scmp.eq.s32.totalorder %s13, 1
    %p66 = por %p64, %p65
    %p67 = scmp.ne.s32.totalorder %s58, %s59
    %p68 = scmp.eq.s32.totalorder %s13, 0
    %p69 = por %p67, %p68
    %p70 = scmp.ne.s32.totalorder %s58, %s59
    %p71 = scmp.eq.s32.totalorder %s14, 1
    %p72 = por %p70, %p71
    %p74 = scmp.ne.s32.totalorder %s59, %s73
    %p75 = scmp.eq.s32.totalorder %s14, 0
    %p76 = por %p74, %p75
    %s77 = ssub.s32 %s15, %s27
    %p78 = scmp.eq.s32.totalorder %s77, 0
    %s80 = sadd.s32 %s79, 1
    %s81 = scalar_select %p78, %s79, %s80
    %p84 = pneg %p78
    %p85 = scmp.eq.s32.totalorder %s8, 1
    %p86 = por %p84, %p85
    %p87 = scmp.ne.s32.totalorder %s79, %s82
    %p88 = scmp.eq.s32.totalorder %s8, 0
    %p89 = por %p87, %p88
    %p90 = scmp.ne.s32.totalorder %s79, %s82
    %p91 = scmp.eq.s32.totalorder %s13, 1
    %p92 = por %p90, %p91
    %p93 = scmp.ne.s32.totalorder %s82, %s83
    %p94 = scmp.eq.s32.totalorder %s13, 0
    %p95 = por %p93, %p94
    %p96 = scmp.ne.s32.totalorder %s82, %s83
    %p97 = scmp.eq.s32.totalorder %s14, 1
    %p98 = por %p96, %p97
    %p100 = scmp.ne.s32.totalorder %s83, %s99
    %p101 = scmp.eq.s32.totalorder %s14, 0
    %p102 = por %p100, %p101
    %p103 = scmp.le.s32.totalorder 1, %s8
    %p104 = scmp.lt.s32.totalorder %s8, 3
    %p105 = pnand %p103, %p104
    %p106 = pneg %p105
    // Predicated region
    $region9: #{proto_block_forward.2} parent=5 // pred_check
      _
    $region10: #{proto_block_forward.2} parent=5 // pred_check_branch
      %108 = sbr.rel (%p105) target = $region12
    $region11: #{proto_block_forward.2} parent=5 // pred_region
      %s109 = ssub.s32 %s8, 1
      // Predicated region
      $region13: #{proto_block_forward.2} parent=11 // pred_check
        %p110 = pneg %p69
      $region14: #{proto_block_forward.2} parent=11 // pred_check_branch
        %112 = sbr.rel (%p110) target = $region16
      $region15: #{proto_block_forward.2} parent=11 // pred_region
        _
      $region16: #{proto_block_forward.2} parent=11 // pred_fallthru
        _
    $region12: #{proto_block_forward.2} parent=5 // pred_fallthru
      _
    %p113 = scmp.lt.s32.totalorder %s8, 2
    // Predicated region
    $region17: #{proto_block_forward.2} parent=5 // pred_check
      %p114 = pneg %p113
    $region18: #{proto_block_forward.2} parent=5 // pred_check_branch
      %116 = sbr.rel (%p114) target = $region20
    $region19: #{proto_block_forward.2} parent=5 // pred_region
      // Predicated region
      $region21: #{proto_block_forward.2} parent=19 // pred_check
        %p117 = pneg %p42
      $region22: #{proto_block_forward.2} parent=19 // pred_check_branch
        %119 = sbr.rel (%p117) target = $region24
      $region23: #{proto_block_forward.2} parent=19 // pred_region
        %s120 = sadd.s32 %s15, %s16
        %s121 = smul.u32 16, %s120
        %p122 = scmp.lt.s32.totalorder %s121, 31
        %s123 = scalar_select %p122, %s121, 31
        %s124 = smul.addr %s123, 4
        %s125 = scalar_lea.vmem %s0, %s124
        %s126 = sadd.s32 %s15, %s16
        %s127 = smul.u32 16, %s126
      $region24: #{proto_block_forward.2} parent=19 // pred_fallthru
        _
    $region20: #{proto_block_forward.2} parent=5 // pred_fallthru
      _
    %p128 = scmp.le.s32.totalorder 1, %s8
    %p129 = scmp.lt.s32.totalorder %s8, 3
    %p130 = pnand %p128, %p129
    %p131 = pneg %p130
    // Predicated region
    $region25: #{proto_block_forward.2} parent=5 // pred_check
      _
    $region26: #{proto_block_forward.2} parent=5 // pred_check_branch
      %133 = sbr.rel (%p130) target = $region28
    $region27: #{proto_block_forward.2} parent=5 // pred_region
      %s134 = ssub.s32 %s8, 1
      %s135 = sadd.s32 %s17, %s18
      %s136 = smul.u32 16, %s135
      %p137 = scmp.lt.s32.totalorder %s136, 31
      %s138 = scalar_select %p137, %s136, 31
      %s139 = smul.addr %s138, 4
      %s140 = scalar_lea.vmem %s0, %s139
      %p141 = pneg %p48
      %p142 = pneg %p45
      %p143 = pneg %p69
      %p144 = pneg %p66
      %p145 = pneg %p95
      %p146 = pneg %p92
      %p147 = scmp.lt.s32.totalorder %s17, 1
      %s148 = scalar_select %p147, %s17, 1
      %s149 = smul.addr %s148, 2
      %s150 = scalar_lea.vmem %s2, %s149
      %s151 = sadd.s32 %s17, %s18
      %s152 = smul.u32 16, %s151
      %p153 = scmp.lt.s32.totalorder %s152, 31
      %s154 = scalar_select %p153, %s152, 31
      %s155 = smul.addr %s154, 4
      %s156 = scalar_lea.vmem %s0, %s155
      %s157 = sadd.s32 %s17, %s18
      %s158 = smul.u32 16, %s157
      %p159 = scmp.lt.s32.totalorder %s17, 1
      %s160 = scalar_select %p159, %s17, 1
      %s161 = smul.addr %s160, 2
      %s162 = scalar_lea.vmem %s2, %s161
      %p164 = scmp.eq.s32.totalorder %s18, 0
      // Predicated region
      $region29: #{proto_block_forward.2} parent=27 // pred_check
        %p165 = pneg %p164
      $region30: #{proto_block_forward.2} parent=27 // pred_check_branch
        %167 = sbr.rel (%p165) target = $region32
      $region31: #{proto_block_forward.2} parent=27 // pred_region
        %168 = vst [vmem:[%s162] sm:$0x3] 0.0
      $region32: #{proto_block_forward.2} parent=27 // pred_fallthru
        _
      %v169 = vld [vmem:[%s156] sm:$0xf]
      %v170 = vld [vmem:[%s156 + $0x4] sm:$0xf]
      %v171 = vld [vmem:[%s156 + $0x8] sm:$0xf]
      %v172 = vld [vmem:[%s156 + $0xc] sm:$0xf]
      %v173 = vld [vmem:[%s156 + $0x10] sm:$0xf]
      %v174 = vld [vmem:[%s156 + $0x14] sm:$0xf]
      %v175 = vld [vmem:[%s156 + $0x18] sm:$0xf]
      %v176 = vld [vmem:[%s156 + $0x1c] sm:$0xf]
      %v177 = vld [vmem:[%s156 + $0x20] sm:$0xf]
      %v178 = vld [vmem:[%s156 + $0x24] sm:$0xf]
      %v179 = vld [vmem:[%s156 + $0x28] sm:$0xf]
      %v180 = vld [vmem:[%s156 + $0x2c] sm:$0xf]
      %v181 = vld [vmem:[%s156 + $0x30] sm:$0xf]
      %v182 = vld [vmem:[%s156 + $0x34] sm:$0xf]
      %v183 = vld [vmem:[%s156 + $0x38] sm:$0xf]
      %v184 = vld [vmem:[%s156 + $0x3c] sm:$0xf]
      %v185 = vld [vmem:[%s1] sm:$0xf]
      %v186 = vld [vmem:[%s1 + $0x4] sm:$0xf]
      %s187 = scalar_lea.vmem %s1, 16
      %v188 = vld [vmem:[%s187] sm:$0xf]
      %v189 = vld [vmem:[%s187 + $0x4] sm:$0xf]
      %v206 = vunpack.c.l.b16 %v169
      %v207 = vunpack.c.l.b16 %v170
      %v208 = vunpack.c.l.b16 %v171
      %v209 = vunpack.c.l.b16 %v172
      %v210 = vunpack.c.l.b16 %v173
      %v211 = vunpack.c.l.b16 %v174
      %v212 = vunpack.c.l.b16 %v175
      %v213 = vunpack.c.l.b16 %v176
      %v214 = vunpack.c.l.b16 %v177
      %v215 = vunpack.c.l.b16 %v178
      %v216 = vunpack.c.l.b16 %v179
      %v217 = vunpack.c.l.b16 %v180
      %v218 = vunpack.c.l.b16 %v181
      %v219 = vunpack.c.l.b16 %v182
      %v220 = vunpack.c.l.b16 %v183
      %v221 = vunpack.c.l.b16 %v184
      %v222 = vpack.c.b16 %v207, %v206
      %v223 = vpack.c.b16 %v209, %v208
      %v224 = vpack.c.b16 %v211, %v210
      %v225 = vpack.c.b16 %v213, %v212
      %v226 = vpack.c.b16 %v215, %v214
      %v227 = vpack.c.b16 %v217, %v216
      %v228 = vpack.c.b16 %v219, %v218
      %v229 = vpack.c.b16 %v221, %v220
      %230 = vrot.lane.b32.xlu0 %v222, 112
      %v231 = vpop.permute.xlu0 %230
      %232 = vrot.lane.b32.xlu0 %v223, 112
      %v233 = vpop.permute.xlu0 %232
      %234 = vrot.lane.b32.xlu0 %v224, 112
      %v235 = vpop.permute.xlu0 %234
      %236 = vrot.lane.b32.xlu0 %v225, 112
      %v237 = vpop.permute.xlu0 %236
      %238 = vrot.lane.b32.xlu0 %v226, 112
      %v239 = vpop.permute.xlu0 %238
      %240 = vrot.lane.b32.xlu0 %v227, 112
      %v241 = vpop.permute.xlu0 %240
      %242 = vrot.lane.b32.xlu0 %v228, 112
      %v243 = vpop.permute.xlu0 %242
      %244 = vrot.lane.b32.xlu0 %v229, 112
      %v245 = vpop.permute.xlu0 %244
      %v248 = vunpack.c.l.b16 %v188
      %v249 = vunpack.c.l.b16 %v189
      %v250 = vpack.c.b16 %v249, %v248
      %vm252 = vcmask 130048
      %v254 = vsel %vm252, %v231, 0
      %v257 = vsel %vm252, %v233, 0
      %v260 = vsel %vm252, %v235, 0
      %v263 = vsel %vm252, %v237, 0
      %v266 = vsel %vm252, %v239, 0
      %v269 = vsel %vm252, %v241, 0
      %v272 = vsel %vm252, %v243, 0
      %v275 = vsel %vm252, %v245, 0
      %277 = vmatprep.subr.bf16.mxu0 0
      %278 = vmatpush1.bf16.msra.mxu0 %v250
      %279 = vmatprep.subr.bf16.mxu0 0
      %280 = vmatpush1.bf16.msra.mxu0 0
      %281 = vmatprep.subr.bf16.mxu0 0
      %282 = vmatpush1.bf16.msra.mxu0 0
      %283 = vmatprep.subr.bf16.mxu0 0
      %284 = vmatpush1.bf16.msra.mxu0 0
      %285 = vmatprep.subr.bf16.mxu0 0
      %286 = vmatpush1.bf16.msra.mxu0 0
      %287 = vmatprep.subr.bf16.mxu0 0
      %288 = vmatpush1.bf16.msra.mxu0 0
      %289 = vmatprep.subr.bf16.mxu0 0
      %290 = vmatpush1.bf16.msra.mxu0 0
      %291 = vmatprep.subr.bf16.mxu0 0
      %292 = vmatpush1.bf16.msra.mxu0 0
      %293 = vmatprep.subr.bf16.mxu0 0
      %294 = vmatpush1.bf16.msra.mxu0 0
      %295 = vmatprep.subr.bf16.mxu0 0
      %296 = vmatpush1.bf16.msra.mxu0 0
      %297 = vmatprep.subr.bf16.mxu0 0
      %298 = vmatpush1.bf16.msra.mxu0 0
      %299 = vmatprep.subr.bf16.mxu0 0
      %300 = vmatpush1.bf16.msra.mxu0 0
      %301 = vmatprep.subr.bf16.mxu0 0
      %302 = vmatpush1.bf16.msra.mxu0 0
      %303 = vmatprep.subr.bf16.mxu0 0
      %304 = vmatpush1.bf16.msra.mxu0 0
      %305 = vmatprep.subr.bf16.mxu0 0
      %306 = vmatpush1.bf16.msra.mxu0 0
      %307 = vmatprep.subr.bf16.mxu0 0
      %308 = vmatpush1.bf16.msra.mxu0 0
      %309 = vmatprep.mubr.bf16.mxu0 0
      %310 = vmatmul.mubr.bf16.gmra.mrb[0].mxu0 %v254
      %v311 = vpop.f32.mrb[0].mxu0
      %v312 = vadd.f32 0.0, %v311
      %v313 = vpop.f32.mrb[0].mxu0
      %v314 = vpop.f32.mrb[0].mxu0
      %v315 = vadd.f32 0.0, %v314
      %v316 = vpop.f32.mrb[0].mxu0
      %317 = vmatprep.mubr.bf16.mxu0 0
      %318 = vmatmul.mubr.bf16.gmra.mrb[0].mxu0 %v257
      %v319 = vpop.f32.mrb[0].mxu0
      %v320 = vadd.f32 0.0, %v319
      %v321 = vpop.f32.mrb[0].mxu0
      %v322 = vpop.f32.mrb[0].mxu0
      %v323 = vadd.f32 0.0, %v322
      %v324 = vpop.f32.mrb[0].mxu0
      %325 = vmatprep.mubr.bf16.mxu0 0
      %326 = vmatmul.mubr.bf16.gmra.mrb[0].mxu0 %v260
      %v327 = vpop.f32.mrb[0].mxu0
      %v328 = vadd.f32 0.0, %v327
      %v329 = vpop.f32.mrb[0].mxu0
      %v330 = vpop.f32.mrb[0].mxu0
      %v331 = vadd.f32 0.0, %v330
      %v332 = vpop.f32.mrb[0].mxu0
      %333 = vmatprep.mubr.bf16.mxu0 0
      %334 = vmatmul.mubr.bf16.gmra.mrb[0].mxu0 %v263
      %v335 = vpop.f32.mrb[0].mxu0
      %v336 = vadd.f32 0.0, %v335
      %v337 = vpop.f32.mrb[0].mxu0
      %v338 = vpop.f32.mrb[0].mxu0
      %v339 = vadd.f32 0.0, %v338
      %v340 = vpop.f32.mrb[0].mxu0
      %341 = vmatprep.mubr.bf16.mxu0 0
      %342 = vmatmul.mubr.bf16.gmra.mrb[0].mxu0 %v266
      %v343 = vpop.f32.mrb[0].mxu0
      %v344 = vadd.f32 0.0, %v343
      %v345 = vpop.f32.mrb[0].mxu0
      %v346 = vpop.f32.mrb[0].mxu0
      %v347 = vadd.f32 0.0, %v346
      %v348 = vpop.f32.mrb[0].mxu0
      %349 = vmatprep.mubr.bf16.mxu0 0
      %350 = vmatmul.mubr.bf16.gmra.mrb[0].mxu0 %v269
      %v351 = vpop.f32.mrb[0].mxu0
      %v352 = vadd.f32 0.0, %v351
      %v353 = vpop.f32.mrb[0].mxu0
      %v354 = vpop.f32.mrb[0].mxu0
      %v355 = vadd.f32 0.0, %v354
      %v356 = vpop.f32.mrb[0].mxu0
      %357 = vmatprep.mubr.bf16.mxu0 0
      %358 = vmatmul.mubr.bf16.gmra.mrb[0].mxu0 %v272
      %v359 = vpop.f32.mrb[0].mxu0
      %v360 = vadd.f32 0.0, %v359
      %v361 = vpop.f32.mrb[0].mxu0
      %v362 = vpop.f32.mrb[0].mxu0
      %v363 = vadd.f32 0.0, %v362
      %v364 = vpop.f32.mrb[0].mxu0
      %365 = vmatprep.mubr.bf16.mxu0 0
      %366 = vmatmul.mubr.bf16.gmra.mrb[0].mxu0 %v275
      %v367 = vpop.f32.mrb[0].mxu0
      %v368 = vadd.f32 0.0, %v367
      %v369 = vpop.f32.mrb[0].mxu0
      %v370 = vpop.f32.mrb[0].mxu0
      %v371 = vadd.f32 0.0, %v370
      %v372 = vpop.f32.mrb[0].mxu0
      %373 = vdwg.mxu0
      %v376 = vunpack.c.l.b16 %v185
      %v377 = vunpack.c.l.b16 %v186
      %v378 = vpack.c.b16 %v377, %v376
      %v381 = vsel %vm252, %v222, 0
      %v384 = vsel %vm252, %v223, 0
      %v387 = vsel %vm252, %v224, 0
      %v390 = vsel %vm252, %v225, 0
      %v393 = vsel %vm252, %v226, 0
      %v396 = vsel %vm252, %v227, 0
      %v399 = vsel %vm252, %v228, 0
      %v402 = vsel %vm252, %v229, 0
      %404 = vmatprep.subr.bf16.mxu0 0
      %405 = vmatpush1.bf16.msra.mxu0 %v378
      %406 = vmatprep.subr.bf16.mxu0 0
      %407 = vmatpush1.bf16.msra.mxu0 0
      %408 = vmatprep.subr.bf16.mxu0 0
      %409 = vmatpush1.bf16.msra.mxu0 0
      %410 = vmatprep.subr.bf16.mxu0 0
      %411 = vmatpush1.bf16.msra.mxu0 0
      %412 = vmatprep.subr.bf16.mxu0 0
      %413 = vmatpush1.bf16.msra.mxu0 0
      %414 = vmatprep.subr.bf16.mxu0 0
      %415 = vmatpush1.bf16.msra.mxu0 0
      %416 = vmatprep.subr.bf16.mxu0 0
      %417 = vmatpush1.bf16.msra.mxu0 0
      %418 = vmatprep.subr.bf16.mxu0 0
      %419 = vmatpush1.bf16.msra.mxu0 0
      %420 = vmatprep.subr.bf16.mxu0 0
      %421 = vmatpush1.bf16.msra.mxu0 0
      %422 = vmatprep.subr.bf16.mxu0 0
      %423 = vmatpush1.bf16.msra.mxu0 0
      %424 = vmatprep.subr.bf16.mxu0 0
      %425 = vmatpush1.bf16.msra.mxu0 0
      %426 = vmatprep.subr.bf16.mxu0 0
      %427 = vmatpush1.bf16.msra.mxu0 0
      %428 = vmatprep.subr.bf16.mxu0 0
      %429 = vmatpush1.bf16.msra.mxu0 0
      %430 = vmatprep.subr.bf16.mxu0 0
      %431 = vmatpush1.bf16.msra.mxu0 0
      %432 = vmatprep.subr.bf16.mxu0 0
      %433 = vmatpush1.bf16.msra.mxu0 0
      %434 = vmatprep.subr.bf16.mxu0 0
      %435 = vmatpush1.bf16.msra.mxu0 0
      %436 = vmatprep.mubr.bf16.mxu0 0
      %437 = vmatmul.mubr.bf16.gmra.mrb[0].mxu0 %v381
      %v438 = vpop.f32.mrb[0].mxu0
      %v439 = vadd.f32 %v312, %v438
      %v440 = vpop.f32.mrb[0].mxu0
      %v441 = vpop.f32.mrb[0].mxu0
      %v442 = vadd.f32 %v315, %v441
      %v443 = vpop.f32.mrb[0].mxu0
      %444 = vmatprep.mubr.bf16.mxu0 0
      %445 = vmatmul.mubr.bf16.gmra.mrb[0].mxu0 %v384
      %v446 = vpop.f32.mrb[0].mxu0
      %v447 = vadd.f32 %v320, %v446
      %v448 = vpop.f32.mrb[0].mxu0
      %v449 = vpop.f32.mrb[0].mxu0
      %v450 = vadd.f32 %v323, %v449
      %v451 = vpop.f32.mrb[0].mxu0
      %452 = vmatprep.mubr.bf16.mxu0 0
      %453 = vmatmul.mubr.bf16.gmra.mrb[0].mxu0 %v387
      %v454 = vpop.f32.mrb[0].mxu0
      %v455 = vadd.f32 %v328, %v454
      %v456 = vpop.f32.mrb[0].mxu0
      %v457 = vpop.f32.mrb[0].mxu0
      %v458 = vadd.f32 %v331, %v457
      %v459 = vpop.f32.mrb[0].mxu0
      %460 = vmatprep.mubr.bf16.mxu0 0
      %461 = vmatmul.mubr.bf16.gmra.mrb[0].mxu0 %v390
      %v462 = vpop.f32.mrb[0].mxu0
      %v463 = vadd.f32 %v336, %v462
      %v464 = vpop.f32.mrb[0].mxu0
      %v465 = vpop.f32.mrb[0].mxu0
      %v466 = vadd.f32 %v339, %v465
      %v467 = vpop.f32.mrb[0].mxu0
      %468 = vmatprep.mubr.bf16.mxu0 0
      %469 = vmatmul.mubr.bf16.gmra.mrb[0].mxu0 %v393
      %v470 = vpop.f32.mrb[0].mxu0
      %v471 = vadd.f32 %v344, %v470
      %v472 = vpop.f32.mrb[0].mxu0
      %v473 = vpop.f32.mrb[0].mxu0
      %v474 = vadd.f32 %v347, %v473
      %v475 = vpop.f32.mrb[0].mxu0
      %476 = vmatprep.mubr.bf16.mxu0 0
      %477 = vmatmul.mubr.bf16.gmra.mrb[0].mxu0 %v396
      %v478 = vpop.f32.mrb[0].mxu0
      %v479 = vadd.f32 %v352, %v478
      %v480 = vpop.f32.mrb[0].mxu0
      %v481 = vpop.f32.mrb[0].mxu0
      %v482 = vadd.f32 %v355, %v481
      %v483 = vpop.f32.mrb[0].mxu0
      %484 = vmatprep.mubr.bf16.mxu0 0
      %485 = vmatmul.mubr.bf16.gmra.mrb[0].mxu0 %v399
      %v486 = vpop.f32.mrb[0].mxu0
      %v487 = vadd.f32 %v360, %v486
      %v488 = vpop.f32.mrb[0].mxu0
      %v489 = vpop.f32.mrb[0].mxu0
      %v490 = vadd.f32 %v363, %v489
      %v491 = vpop.f32.mrb[0].mxu0
      %492 = vmatprep.mubr.bf16.mxu0 0
      %493 = vmatmul.mubr.bf16.gmra.mrb[0].mxu0 %v402
      %v494 = vpop.f32.mrb[0].mxu0
      %v495 = vadd.f32 %v368, %v494
      %v496 = vpop.f32.mrb[0].mxu0
      %v497 = vpop.f32.mrb[0].mxu0
      %v498 = vadd.f32 %v371, %v497
      %v499 = vpop.f32.mrb[0].mxu0
      %500 = vdwg.mxu0
      %s501 = scalar_lea.vmem %s1, 32
      %v502 = vld [vmem:[%s501] sm:$0xf]
      %v503 = vld [vmem:[%s501 + $0x4] sm:$0xf]
      %504 = vrot.lane.b32.xlu0 %v222, 96
      %v505 = vpop.permute.xlu0 %504
      %506 = vrot.lane.b32.xlu0 %v223, 96
      %v507 = vpop.permute.xlu0 %506
      %508 = vrot.lane.b32.xlu0 %v224, 96
      %v509 = vpop.permute.xlu0 %508
      %510 = vrot.lane.b32.xlu0 %v225, 96
      %v511 = vpop.permute.xlu0 %510
      %512 = vrot.lane.b32.xlu0 %v226, 96
      %v513 = vpop.permute.xlu0 %512
      %514 = vrot.lane.b32.xlu0 %v227, 96
      %v515 = vpop.permute.xlu0 %514
      %516 = vrot.lane.b32.xlu0 %v228, 96
      %v517 = vpop.permute.xlu0 %516
      %518 = vrot.lane.b32.xlu0 %v229, 96
      %v519 = vpop.permute.xlu0 %518
      %v522 = vunpack.c.l.b16 %v502
      %v523 = vunpack.c.l.b16 %v503
      %v524 = vpack.c.b16 %v523, %v522
      %v527 = vsel %vm252, %v505, 0
      %v530 = vsel %vm252, %v507, 0
      %v533 = vsel %vm252, %v509, 0
      %v536 = vsel %vm252, %v511, 0
      %v539 = vsel %vm252, %v513, 0
      %v542 = vsel %vm252, %v515, 0
      %v545 = vsel %vm252, %v517, 0
      %v548 = vsel %vm252, %v519, 0
      %550 = vmatprep.subr.bf16.mxu0 0
      %551 = vmatpush1.bf16.msra.mxu0 %v524
      %552 = vmatprep.subr.bf16.mxu0 0
      %553 = vmatpush1.bf16.msra.mxu0 0
      %554 = vmatprep.subr.bf16.mxu0 0
      %555 = vmatpush1.bf16.msra.mxu0 0
      %556 = vmatprep.subr.bf16.mxu0 0
      %557 = vmatpush1.bf16.msra.mxu0 0
      %558 = vmatprep.subr.bf16.mxu0 0
      %559 = vmatpush1.bf16.msra.mxu0 0
      %560 = vmatprep.subr.bf16.mxu0 0
      %561 = vmatpush1.bf16.msra.mxu0 0
      %562 = vmatprep.subr.bf16.mxu0 0
      %563 = vmatpush1.bf16.msra.mxu0 0
      %564 = vmatprep.subr.bf16.mxu0 0
      %565 = vmatpush1.bf16.msra.mxu0 0
      %566 = vmatprep.subr.bf16.mxu0 0
      %567 = vmatpush1.bf16.msra.mxu0 0
      %568 = vmatprep.subr.bf16.mxu0 0
      %569 = vmatpush1.bf16.msra.mxu0 0
      %570 = vmatprep.subr.bf16.mxu0 0
      %571 = vmatpush1.bf16.msra.mxu0 0
      %572 = vmatprep.subr.bf16.mxu0 0
      %573 = vmatpush1.bf16.msra.mxu0 0
      %574 = vmatprep.subr.bf16.mxu0 0
      %575 = vmatpush1.bf16.msra.mxu0 0
      %576 = vmatprep.subr.bf16.mxu0 0
      %577 = vmatpush1.bf16.msra.mxu0 0
      %578 = vmatprep.subr.bf16.mxu0 0
      %579 = vmatpush1.bf16.msra.mxu0 0
      %580 = vmatprep.subr.bf16.mxu0 0
      %581 = vmatpush1.bf16.msra.mxu0 0
      %582 = vmatprep.mubr.bf16.mxu0 0
      %583 = vmatmul.mubr.bf16.gmra.mrb[0].mxu0 %v527
      %v584 = vpop.f32.mrb[0].mxu0
      %v585 = vadd.f32 0.0, %v584
      %v586 = vpop.f32.mrb[0].mxu0
      %v587 = vpop.f32.mrb[0].mxu0
      %v588 = vadd.f32 0.0, %v587
      %v589 = vpop.f32.mrb[0].mxu0
      %590 = vmatprep.mubr.bf16.mxu0 0
      %591 = vmatmul.mubr.bf16.gmra.mrb[0].mxu0 %v530
      %v592 = vpop.f32.mrb[0].mxu0
      %v593 = vadd.f32 0.0, %v592
      %v594 = vpop.f32.mrb[0].mxu0
      %v595 = vpop.f32.mrb[0].mxu0
      %v596 = vadd.f32 0.0, %v595
      %v597 = vpop.f32.mrb[0].mxu0
      %598 = vmatprep.mubr.bf16.mxu0 0
      %599 = vmatmul.mubr.bf16.gmra.mrb[0].mxu0 %v533
      %v600 = vpop.f32.mrb[0].mxu0
      %v601 = vadd.f32 0.0, %v600
      %v602 = vpop.f32.mrb[0].mxu0
      %v603 = vpop.f32.mrb[0].mxu0
      %v604 = vadd.f32 0.0, %v603
      %v605 = vpop.f32.mrb[0].mxu0
      %606 = vmatprep.mubr.bf16.mxu0 0
      %607 = vmatmul.mubr.bf16.gmra.mrb[0].mxu0 %v536
      %v608 = vpop.f32.mrb[0].mxu0
      %v609 = vadd.f32 0.0, %v608
      %v610 = vpop.f32.mrb[0].mxu0
      %v611 = vpop.f32.mrb[0].mxu0
      %v612 = vadd.f32 0.0, %v611
      %v613 = vpop.f32.mrb[0].mxu0
      %614 = vmatprep.mubr.bf16.mxu0 0
      %615 = vmatmul.mubr.bf16.gmra.mrb[0].mxu0 %v539
      %v616 = vpop.f32.mrb[0].mxu0
      %v617 = vadd.f32 0.0, %v616
      %v618 = vpop.f32.mrb[0].mxu0
      %v619 = vpop.f32.mrb[0].mxu0
      %v620 = vadd.f32 0.0, %v619
      %v621 = vpop.f32.mrb[0].mxu0
      %622 = vmatprep.mubr.bf16.mxu0 0
      %623 = vmatmul.mubr.bf16.gmra.mrb[0].mxu0 %v542
      %v624 = vpop.f32.mrb[0].mxu0
      %v625 = vadd.f32 0.0, %v624
      %v626 = vpop.f32.mrb[0].mxu0
      %v627 = vpop.f32.mrb[0].mxu0
      %v628 = vadd.f32 0.0, %v627
      %v629 = vpop.f32.mrb[0].mxu0
      %630 = vmatprep.mubr.bf16.mxu0 0
      %631 = vmatmul.mubr.bf16.gmra.mrb[0].mxu0 %v545
      %v632 = vpop.f32.mrb[0].mxu0
      %v633 = vadd.f32 0.0, %v632
      %v634 = vpop.f32.mrb[0].mxu0
      %v635 = vpop.f32.mrb[0].mxu0
      %v636 = vadd.f32 0.0, %v635
      %v637 = vpop.f32.mrb[0].mxu0
      %638 = vmatprep.mubr.bf16.mxu0 0
      %639 = vmatmul.mubr.bf16.gmra.mrb[0].mxu0 %v548
      %v640 = vpop.f32.mrb[0].mxu0
      %v641 = vadd.f32 0.0, %v640
      %v642 = vpop.f32.mrb[0].mxu0
      %v643 = vpop.f32.mrb[0].mxu0
      %v644 = vadd.f32 0.0, %v643
      %v645 = vpop.f32.mrb[0].mxu0
      %646 = vdwg.mxu0
      %v647 = vadd.f32 %v439, %v585
      %v648 = vadd.f32 %v442, %v588
      %v649 = vadd.f32 %v447, %v593
      %v650 = vadd.f32 %v450, %v596
      %v651 = vadd.f32 %v455, %v601
      %v652 = vadd.f32 %v458, %v604
      %v653 = vadd.f32 %v463, %v609
      %v654 = vadd.f32 %v466, %v612
      %v655 = vadd.f32 %v471, %v617
      %v656 = vadd.f32 %v474, %v620
      %v657 = vadd.f32 %v479, %v625
      %v658 = vadd.f32 %v482, %v628
      %v659 = vadd.f32 %v487, %v633
      %v660 = vadd.f32 %v490, %v636
      %v661 = vadd.f32 %v495, %v641
      %v662 = vadd.f32 %v498, %v644
      %v663 = vadd.f32 %v647, %v648
      %v664 = vadd.f32 %v663, %v649
      %v665 = vadd.f32 %v664, %v650
      %v666 = vadd.f32 %v665, %v651
      %v667 = vadd.f32 %v666, %v652
      %v668 = vadd.f32 %v667, %v653
      %v669 = vadd.f32 %v668, %v654
      %v670 = vadd.f32 %v669, %v655
      %v671 = vadd.f32 %v670, %v656
      %v672 = vadd.f32 %v671, %v657
      %v673 = vadd.f32 %v672, %v658
      %v674 = vadd.f32 %v673, %v659
      %v675 = vadd.f32 %v674, %v660
      %v676 = vadd.f32 %v675, %v661
      %v677 = vadd.f32 %v676, %v662
      %v678 = vrot.slane %v677, 4
      %v679 = vadd.f32 %v677, %v678
      %v680 = vrot.slane %v679, 2
      %v681 = vadd.f32 %v679, %v680
      %v682 = vrot.slane %v681, 1
      %v683 = vadd.f32 %v681, %v682
      %v684 = vadd.f32 %v683, 0.0
      %v685 = vmul.f32 %v647, %v647
      %v686 = vmul.f32 %v648, %v648
      %v687 = vmul.f32 %v649, %v649
      %v688 = vmul.f32 %v650, %v650
      %v689 = vmul.f32 %v651, %v651
      %v690 = vmul.f32 %v652, %v652
      %v691 = vmul.f32 %v653, %v653
      %v692 = vmul.f32 %v654, %v654
      %v693 = vmul.f32 %v655, %v655
      %v694 = vmul.f32 %v656, %v656
      %v695 = vmul.f32 %v657, %v657
      %v696 = vmul.f32 %v658, %v658
      %v697 = vmul.f32 %v659, %v659
      %v698 = vmul.f32 %v660, %v660
      %v699 = vmul.f32 %v661, %v661
      %v700 = vmul.f32 %v662, %v662
      %v701 = vadd.f32 %v685, %v686
      %v702 = vadd.f32 %v701, %v687
      %v703 = vadd.f32 %v702, %v688
      %v704 = vadd.f32 %v703, %v689
      %v705 = vadd.f32 %v704, %v690
      %v706 = vadd.f32 %v705, %v691
      %v707 = vadd.f32 %v706, %v692
      %v708 = vadd.f32 %v707, %v693
      %v709 = vadd.f32 %v708, %v694
      %v710 = vadd.f32 %v709, %v695
      %v711 = vadd.f32 %v710, %v696
      %v712 = vadd.f32 %v711, %v697
      %v713 = vadd.f32 %v712, %v698
      %v714 = vadd.f32 %v713, %v699
      %v715 = vadd.f32 %v714, %v700
      %v716 = vrot.slane %v715, 4
      %v717 = vadd.f32 %v715, %v716
      %v718 = vrot.slane %v717, 2
      %v719 = vadd.f32 %v717, %v718
      %v720 = vrot.slane %v719, 1
      %v721 = vadd.f32 %v719, %v720
      %v722 = vadd.f32 %v721, 0.0
      %s723 = scalar_lea.vmem %s1, 8
      %v724 = vld [vmem:[%s723] sm:$0xf]
      %v725 = vld [vmem:[%s723 + $0x4] sm:$0xf]
      %s726 = scalar_lea.vmem %s1, 24
      %v727 = vld [vmem:[%s726] sm:$0xf]
      %v728 = vld [vmem:[%s726 + $0x4] sm:$0xf]
      %v731 = vunpack.c.l.b16 %v727
      %v732 = vunpack.c.l.b16 %v728
      %v733 = vpack.c.b16 %v732, %v731
      %735 = vmatprep.subr.bf16.mxu0 0
      %736 = vmatpush1.bf16.msra.mxu0 %v733
      %737 = vmatprep.subr.bf16.mxu0 0
      %738 = vmatpush1.bf16.msra.mxu0 0
      %739 = vmatprep.subr.bf16.mxu0 0
      %740 = vmatpush1.bf16.msra.mxu0 0
      %741 = vmatprep.subr.bf16.mxu0 0
      %742 = vmatpush1.bf16.msra.mxu0 0
      %743 = vmatprep.subr.bf16.mxu0 0
      %744 = vmatpush1.bf16.msra.mxu0 0
      %745 = vmatprep.subr.bf16.mxu0 0
      %746 = vmatpush1.bf16.msra.mxu0 0
      %747 = vmatprep.subr.bf16.mxu0 0
      %748 = vmatpush1.bf16.msra.mxu0 0
      %749 = vmatprep.subr.bf16.mxu0 0
      %750 = vmatpush1.bf16.msra.mxu0 0
      %751 = vmatprep.subr.bf16.mxu0 0
      %752 = vmatpush1.bf16.msra.mxu0 0
      %753 = vmatprep.subr.bf16.mxu0 0
      %754 = vmatpush1.bf16.msra.mxu0 0
      %755 = vmatprep.subr.bf16.mxu0 0
      %756 = vmatpush1.bf16.msra.mxu0 0
      %757 = vmatprep.subr.bf16.mxu0 0
      %758 = vmatpush1.bf16.msra.mxu0 0
      %759 = vmatprep.subr.bf16.mxu0 0
      %760 = vmatpush1.bf16.msra.mxu0 0
      %761 = vmatprep.subr.bf16.mxu0 0
      %762 = vmatpush1.bf16.msra.mxu0 0
      %763 = vmatprep.subr.bf16.mxu0 0
      %764 = vmatpush1.bf16.msra.mxu0 0
      %765 = vmatprep.subr.bf16.mxu0 0
      %766 = vmatpush1.bf16.msra.mxu0 0
      %767 = vmatprep.mubr.bf16.mxu0 0
      %768 = vmatmul.mubr.bf16.gmra.mrb[0].mxu0 %v254
      %v769 = vpop.f32.mrb[0].mxu0
      %v770 = vadd.f32 0.0, %v769
      %v771 = vpop.f32.mrb[0].mxu0
      %v772 = vpop.f32.mrb[0].mxu0
      %v773 = vadd.f32 0.0, %v772
      %v774 = vpop.f32.mrb[0].mxu0
      %775 = vmatprep.mubr.bf16.mxu0 0
      %776 = vmatmul.mubr.bf16.gmra.mrb[0].mxu0 %v257
      %v777 = vpop.f32.mrb[0].mxu0
      %v778 = vadd.f32 0.0, %v777
      %v779 = vpop.f32.mrb[0].mxu0
      %v780 = vpop.f32.mrb[0].mxu0
      %v781 = vadd.f32 0.0, %v780
      %v782 = vpop.f32.mrb[0].mxu0
      %783 = vmatprep.mubr.bf16.mxu0 0
      %784 = vmatmul.mubr.bf16.gmra.mrb[0].mxu0 %v260
      %v785 = vpop.f32.mrb[0].mxu0
      %v786 = vadd.f32 0.0, %v785
      %v787 = vpop.f32.mrb[0].mxu0
      %v788 = vpop.f32.mrb[0].mxu0
      %v789 = vadd.f32 0.0, %v788
      %v790 = vpop.f32.mrb[0].mxu0
      %791 = vmatprep.mubr.bf16.mxu0 0
      %792 = vmatmul.mubr.bf16.gmra.mrb[0].mxu0 %v263
      %v793 = vpop.f32.mrb[0].mxu0
      %v794 = vadd.f32 0.0, %v793
      %v795 = vpop.f32.mrb[0].mxu0
      %v796 = vpop.f32.mrb[0].mxu0
      %v797 = vadd.f32 0.0, %v796
      %v798 = vpop.f32.mrb[0].mxu0
      %799 = vmatprep.mubr.bf16.mxu0 0
      %800 = vmatmul.mubr.bf16.gmra.mrb[0].mxu0 %v266
      %v801 = vpop.f32.mrb[0].mxu0
      %v802 = vadd.f32 0.0, %v801
      %v803 = vpop.f32.mrb[0].mxu0
      %v804 = vpop.f32.mrb[0].mxu0
      %v805 = vadd.f32 0.0, %v804
      %v806 = vpop.f32.mrb[0].mxu0
      %807 = vmatprep.mubr.bf16.mxu0 0
      %808 = vmatmul.mubr.bf16.gmra.mrb[0].mxu0 %v269
      %v809 = vpop.f32.mrb[0].mxu0
      %v810 = vadd.f32 0.0, %v809
      %v811 = vpop.f32.mrb[0].mxu0
      %v812 = vpop.f32.mrb[0].mxu0
      %v813 = vadd.f32 0.0, %v812
      %v814 = vpop.f32.mrb[0].mxu0
      %815 = vmatprep.mubr.bf16.mxu0 0
      %816 = vmatmul.mubr.bf16.gmra.mrb[0].mxu0 %v272
      %v817 = vpop.f32.mrb[0].mxu0
      %v818 = vadd.f32 0.0, %v817
      %v819 = vpop.f32.mrb[0].mxu0
      %v820 = vpop.f32.mrb[0].mxu0
      %v821 = vadd.f32 0.0, %v820
      %v822 = vpop.f32.mrb[0].mxu0
      %823 = vmatprep.mubr.bf16.mxu0 0
      %824 = vmatmul.mubr.bf16.gmra.mrb[0].mxu0 %v275
      %v825 = vpop.f32.mrb[0].mxu0
      %v826 = vadd.f32 0.0, %v825
      %v827 = vpop.f32.mrb[0].mxu0
      %v828 = vpop.f32.mrb[0].mxu0
      %v829 = vadd.f32 0.0, %v828
      %v830 = vpop.f32.mrb[0].mxu0
      %831 = vdwg.mxu0
      %v834 = vunpack.c.l.b16 %v724
      %v835 = vunpack.c.l.b16 %v725
      %v836 = vpack.c.b16 %v835, %v834
      %838 = vmatprep.subr.bf16.mxu0 0
      %839 = vmatpush1.bf16.msra.mxu0 %v836
      %840 = vmatprep.subr.bf16.mxu0 0
      %841 = vmatpush1.bf16.msra.mxu0 0
      %842 = vmatprep.subr.bf16.mxu0 0
      %843 = vmatpush1.bf16.msra.mxu0 0
      %844 = vmatprep.subr.bf16.mxu0 0
      %845 = vmatpush1.bf16.msra.mxu0 0
      %846 = vmatprep.subr.bf16.mxu0 0
      %847 = vmatpush1.bf16.msra.mxu0 0
      %848 = vmatprep.subr.bf16.mxu0 0
      %849 = vmatpush1.bf16.msra.mxu0 0
      %850 = vmatprep.subr.bf16.mxu0 0
      %851 = vmatpush1.bf16.msra.mxu0 0
      %852 = vmatprep.subr.bf16.mxu0 0
      %853 = vmatpush1.bf16.msra.mxu0 0
      %854 = vmatprep.subr.bf16.mxu0 0
      %855 = vmatpush1.bf16.msra.mxu0 0
      %856 = vmatprep.subr.bf16.mxu0 0
      %857 = vmatpush1.bf16.msra.mxu0 0
      %858 = vmatprep.subr.bf16.mxu0 0
      %859 = vmatpush1.bf16.msra.mxu0 0
      %860 = vmatprep.subr.bf16.mxu0 0
      %861 = vmatpush1.bf16.msra.mxu0 0
      %862 = vmatprep.subr.bf16.mxu0 0
      %863 = vmatpush1.bf16.msra.mxu0 0
      %864 = vmatprep.subr.bf16.mxu0 0
      %865 = vmatpush1.bf16.msra.mxu0 0
      %866 = vmatprep.subr.bf16.mxu0 0
      %867 = vmatpush1.bf16.msra.mxu0 0
      %868 = vmatprep.subr.bf16.mxu0 0
      %869 = vmatpush1.bf16.msra.mxu0 0
      %870 = vmatprep.mubr.bf16.mxu0 0
      %871 = vmatmul.mubr.bf16.gmra.mrb[0].mxu0 %v381
      %v872 = vpop.f32.mrb[0].mxu0
      %v873 = vadd.f32 %v770, %v872
      %v874 = vpop.f32.mrb[0].mxu0
      %v875 = vpop.f32.mrb[0].mxu0
      %v876 = vadd.f32 %v773, %v875
      %v877 = vpop.f32.mrb[0].mxu0
      %878 = vmatprep.mubr.bf16.mxu0 0
      %879 = vmatmul.mubr.bf16.gmra.mrb[0].mxu0 %v384
      %v880 = vpop.f32.mrb[0].mxu0
      %v881 = vadd.f32 %v778, %v880
      %v882 = vpop.f32.mrb[0].mxu0
      %v883 = vpop.f32.mrb[0].mxu0
      %v884 = vadd.f32 %v781, %v883
      %v885 = vpop.f32.mrb[0].mxu0
      %886 = vmatprep.mubr.bf16.mxu0 0
      %887 = vmatmul.mubr.bf16.gmra.mrb[0].mxu0 %v387
      %v888 = vpop.f32.mrb[0].mxu0
      %v889 = vadd.f32 %v786, %v888
      %v890 = vpop.f32.mrb[0].mxu0
      %v891 = vpop.f32.mrb[0].mxu0
      %v892 = vadd.f32 %v789, %v891
      %v893 = vpop.f32.mrb[0].mxu0
      %894 = vmatprep.mubr.bf16.mxu0 0
      %895 = vmatmul.mubr.bf16.gmra.mrb[0].mxu0 %v390
      %v896 = vpop.f32.mrb[0].mxu0
      %v897 = vadd.f32 %v794, %v896
      %v898 = vpop.f32.mrb[0].mxu0
      %v899 = vpop.f32.mrb[0].mxu0
      %v900 = vadd.f32 %v797, %v899
      %v901 = vpop.f32.mrb[0].mxu0
      %902 = vmatprep.mubr.bf16.mxu0 0
      %903 = vmatmul.mubr.bf16.gmra.mrb[0].mxu0 %v393
      %v904 = vpop.f32.mrb[0].mxu0
      %v905 = vadd.f32 %v802, %v904
      %v906 = vpop.f32.mrb[0].mxu0
      %v907 = vpop.f32.mrb[0].mxu0
      %v908 = vadd.f32 %v805, %v907
      %v909 = vpop.f32.mrb[0].mxu0
      %910 = vmatprep.mubr.bf16.mxu0 0
      %911 = vmatmul.mubr.bf16.gmra.mrb[0].mxu0 %v396
      %v912 = vpop.f32.mrb[0].mxu0
      %v913 = vadd.f32 %v810, %v912
      %v914 = vpop.f32.mrb[0].mxu0
      %v915 = vpop.f32.mrb[0].mxu0
      %v916 = vadd.f32 %v813, %v915
      %v917 = vpop.f32.mrb[0].mxu0
      %918 = vmatprep.mubr.bf16.mxu0 0
      %919 = vmatmul.mubr.bf16.gmra.mrb[0].mxu0 %v399
      %v920 = vpop.f32.mrb[0].mxu0
      %v921 = vadd.f32 %v818, %v920
      %v922 = vpop.f32.mrb[0].mxu0
      %v923 = vpop.f32.mrb[0].mxu0
      %v924 = vadd.f32 %v821, %v923
      %v925 = vpop.f32.mrb[0].mxu0
      %926 = vmatprep.mubr.bf16.mxu0 0
      %927 = vmatmul.mubr.bf16.gmra.mrb[0].mxu0 %v402
      %v928 = vpop.f32.mrb[0].mxu0
      %v929 = vadd.f32 %v826, %v928
      %v930 = vpop.f32.mrb[0].mxu0
      %v931 = vpop.f32.mrb[0].mxu0
      %v932 = vadd.f32 %v829, %v931
      %v933 = vpop.f32.mrb[0].mxu0
      %934 = vdwg.mxu0
      %s935 = scalar_lea.vmem %s1, 40
      %v936 = vld [vmem:[%s935] sm:$0xf]
      %v937 = vld [vmem:[%s935 + $0x4] sm:$0xf]
      %v940 = vunpack.c.l.b16 %v936
      %v941 = vunpack.c.l.b16 %v937
      %v942 = vpack.c.b16 %v941, %v940
      %944 = vmatprep.subr.bf16.mxu0 0
      %945 = vmatpush1.bf16.msra.mxu0 %v942
      %946 = vmatprep.subr.bf16.mxu0 0
      %947 = vmatpush1.bf16.msra.mxu0 0
      %948 = vmatprep.subr.bf16.mxu0 0
      %949 = vmatpush1.bf16.msra.mxu0 0
      %950 = vmatprep.subr.bf16.mxu0 0
      %951 = vmatpush1.bf16.msra.mxu0 0
      %952 = vmatprep.subr.bf16.mxu0 0
      %953 = vmatpush1.bf16.msra.mxu0 0
      %954 = vmatprep.subr.bf16.mxu0 0
      %955 = vmatpush1.bf16.msra.mxu0 0
      %956 = vmatprep.subr.bf16.mxu0 0
      %957 = vmatpush1.bf16.msra.mxu0 0
      %958 = vmatprep.subr.bf16.mxu0 0
      %959 = vmatpush1.bf16.msra.mxu0 0
      %960 = vmatprep.subr.bf16.mxu0 0
      %961 = vmatpush1.bf16.msra.mxu0 0
      %962 = vmatprep.subr.bf16.mxu0 0
      %963 = vmatpush1.bf16.msra.mxu0 0
      %964 = vmatprep.subr.bf16.mxu0 0
      %965 = vmatpush1.bf16.msra.mxu0 0
      %966 = vmatprep.subr.bf16.mxu0 0
      %967 = vmatpush1.bf16.msra.mxu0 0
      %968 = vmatprep.subr.bf16.mxu0 0
      %969 = vmatpush1.bf16.msra.mxu0 0
      %970 = vmatprep.subr.bf16.mxu0 0
      %971 = vmatpush1.bf16.msra.mxu0 0
      %972 = vmatprep.subr.bf16.mxu0 0
      %973 = vmatpush1.bf16.msra.mxu0 0
      %974 = vmatprep.subr.bf16.mxu0 0
      %975 = vmatpush1.bf16.msra.mxu0 0
      %976 = vmatprep.mubr.bf16.mxu0 0
      %977 = vmatmul.mubr.bf16.gmra.mrb[0].mxu0 %v527
      %v978 = vpop.f32.mrb[0].mxu0
      %v979 = vadd.f32 0.0, %v978
      %v980 = vpop.f32.mrb[0].mxu0
      %v981 = vpop.f32.mrb[0].mxu0
      %v982 = vadd.f32 0.0, %v981
      %v983 = vpop.f32.mrb[0].mxu0
      %984 = vmatprep.mubr.bf16.mxu0 0
      %985 = vmatmul.mubr.bf16.gmra.mrb[0].mxu0 %v530
      %v986 = vpop.f32.mrb[0].mxu0
      %v987 = vadd.f32 0.0, %v986
      %v988 = vpop.f32.mrb[0].mxu0
      %v989 = vpop.f32.mrb[0].mxu0
      %v990 = vadd.f32 0.0, %v989
      %v991 = vpop.f32.mrb[0].mxu0
      %992 = vmatprep.mubr.bf16.mxu0 0
      %993 = vmatmul.mubr.bf16.gmra.mrb[0].mxu0 %v533
      %v994 = vpop.f32.mrb[0].mxu0
      %v995 = vadd.f32 0.0, %v994
      %v996 = vpop.f32.mrb[0].mxu0
      %v997 = vpop.f32.mrb[0].mxu0
      %v998 = vadd.f32 0.0, %v997
      %v999 = vpop.f32.mrb[0].mxu0
      %1000 = vmatprep.mubr.bf16.mxu0 0
      %1001 = vmatmul.mubr.bf16.gmra.mrb[0].mxu0 %v536
      %v1002 = vpop.f32.mrb[0].mxu0
      %v1003 = vadd.f32 0.0, %v1002
      %v1004 = vpop.f32.mrb[0].mxu0
      %v1005 = vpop.f32.mrb[0].mxu0
      %v1006 = vadd.f32 0.0, %v1005
      %v1007 = vpop.f32.mrb[0].mxu0
      %1008 = vmatprep.mubr.bf16.mxu0 0
      %1009 = vmatmul.mubr.bf16.gmra.mrb[0].mxu0 %v539
      %v1010 = vpop.f32.mrb[0].mxu0
      %v1011 = vadd.f32 0.0, %v1010
      %v1012 = vpop.f32.mrb[0].mxu0
      %v1013 = vpop.f32.mrb[0].mxu0
      %v1014 = vadd.f32 0.0, %v1013
      %v1015 = vpop.f32.mrb[0].mxu0
      %1016 = vmatprep.mubr.bf16.mxu0 0
      %1017 = vmatmul.mubr.bf16.gmra.mrb[0].mxu0 %v542
      %v1018 = vpop.f32.mrb[0].mxu0
      %v1019 = vadd.f32 0.0, %v1018
      %v1020 = vpop.f32.mrb[0].mxu0
      %v1021 = vpop.f32.mrb[0].mxu0
      %v1022 = vadd.f32 0.0, %v1021
      %v1023 = vpop.f32.mrb[0].mxu0
      %1024 = vmatprep.mubr.bf16.mxu0 0
      %1025 = vmatmul.mubr.bf16.gmra.mrb[0].mxu0 %v545
      %v1026 = vpop.f32.mrb[0].mxu0
      %v1027 = vadd.f32 0.0, %v1026
      %v1028 = vpop.f32.mrb[0].mxu0
      %v1029 = vpop.f32.mrb[0].mxu0
      %v1030 = vadd.f32 0.0, %v1029
      %v1031 = vpop.f32.mrb[0].mxu0
      %1032 = vmatprep.mubr.bf16.mxu0 0
      %1033 = vmatmul.mubr.bf16.gmra.mrb[0].mxu0 %v548
      %v1034 = vpop.f32.mrb[0].mxu0
      %v1035 = vadd.f32 0.0, %v1034
      %v1036 = vpop.f32.mrb[0].mxu0
      %v1037 = vpop.f32.mrb[0].mxu0
      %v1038 = vadd.f32 0.0, %v1037
      %v1039 = vpop.f32.mrb[0].mxu0
      %1040 = vdwg.mxu0
      %v1041 = vadd.f32 %v873, %v979
      %v1042 = vadd.f32 %v876, %v982
      %v1043 = vadd.f32 %v881, %v987
      %v1044 = vadd.f32 %v884, %v990
      %v1045 = vadd.f32 %v889, %v995
      %v1046 = vadd.f32 %v892, %v998
      %v1047 = vadd.f32 %v897, %v1003
      %v1048 = vadd.f32 %v900, %v1006
      %v1049 = vadd.f32 %v905, %v1011
      %v1050 = vadd.f32 %v908, %v1014
      %v1051 = vadd.f32 %v913, %v1019
      %v1052 = vadd.f32 %v916, %v1022
      %v1053 = vadd.f32 %v921, %v1027
      %v1054 = vadd.f32 %v924, %v1030
      %v1055 = vadd.f32 %v929, %v1035
      %v1056 = vadd.f32 %v932, %v1038
      %v1057 = vadd.f32 %v1041, %v1042
      %v1058 = vadd.f32 %v1057, %v1043
      %v1059 = vadd.f32 %v1058, %v1044
      %v1060 = vadd.f32 %v1059, %v1045
      %v1061 = vadd.f32 %v1060, %v1046
      %v1062 = vadd.f32 %v1061, %v1047
      %v1063 = vadd.f32 %v1062, %v1048
      %v1064 = vadd.f32 %v1063, %v1049
      %v1065 = vadd.f32 %v1064, %v1050
      %v1066 = vadd.f32 %v1065, %v1051
      %v1067 = vadd.f32 %v1066, %v1052
      %v1068 = vadd.f32 %v1067, %v1053
      %v1069 = vadd.f32 %v1068, %v1054
      %v1070 = vadd.f32 %v1069, %v1055
      %v1071 = vadd.f32 %v1070, %v1056
      %v1072 = vrot.slane %v1071, 4
      %v1073 = vadd.f32 %v1071, %v1072
      %v1074 = vrot.slane %v1073, 2
      %v1075 = vadd.f32 %v1073, %v1074
      %v1076 = vrot.slane %v1075, 1
      %v1077 = vadd.f32 %v1075, %v1076
      %v1078 = vadd.f32 %v684, %v1077
      %v1079 = vmul.f32 %v1041, %v1041
      %v1080 = vmul.f32 %v1042, %v1042
      %v1081 = vmul.f32 %v1043, %v1043
      %v1082 = vmul.f32 %v1044, %v1044
      %v1083 = vmul.f32 %v1045, %v1045
      %v1084 = vmul.f32 %v1046, %v1046
      %v1085 = vmul.f32 %v1047, %v1047
      %v1086 = vmul.f32 %v1048, %v1048
      %v1087 = vmul.f32 %v1049, %v1049
      %v1088 = vmul.f32 %v1050, %v1050
      %v1089 = vmul.f32 %v1051, %v1051
      %v1090 = vmul.f32 %v1052, %v1052
      %v1091 = vmul.f32 %v1053, %v1053
      %v1092 = vmul.f32 %v1054, %v1054
      %v1093 = vmul.f32 %v1055, %v1055
      %v1094 = vmul.f32 %v1056, %v1056
      %v1095 = vadd.f32 %v1079, %v1080
      %v1096 = vadd.f32 %v1095, %v1081
      %v1097 = vadd.f32 %v1096, %v1082
      %v1098 = vadd.f32 %v1097, %v1083
      %v1099 = vadd.f32 %v1098, %v1084
      %v1100 = vadd.f32 %v1099, %v1085
      %v1101 = vadd.f32 %v1100, %v1086
      %v1102 = vadd.f32 %v1101, %v1087
      %v1103 = vadd.f32 %v1102, %v1088
      %v1104 = vadd.f32 %v1103, %v1089
      %v1105 = vadd.f32 %v1104, %v1090
      %v1106 = vadd.f32 %v1105, %v1091
      %v1107 = vadd.f32 %v1106, %v1092
      %v1108 = vadd.f32 %v1107, %v1093
      %v1109 = vadd.f32 %v1108, %v1094
      %v1110 = vrot.slane %v1109, 4
      %v1111 = vadd.f32 %v1109, %v1110
      %v1112 = vrot.slane %v1111, 2
      %v1113 = vadd.f32 %v1111, %v1112
      %v1114 = vrot.slane %v1113, 1
      %v1115 = vadd.f32 %v1113, %v1114
      %v1116 = vadd.f32 %v722, %v1115
      %1117 = vmatprep.subr.bf16.mxu0 0
      %1118 = vmatpush1.bf16.msra.mxu0 %v250
      %1119 = vmatprep.subr.bf16.mxu0 0
      %1120 = vmatpush1.bf16.msra.mxu0 0
      %1121 = vmatprep.subr.bf16.mxu0 0
      %1122 = vmatpush1.bf16.msra.mxu0 0
      %1123 = vmatprep.subr.bf16.mxu0 0
      %1124 = vmatpush1.bf16.msra.mxu0 0
      %1125 = vmatprep.subr.bf16.mxu0 0
      %1126 = vmatpush1.bf16.msra.mxu0 0
      %1127 = vmatprep.subr.bf16.mxu0 0
      %1128 = vmatpush1.bf16.msra.mxu0 0
      %1129 = vmatprep.subr.bf16.mxu0 0
      %1130 = vmatpush1.bf16.msra.mxu0 0
      %1131 = vmatprep.subr.bf16.mxu0 0
      %1132 = vmatpush1.bf16.msra.mxu0 0
      %1133 = vmatprep.subr.bf16.mxu0 0
      %1134 = vmatpush1.bf16.msra.mxu0 0
      %1135 = vmatprep.subr.bf16.mxu0 0
      %1136 = vmatpush1.bf16.msra.mxu0 0
      %1137 = vmatprep.subr.bf16.mxu0 0
      %1138 = vmatpush1.bf16.msra.mxu0 0
      %1139 = vmatprep.subr.bf16.mxu0 0
      %1140 = vmatpush1.bf16.msra.mxu0 0
      %1141 = vmatprep.subr.bf16.mxu0 0
      %1142 = vmatpush1.bf16.msra.mxu0 0
      %1143 = vmatprep.subr.bf16.mxu0 0
      %1144 = vmatpush1.bf16.msra.mxu0 0
      %1145 = vmatprep.subr.bf16.mxu0 0
      %1146 = vmatpush1.bf16.msra.mxu0 0
      %1147 = vmatprep.subr.bf16.mxu0 0
      %1148 = vmatpush1.bf16.msra.mxu0 0
      %1149 = vmatprep.mubr.bf16.mxu0 0
      %1150 = vmatmul.mubr.bf16.gmra.mrb[0].mxu0 %v527
      %v1151 = vpop.f32.mrb[0].mxu0
      %v1152 = vadd.f32 0.0, %v1151
      %v1153 = vpop.f32.mrb[0].mxu0
      %v1154 = vpop.f32.mrb[0].mxu0
      %v1155 = vadd.f32 0.0, %v1154
      %v1156 = vpop.f32.mrb[0].mxu0
      %1157 = vmatprep.mubr.bf16.mxu0 0
      %1158 = vmatmul.mubr.bf16.gmra.mrb[0].mxu0 %v530
      %v1159 = vpop.f32.mrb[0].mxu0
      %v1160 = vadd.f32 0.0, %v1159
      %v1161 = vpop.f32.mrb[0].mxu0
      %v1162 = vpop.f32.mrb[0].mxu0
      %v1163 = vadd.f32 0.0, %v1162
      %v1164 = vpop.f32.mrb[0].mxu0
      %1165 = vmatprep.mubr.bf16.mxu0 0
      %1166 = vmatmul.mubr.bf16.gmra.mrb[0].mxu0 %v533
      %v1167 = vpop.f32.mrb[0].mxu0
      %v1168 = vadd.f32 0.0, %v1167
      %v1169 = vpop.f32.mrb[0].mxu0
      %v1170 = vpop.f32.mrb[0].mxu0
      %v1171 = vadd.f32 0.0, %v1170
      %v1172 = vpop.f32.mrb[0].mxu0
      %1173 = vmatprep.mubr.bf16.mxu0 0
      %1174 = vmatmul.mubr.bf16.gmra.mrb[0].mxu0 %v536
      %v1175 = vpop.f32.mrb[0].mxu0
      %v1176 = vadd.f32 0.0, %v1175
      %v1177 = vpop.f32.mrb[0].mxu0
      %v1178 = vpop.f32.mrb[0].mxu0
      %v1179 = vadd.f32 0.0, %v1178
      %v1180 = vpop.f32.mrb[0].mxu0
      %1181 = vmatprep.mubr.bf16.mxu0 0
      %1182 = vmatmul.mubr.bf16.gmra.mrb[0].mxu0 %v539
      %v1183 = vpop.f32.mrb[0].mxu0
      %v1184 = vadd.f32 0.0, %v1183
      %v1185 = vpop.f32.mrb[0].mxu0
      %v1186 = vpop.f32.mrb[0].mxu0
      %v1187 = vadd.f32 0.0, %v1186
      %v1188 = vpop.f32.mrb[0].mxu0
      %1189 = vmatprep.mubr.bf16.mxu0 0
      %1190 = vmatmul.mubr.bf16.gmra.mrb[0].mxu0 %v542
      %v1191 = vpop.f32.mrb[0].mxu0
      %v1192 = vadd.f32 0.0, %v1191
      %v1193 = vpop.f32.mrb[0].mxu0
      %v1194 = vpop.f32.mrb[0].mxu0
      %v1195 = vadd.f32 0.0, %v1194
      %v1196 = vpop.f32.mrb[0].mxu0
      %1197 = vmatprep.mubr.bf16.mxu0 0
      %1198 = vmatmul.mubr.bf16.gmra.mrb[0].mxu0 %v545
      %v1199 = vpop.f32.mrb[0].mxu0
      %v1200 = vadd.f32 0.0, %v1199
      %v1201 = vpop.f32.mrb[0].mxu0
      %v1202 = vpop.f32.mrb[0].mxu0
      %v1203 = vadd.f32 0.0, %v1202
      %v1204 = vpop.f32.mrb[0].mxu0
      %1205 = vmatprep.mubr.bf16.mxu0 0
      %1206 = vmatmul.mubr.bf16.gmra.mrb[0].mxu0 %v548
      %v1207 = vpop.f32.mrb[0].mxu0
      %v1208 = vadd.f32 0.0, %v1207
      %v1209 = vpop.f32.mrb[0].mxu0
      %v1210 = vpop.f32.mrb[0].mxu0
      %v1211 = vadd.f32 0.0, %v1210
      %v1212 = vpop.f32.mrb[0].mxu0
      %1213 = vdwg.mxu0
      %1214 = vmatprep.subr.bf16.mxu0 0
      %1215 = vmatpush1.bf16.msra.mxu0 %v378
      %1216 = vmatprep.subr.bf16.mxu0 0
      %1217 = vmatpush1.bf16.msra.mxu0 0
      %1218 = vmatprep.subr.bf16.mxu0 0
      %1219 = vmatpush1.bf16.msra.mxu0 0
      %1220 = vmatprep.subr.bf16.mxu0 0
      %1221 = vmatpush1.bf16.msra.mxu0 0
      %1222 = vmatprep.subr.bf16.mxu0 0
      %1223 = vmatpush1.bf16.msra.mxu0 0
      %1224 = vmatprep.subr.bf16.mxu0 0
      %1225 = vmatpush1.bf16.msra.mxu0 0
      %1226 = vmatprep.subr.bf16.mxu0 0
      %1227 = vmatpush1.bf16.msra.mxu0 0
      %1228 = vmatprep.subr.bf16.mxu0 0
      %1229 = vmatpush1.bf16.msra.mxu0 0
      %1230 = vmatprep.subr.bf16.mxu0 0
      %1231 = vmatpush1.bf16.msra.mxu0 0
      %1232 = vmatprep.subr.bf16.mxu0 0
      %1233 = vmatpush1.bf16.msra.mxu0 0
      %1234 = vmatprep.subr.bf16.mxu0 0
      %1235 = vmatpush1.bf16.msra.mxu0 0
      %1236 = vmatprep.subr.bf16.mxu0 0
      %1237 = vmatpush1.bf16.msra.mxu0 0
      %1238 = vmatprep.subr.bf16.mxu0 0
      %1239 = vmatpush1.bf16.msra.mxu0 0
      %1240 = vmatprep.subr.bf16.mxu0 0
      %1241 = vmatpush1.bf16.msra.mxu0 0
      %1242 = vmatprep.subr.bf16.mxu0 0
      %1243 = vmatpush1.bf16.msra.mxu0 0
      %1244 = vmatprep.subr.bf16.mxu0 0
      %1245 = vmatpush1.bf16.msra.mxu0 0
      %1246 = vmatprep.mubr.bf16.mxu0 0
      %1247 = vmatmul.mubr.bf16.gmra.mrb[0].mxu0 %v254
      %v1248 = vpop.f32.mrb[0].mxu0
      %v1249 = vadd.f32 %v1152, %v1248
      %v1250 = vpop.f32.mrb[0].mxu0
      %v1251 = vpop.f32.mrb[0].mxu0
      %v1252 = vadd.f32 %v1155, %v1251
      %v1253 = vpop.f32.mrb[0].mxu0
      %1254 = vmatprep.mubr.bf16.mxu0 0
      %1255 = vmatmul.mubr.bf16.gmra.mrb[0].mxu0 %v257
      %v1256 = vpop.f32.mrb[0].mxu0
      %v1257 = vadd.f32 %v1160, %v1256
      %v1258 = vpop.f32.mrb[0].mxu0
      %v1259 = vpop.f32.mrb[0].mxu0
      %v1260 = vadd.f32 %v1163, %v1259
      %v1261 = vpop.f32.mrb[0].mxu0
      %1262 = vmatprep.mubr.bf16.mxu0 0
      %1263 = vmatmul.mubr.bf16.gmra.mrb[0].mxu0 %v260
      %v1264 = vpop.f32.mrb[0].mxu0
      %v1265 = vadd.f32 %v1168, %v1264
      %v1266 = vpop.f32.mrb[0].mxu0
      %v1267 = vpop.f32.mrb[0].mxu0
      %v1268 = vadd.f32 %v1171, %v1267
      %v1269 = vpop.f32.mrb[0].mxu0
      %1270 = vmatprep.mubr.bf16.mxu0 0
      %1271 = vmatmul.mubr.bf16.gmra.mrb[0].mxu0 %v263
      %v1272 = vpop.f32.mrb[0].mxu0
      %v1273 = vadd.f32 %v1176, %v1272
      %v1274 = vpop.f32.mrb[0].mxu0
      %v1275 = vpop.f32.mrb[0].mxu0
      %v1276 = vadd.f32 %v1179, %v1275
      %v1277 = vpop.f32.mrb[0].mxu0
      %1278 = vmatprep.mubr.bf16.mxu0 0
      %1279 = vmatmul.mubr.bf16.gmra.mrb[0].mxu0 %v266
      %v1280 = vpop.f32.mrb[0].mxu0
      %v1281 = vadd.f32 %v1184, %v1280
      %v1282 = vpop.f32.mrb[0].mxu0
      %v1283 = vpop.f32.mrb[0].mxu0
      %v1284 = vadd.f32 %v1187, %v1283
      %v1285 = vpop.f32.mrb[0].mxu0
      %1286 = vmatprep.mubr.bf16.mxu0 0
      %1287 = vmatmul.mubr.bf16.gmra.mrb[0].mxu0 %v269
      %v1288 = vpop.f32.mrb[0].mxu0
      %v1289 = vadd.f32 %v1192, %v1288
      %v1290 = vpop.f32.mrb[0].mxu0
      %v1291 = vpop.f32.mrb[0].mxu0
      %v1292 = vadd.f32 %v1195, %v1291
      %v1293 = vpop.f32.mrb[0].mxu0
      %1294 = vmatprep.mubr.bf16.mxu0 0
      %1295 = vmatmul.mubr.bf16.gmra.mrb[0].mxu0 %v272
      %v1296 = vpop.f32.mrb[0].mxu0
      %v1297 = vadd.f32 %v1200, %v1296
      %v1298 = vpop.f32.mrb[0].mxu0
      %v1299 = vpop.f32.mrb[0].mxu0
      %v1300 = vadd.f32 %v1203, %v1299
      %v1301 = vpop.f32.mrb[0].mxu0
      %1302 = vmatprep.mubr.bf16.mxu0 0
      %1303 = vmatmul.mubr.bf16.gmra.mrb[0].mxu0 %v275
      %v1304 = vpop.f32.mrb[0].mxu0
      %v1305 = vadd.f32 %v1208, %v1304
      %v1306 = vpop.f32.mrb[0].mxu0
      %v1307 = vpop.f32.mrb[0].mxu0
      %v1308 = vadd.f32 %v1211, %v1307
      %v1309 = vpop.f32.mrb[0].mxu0
      %1310 = vdwg.mxu0
      %1311 = vrot.lane.b32.xlu0 %v222, 80
      %v1312 = vpop.permute.xlu0 %1311
      %1313 = vrot.lane.b32.xlu0 %v223, 80
      %v1314 = vpop.permute.xlu0 %1313
      %1315 = vrot.lane.b32.xlu0 %v224, 80
      %v1316 = vpop.permute.xlu0 %1315
      %1317 = vrot.lane.b32.xlu0 %v225, 80
      %v1318 = vpop.permute.xlu0 %1317
      %1319 = vrot.lane.b32.xlu0 %v226, 80
      %v1320 = vpop.permute.xlu0 %1319
      %1321 = vrot.lane.b32.xlu0 %v227, 80
      %v1322 = vpop.permute.xlu0 %1321
      %1323 = vrot.lane.b32.xlu0 %v228, 80
      %v1324 = vpop.permute.xlu0 %1323
      %1325 = vrot.lane.b32.xlu0 %v229, 80
      %v1326 = vpop.permute.xlu0 %1325
      %v1328 = vsel %vm252, %v1312, 0
      %v1331 = vsel %vm252, %v1314, 0
      %v1334 = vsel %vm252, %v1316, 0
      %v1337 = vsel %vm252, %v1318, 0
      %v1340 = vsel %vm252, %v1320, 0
      %v1343 = vsel %vm252, %v1322, 0
      %v1346 = vsel %vm252, %v1324, 0
      %v1349 = vsel %vm252, %v1326, 0
      %1351 = vmatprep.subr.bf16.mxu0 0
      %1352 = vmatpush1.bf16.msra.mxu0 %v524
      %1353 = vmatprep.subr.bf16.mxu0 0
      %1354 = vmatpush1.bf16.msra.mxu0 0
      %1355 = vmatprep.subr.bf16.mxu0 0
      %1356 = vmatpush1.bf16.msra.mxu0 0
      %1357 = vmatprep.subr.bf16.mxu0 0
      %1358 = vmatpush1.bf16.msra.mxu0 0
      %1359 = vmatprep.subr.bf16.mxu0 0
      %1360 = vmatpush1.bf16.msra.mxu0 0
      %1361 = vmatprep.subr.bf16.mxu0 0
      %1362 = vmatpush1.bf16.msra.mxu0 0
      %1363 = vmatprep.subr.bf16.mxu0 0
      %1364 = vmatpush1.bf16.msra.mxu0 0
      %1365 = vmatprep.subr.bf16.mxu0 0
      %1366 = vmatpush1.bf16.msra.mxu0 0
      %1367 = vmatprep.subr.bf16.mxu0 0
      %1368 = vmatpush1.bf16.msra.mxu0 0
      %1369 = vmatprep.subr.bf16.mxu0 0
      %1370 = vmatpush1.bf16.msra.mxu0 0
      %1371 = vmatprep.subr.bf16.mxu0 0
      %1372 = vmatpush1.bf16.msra.mxu0 0
      %1373 = vmatprep.subr.bf16.mxu0 0
      %1374 = vmatpush1.bf16.msra.mxu0 0
      %1375 = vmatprep.subr.bf16.mxu0 0
      %1376 = vmatpush1.bf16.msra.mxu0 0
      %1377 = vmatprep.subr.bf16.mxu0 0
      %1378 = vmatpush1.bf16.msra.mxu0 0
      %1379 = vmatprep.subr.bf16.mxu0 0
      %1380 = vmatpush1.bf16.msra.mxu0 0
      %1381 = vmatprep.subr.bf16.mxu0 0
      %1382 = vmatpush1.bf16.msra.mxu0 0
      %1383 = vmatprep.mubr.bf16.mxu0 0
      %1384 = vmatmul.mubr.bf16.gmra.mrb[0].mxu0 %v1328
      %v1385 = vpop.f32.mrb[0].mxu0
      %v1386 = vadd.f32 0.0, %v1385
      %v1387 = vpop.f32.mrb[0].mxu0
      %v1388 = vpop.f32.mrb[0].mxu0
      %v1389 = vadd.f32 0.0, %v1388
      %v1390 = vpop.f32.mrb[0].mxu0
      %1391 = vmatprep.mubr.bf16.mxu0 0
      %1392 = vmatmul.mubr.bf16.gmra.mrb[0].mxu0 %v1331
      %v1393 = vpop.f32.mrb[0].mxu0
      %v1394 = vadd.f32 0.0, %v1393
      %v1395 = vpop.f32.mrb[0].mxu0
      %v1396 = vpop.f32.mrb[0].mxu0
      %v1397 = vadd.f32 0.0, %v1396
      %v1398 = vpop.f32.mrb[0].mxu0
      %1399 = vmatprep.mubr.bf16.mxu0 0
      %1400 = vmatmul.mubr.bf16.gmra.mrb[0].mxu0 %v1334
      %v1401 = vpop.f32.mrb[0].mxu0
      %v1402 = vadd.f32 0.0, %v1401
      %v1403 = vpop.f32.mrb[0].mxu0
      %v1404 = vpop.f32.mrb[0].mxu0
      %v1405 = vadd.f32 0.0, %v1404
      %v1406 = vpop.f32.mrb[0].mxu0
      %1407 = vmatprep.mubr.bf16.mxu0 0
      %1408 = vmatmul.mubr.bf16.gmra.mrb[0].mxu0 %v1337
      %v1409 = vpop.f32.mrb[0].mxu0
      %v1410 = vadd.f32 0.0, %v1409
      %v1411 = vpop.f32.mrb[0].mxu0
      %v1412 = vpop.f32.mrb[0].mxu0
      %v1413 = vadd.f32 0.0, %v1412
      %v1414 = vpop.f32.mrb[0].mxu0
      %1415 = vmatprep.mubr.bf16.mxu0 0
      %1416 = vmatmul.mubr.bf16.gmra.mrb[0].mxu0 %v1340
      %v1417 = vpop.f32.mrb[0].mxu0
      %v1418 = vadd.f32 0.0, %v1417
      %v1419 = vpop.f32.mrb[0].mxu0
      %v1420 = vpop.f32.mrb[0].mxu0
      %v1421 = vadd.f32 0.0, %v1420
      %v1422 = vpop.f32.mrb[0].mxu0
      %1423 = vmatprep.mubr.bf16.mxu0 0
      %1424 = vmatmul.mubr.bf16.gmra.mrb[0].mxu0 %v1343
      %v1425 = vpop.f32.mrb[0].mxu0
      %v1426 = vadd.f32 0.0, %v1425
      %v1427 = vpop.f32.mrb[0].mxu0
      %v1428 = vpop.f32.mrb[0].mxu0
      %v1429 = vadd.f32 0.0, %v1428
      %v1430 = vpop.f32.mrb[0].mxu0
      %1431 = vmatprep.mubr.bf16.mxu0 0
      %1432 = vmatmul.mubr.bf16.gmra.mrb[0].mxu0 %v1346
      %v1433 = vpop.f32.mrb[0].mxu0
      %v1434 = vadd.f32 0.0, %v1433
      %v1435 = vpop.f32.mrb[0].mxu0
      %v1436 = vpop.f32.mrb[0].mxu0
      %v1437 = vadd.f32 0.0, %v1436
      %v1438 = vpop.f32.mrb[0].mxu0
      %1439 = vmatprep.mubr.bf16.mxu0 0
      %1440 = vmatmul.mubr.bf16.gmra.mrb[0].mxu0 %v1349
      %v1441 = vpop.f32.mrb[0].mxu0
      %v1442 = vadd.f32 0.0, %v1441
      %v1443 = vpop.f32.mrb[0].mxu0
      %v1444 = vpop.f32.mrb[0].mxu0
      %v1445 = vadd.f32 0.0, %v1444
      %v1446 = vpop.f32.mrb[0].mxu0
      %1447 = vdwg.mxu0
      %v1448 = vadd.f32 %v1249, %v1386
      %v1449 = vadd.f32 %v1252, %v1389
      %v1450 = vadd.f32 %v1257, %v1394
      %v1451 = vadd.f32 %v1260, %v1397
      %v1452 = vadd.f32 %v1265, %v1402
      %v1453 = vadd.f32 %v1268, %v1405
      %v1454 = vadd.f32 %v1273, %v1410
      %v1455 = vadd.f32 %v1276, %v1413
      %v1456 = vadd.f32 %v1281, %v1418
      %v1457 = vadd.f32 %v1284, %v1421
      %v1458 = vadd.f32 %v1289, %v1426
      %v1459 = vadd.f32 %v1292, %v1429
      %v1460 = vadd.f32 %v1297, %v1434
      %v1461 = vadd.f32 %v1300, %v1437
      %v1462 = vadd.f32 %v1305, %v1442
      %v1463 = vadd.f32 %v1308, %v1445
      %v1464 = vadd.f32 %v1448, %v1449
      %v1465 = vadd.f32 %v1464, %v1450
      %v1466 = vadd.f32 %v1465, %v1451
      %v1467 = vadd.f32 %v1466, %v1452
      %v1468 = vadd.f32 %v1467, %v1453
      %v1469 = vadd.f32 %v1468, %v1454
      %v1470 = vadd.f32 %v1469, %v1455
      %v1471 = vadd.f32 %v1470, %v1456
      %v1472 = vadd.f32 %v1471, %v1457
      %v1473 = vadd.f32 %v1472, %v1458
      %v1474 = vadd.f32 %v1473, %v1459
      %v1475 = vadd.f32 %v1474, %v1460
      %v1476 = vadd.f32 %v1475, %v1461
      %v1477 = vadd.f32 %v1476, %v1462
      %v1478 = vadd.f32 %v1477, %v1463
      %v1479 = vrot.slane %v1478, 4
      %v1480 = vadd.f32 %v1478, %v1479
      %v1481 = vrot.slane %v1480, 2
      %v1482 = vadd.f32 %v1480, %v1481
      %v1483 = vrot.slane %v1482, 1
      %v1484 = vadd.f32 %v1482, %v1483
      %v1485 = vadd.f32 %v1078, %v1484
      %v1486 = vmul.f32 %v1448, %v1448
      %v1487 = vmul.f32 %v1449, %v1449
      %v1488 = vmul.f32 %v1450, %v1450
      %v1489 = vmul.f32 %v1451, %v1451
      %v1490 = vmul.f32 %v1452, %v1452
      %v1491 = vmul.f32 %v1453, %v1453
      %v1492 = vmul.f32 %v1454, %v1454
      %v1493 = vmul.f32 %v1455, %v1455
      %v1494 = vmul.f32 %v1456, %v1456
      %v1495 = vmul.f32 %v1457, %v1457
      %v1496 = vmul.f32 %v1458, %v1458
      %v1497 = vmul.f32 %v1459, %v1459
      %v1498 = vmul.f32 %v1460, %v1460
      %v1499 = vmul.f32 %v1461, %v1461
      %v1500 = vmul.f32 %v1462, %v1462
      %v1501 = vmul.f32 %v1463, %v1463
      %v1502 = vadd.f32 %v1486, %v1487
      %v1503 = vadd.f32 %v1502, %v1488
      %v1504 = vadd.f32 %v1503, %v1489
      %v1505 = vadd.f32 %v1504, %v1490
      %v1506 = vadd.f32 %v1505, %v1491
      %v1507 = vadd.f32 %v1506, %v1492
      %v1508 = vadd.f32 %v1507, %v1493
      %v1509 = vadd.f32 %v1508, %v1494
      %v1510 = vadd.f32 %v1509, %v1495
      %v1511 = vadd.f32 %v1510, %v1496
      %v1512 = vadd.f32 %v1511, %v1497
      %v1513 = vadd.f32 %v1512, %v1498
      %v1514 = vadd.f32 %v1513, %v1499
      %v1515 = vadd.f32 %v1514, %v1500
      %v1516 = vadd.f32 %v1515, %v1501
      %v1517 = vrot.slane %v1516, 4
      %v1518 = vadd.f32 %v1516, %v1517
      %v1519 = vrot.slane %v1518, 2
      %v1520 = vadd.f32 %v1518, %v1519
      %v1521 = vrot.slane %v1520, 1
      %v1522 = vadd.f32 %v1520, %v1521
      %v1523 = vadd.f32 %v1116, %v1522
      %1524 = vmatprep.subr.bf16.mxu0 0
      %1525 = vmatpush1.bf16.msra.mxu0 %v733
      %1526 = vmatprep.subr.bf16.mxu0 0
      %1527 = vmatpush1.bf16.msra.mxu0 0
      %1528 = vmatprep.subr.bf16.mxu0 0
      %1529 = vmatpush1.bf16.msra.mxu0 0
      %1530 = vmatprep.subr.bf16.mxu0 0
      %1531 = vmatpush1.bf16.msra.mxu0 0
      %1532 = vmatprep.subr.bf16.mxu0 0
      %1533 = vmatpush1.bf16.msra.mxu0 0
      %1534 = vmatprep.subr.bf16.mxu0 0
      %1535 = vmatpush1.bf16.msra.mxu0 0
      %1536 = vmatprep.subr.bf16.mxu0 0
      %1537 = vmatpush1.bf16.msra.mxu0 0
      %1538 = vmatprep.subr.bf16.mxu0 0
      %1539 = vmatpush1.bf16.msra.mxu0 0
      %1540 = vmatprep.subr.bf16.mxu0 0
      %1541 = vmatpush1.bf16.msra.mxu0 0
      %1542 = vmatprep.subr.bf16.mxu0 0
      %1543 = vmatpush1.bf16.msra.mxu0 0
      %1544 = vmatprep.subr.bf16.mxu0 0
      %1545 = vmatpush1.bf16.msra.mxu0 0
      %1546 = vmatprep.subr.bf16.mxu0 0
      %1547 = vmatpush1.bf16.msra.mxu0 0
      %1548 = vmatprep.subr.bf16.mxu0 0
      %1549 = vmatpush1.bf16.msra.mxu0 0
      %1550 = vmatprep.subr.bf16.mxu0 0
      %1551 = vmatpush1.bf16.msra.mxu0 0
      %1552 = vmatprep.subr.bf16.mxu0 0
      %1553 = vmatpush1.bf16.msra.mxu0 0
      %1554 = vmatprep.subr.bf16.mxu0 0
      %1555 = vmatpush1.bf16.msra.mxu0 0
      %1556 = vmatprep.mubr.bf16.mxu0 0
      %1557 = vmatmul.mubr.bf16.gmra.mrb[0].mxu0 %v527
      %v1558 = vpop.f32.mrb[0].mxu0
      %v1559 = vadd.f32 0.0, %v1558
      %v1560 = vpop.f32.mrb[0].mxu0
      %v1561 = vpop.f32.mrb[0].mxu0
      %v1562 = vadd.f32 0.0, %v1561
      %v1563 = vpop.f32.mrb[0].mxu0
      %1564 = vmatprep.mubr.bf16.mxu0 0
      %1565 = vmatmul.mubr.bf16.gmra.mrb[0].mxu0 %v530
      %v1566 = vpop.f32.mrb[0].mxu0
      %v1567 = vadd.f32 0.0, %v1566
      %v1568 = vpop.f32.mrb[0].mxu0
      %v1569 = vpop.f32.mrb[0].mxu0
      %v1570 = vadd.f32 0.0, %v1569
      %v1571 = vpop.f32.mrb[0].mxu0
      %1572 = vmatprep.mubr.bf16.mxu0 0
      %1573 = vmatmul.mubr.bf16.gmra.mrb[0].mxu0 %v533
      %v1574 = vpop.f32.mrb[0].mxu0
      %v1575 = vadd.f32 0.0, %v1574
      %v1576 = vpop.f32.mrb[0].mxu0
      %v1577 = vpop.f32.mrb[0].mxu0
      %v1578 = vadd.f32 0.0, %v1577
      %v1579 = vpop.f32.mrb[0].mxu0
      %1580 = vmatprep.mubr.bf16.mxu0 0
      %1581 = vmatmul.mubr.bf16.gmra.mrb[0].mxu0 %v536
      %v1582 = vpop.f32.mrb[0].mxu0
      %v1583 = vadd.f32 0.0, %v1582
      %v1584 = vpop.f32.mrb[0].mxu0
      %v1585 = vpop.f32.mrb[0].mxu0
      %v1586 = vadd.f32 0.0, %v1585
      %v1587 = vpop.f32.mrb[0].mxu0
      %1588 = vmatprep.mubr.bf16.mxu0 0
      %1589 = vmatmul.mubr.bf16.gmra.mrb[0].mxu0 %v539
      %v1590 = vpop.f32.mrb[0].mxu0
      %v1591 = vadd.f32 0.0, %v1590
      %v1592 = vpop.f32.mrb[0].mxu0
      %v1593 = vpop.f32.mrb[0].mxu0
      %v1594 = vadd.f32 0.0, %v1593
      %v1595 = vpop.f32.mrb[0].mxu0
      %1596 = vmatprep.mubr.bf16.mxu0 0
      %1597 = vmatmul.mubr.bf16.gmra.mrb[0].mxu0 %v542
      %v1598 = vpop.f32.mrb[0].mxu0
      %v1599 = vadd.f32 0.0, %v1598
      %v1600 = vpop.f32.mrb[0].mxu0
      %v1601 = vpop.f32.mrb[0].mxu0
      %v1602 = vadd.f32 0.0, %v1601
      %v1603 = vpop.f32.mrb[0].mxu0
      %1604 = vmatprep.mubr.bf16.mxu0 0
      %1605 = vmatmul.mubr.bf16.gmra.mrb[0].mxu0 %v545
      %v1606 = vpop.f32.mrb[0].mxu0
      %v1607 = vadd.f32 0.0, %v1606
      %v1608 = vpop.f32.mrb[0].mxu0
      %v1609 = vpop.f32.mrb[0].mxu0
      %v1610 = vadd.f32 0.0, %v1609
      %v1611 = vpop.f32.mrb[0].mxu0
      %1612 = vmatprep.mubr.bf16.mxu0 0
      %1613 = vmatmul.mubr.bf16.gmra.mrb[0].mxu0 %v548
      %v1614 = vpop.f32.mrb[0].mxu0
      %v1615 = vadd.f32 0.0, %v1614
      %v1616 = vpop.f32.mrb[0].mxu0
      %v1617 = vpop.f32.mrb[0].mxu0
      %v1618 = vadd.f32 0.0, %v1617
      %v1619 = vpop.f32.mrb[0].mxu0
      %1620 = vdwg.mxu0
      %1621 = vmatprep.subr.bf16.mxu0 0
      %1622 = vmatpush1.bf16.msra.mxu0 %v836
      %1623 = vmatprep.subr.bf16.mxu0 0
      %1624 = vmatpush1.bf16.msra.mxu0 0
      %1625 = vmatprep.subr.bf16.mxu0 0
      %1626 = vmatpush1.bf16.msra.mxu0 0
      %1627 = vmatprep.subr.bf16.mxu0 0
      %1628 = vmatpush1.bf16.msra.mxu0 0
      %1629 = vmatprep.subr.bf16.mxu0 0
      %1630 = vmatpush1.bf16.msra.mxu0 0
      %1631 = vmatprep.subr.bf16.mxu0 0
      %1632 = vmatpush1.bf16.msra.mxu0 0
      %1633 = vmatprep.subr.bf16.mxu0 0
      %1634 = vmatpush1.bf16.msra.mxu0 0
      %1635 = vmatprep.subr.bf16.mxu0 0
      %1636 = vmatpush1.bf16.msra.mxu0 0
      %1637 = vmatprep.subr.bf16.mxu0 0
      %1638 = vmatpush1.bf16.msra.mxu0 0
      %1639 = vmatprep.subr.bf16.mxu0 0
      %1640 = vmatpush1.bf16.msra.mxu0 0
      %1641 = vmatprep.subr.bf16.mxu0 0
      %1642 = vmatpush1.bf16.msra.mxu0 0
      %1643 = vmatprep.subr.bf16.mxu0 0
      %1644 = vmatpush1.bf16.msra.mxu0 0
      %1645 = vmatprep.subr.bf16.mxu0 0
      %1646 = vmatpush1.bf16.msra.mxu0 0
      %1647 = vmatprep.subr.bf16.mxu0 0
      %1648 = vmatpush1.bf16.msra.mxu0 0
      %1649 = vmatprep.subr.bf16.mxu0 0
      %1650 = vmatpush1.bf16.msra.mxu0 0
      %1651 = vmatprep.subr.bf16.mxu0 0
      %1652 = vmatpush1.bf16.msra.mxu0 0
      %1653 = vmatprep.mubr.bf16.mxu0 0
      %1654 = vmatmul.mubr.bf16.gmra.mrb[0].mxu0 %v254
      %v1655 = vpop.f32.mrb[0].mxu0
      %v1656 = vadd.f32 %v1559, %v1655
      %v1657 = vpop.f32.mrb[0].mxu0
      %v1658 = vpop.f32.mrb[0].mxu0
      %v1659 = vadd.f32 %v1562, %v1658
      %v1660 = vpop.f32.mrb[0].mxu0
      %1661 = vmatprep.mubr.bf16.mxu0 0
      %1662 = vmatmul.mubr.bf16.gmra.mrb[0].mxu0 %v257
      %v1663 = vpop.f32.mrb[0].mxu0
      %v1664 = vadd.f32 %v1567, %v1663
      %v1665 = vpop.f32.mrb[0].mxu0
      %v1666 = vpop.f32.mrb[0].mxu0
      %v1667 = vadd.f32 %v1570, %v1666
      %v1668 = vpop.f32.mrb[0].mxu0
      %1669 = vmatprep.mubr.bf16.mxu0 0
      %1670 = vmatmul.mubr.bf16.gmra.mrb[0].mxu0 %v260
      %v1671 = vpop.f32.mrb[0].mxu0
      %v1672 = vadd.f32 %v1575, %v1671
      %v1673 = vpop.f32.mrb[0].mxu0
      %v1674 = vpop.f32.mrb[0].mxu0
      %v1675 = vadd.f32 %v1578, %v1674
      %v1676 = vpop.f32.mrb[0].mxu0
      %1677 = vmatprep.mubr.bf16.mxu0 0
      %1678 = vmatmul.mubr.bf16.gmra.mrb[0].mxu0 %v263
      %v1679 = vpop.f32.mrb[0].mxu0
      %v1680 = vadd.f32 %v1583, %v1679
      %v1681 = vpop.f32.mrb[0].mxu0
      %v1682 = vpop.f32.mrb[0].mxu0
      %v1683 = vadd.f32 %v1586, %v1682
      %v1684 = vpop.f32.mrb[0].mxu0
      %1685 = vmatprep.mubr.bf16.mxu0 0
      %1686 = vmatmul.mubr.bf16.gmra.mrb[0].mxu0 %v266
      %v1687 = vpop.f32.mrb[0].mxu0
      %v1688 = vadd.f32 %v1591, %v1687
      %v1689 = vpop.f32.mrb[0].mxu0
      %v1690 = vpop.f32.mrb[0].mxu0
      %v1691 = vadd.f32 %v1594, %v1690
      %v1692 = vpop.f32.mrb[0].mxu0
      %1693 = vmatprep.mubr.bf16.mxu0 0
      %1694 = vmatmul.mubr.bf16.gmra.mrb[0].mxu0 %v269
      %v1695 = vpop.f32.mrb[0].mxu0
      %v1696 = vadd.f32 %v1599, %v1695
      %v1697 = vpop.f32.mrb[0].mxu0
      %v1698 = vpop.f32.mrb[0].mxu0
      %v1699 = vadd.f32 %v1602, %v1698
      %v1700 = vpop.f32.mrb[0].mxu0
      %1701 = vmatprep.mubr.bf16.mxu0 0
      %1702 = vmatmul.mubr.bf16.gmra.mrb[0].mxu0 %v272
      %v1703 = vpop.f32.mrb[0].mxu0
      %v1704 = vadd.f32 %v1607, %v1703
      %v1705 = vpop.f32.mrb[0].mxu0
      %v1706 = vpop.f32.mrb[0].mxu0
      %v1707 = vadd.f32 %v1610, %v1706
      %v1708 = vpop.f32.mrb[0].mxu0
      %1709 = vmatprep.mubr.bf16.mxu0 0
      %1710 = vmatmul.mubr.bf16.gmra.mrb[0].mxu0 %v275
      %v1711 = vpop.f32.mrb[0].mxu0
      %v1712 = vadd.f32 %v1615, %v1711
      %v1713 = vpop.f32.mrb[0].mxu0
      %v1714 = vpop.f32.mrb[0].mxu0
      %v1715 = vadd.f32 %v1618, %v1714
      %v1716 = vpop.f32.mrb[0].mxu0
      %1717 = vdwg.mxu0
      %1718 = vmatprep.subr.bf16.mxu0 0
      %1719 = vmatpush1.bf16.msra.mxu0 %v942
      %1720 = vmatprep.subr.bf16.mxu0 0
      %1721 = vmatpush1.bf16.msra.mxu0 0
      %1722 = vmatprep.subr.bf16.mxu0 0
      %1723 = vmatpush1.bf16.msra.mxu0 0
      %1724 = vmatprep.subr.bf16.mxu0 0
      %1725 = vmatpush1.bf16.msra.mxu0 0
      %1726 = vmatprep.subr.bf16.mxu0 0
      %1727 = vmatpush1.bf16.msra.mxu0 0
      %1728 = vmatprep.subr.bf16.mxu0 0
      %1729 = vmatpush1.bf16.msra.mxu0 0
      %1730 = vmatprep.subr.bf16.mxu0 0
      %1731 = vmatpush1.bf16.msra.mxu0 0
      %1732 = vmatprep.subr.bf16.mxu0 0
      %1733 = vmatpush1.bf16.msra.mxu0 0
      %1734 = vmatprep.subr.bf16.mxu0 0
      %1735 = vmatpush1.bf16.msra.mxu0 0
      %1736 = vmatprep.subr.bf16.mxu0 0
      %1737 = vmatpush1.bf16.msra.mxu0 0
      %1738 = vmatprep.subr.bf16.mxu0 0
      %1739 = vmatpush1.bf16.msra.mxu0 0
      %1740 = vmatprep.subr.bf16.mxu0 0
      %1741 = vmatpush1.bf16.msra.mxu0 0
      %1742 = vmatprep.subr.bf16.mxu0 0
      %1743 = vmatpush1.bf16.msra.mxu0 0
      %1744 = vmatprep.subr.bf16.mxu0 0
      %1745 = vmatpush1.bf16.msra.mxu0 0
      %1746 = vmatprep.subr.bf16.mxu0 0
      %1747 = vmatpush1.bf16.msra.mxu0 0
      %1748 = vmatprep.subr.bf16.mxu0 0
      %1749 = vmatpush1.bf16.msra.mxu0 0
      %1750 = vmatprep.mubr.bf16.mxu0 0
      %1751 = vmatmul.mubr.bf16.gmra.mrb[0].mxu0 %v1328
      %v1752 = vpop.f32.mrb[0].mxu0
      %v1753 = vadd.f32 0.0, %v1752
      %v1754 = vpop.f32.mrb[0].mxu0
      %v1755 = vpop.f32.mrb[0].mxu0
      %v1756 = vadd.f32 0.0, %v1755
      %v1757 = vpop.f32.mrb[0].mxu0
      %1758 = vmatprep.mubr.bf16.mxu0 0
      %1759 = vmatmul.mubr.bf16.gmra.mrb[0].mxu0 %v1331
      %v1760 = vpop.f32.mrb[0].mxu0
      %v1761 = vadd.f32 0.0, %v1760
      %v1762 = vpop.f32.mrb[0].mxu0
      %v1763 = vpop.f32.mrb[0].mxu0
      %v1764 = vadd.f32 0.0, %v1763
      %v1765 = vpop.f32.mrb[0].mxu0
      %1766 = vmatprep.mubr.bf16.mxu0 0
      %1767 = vmatmul.mubr.bf16.gmra.mrb[0].mxu0 %v1334
      %v1768 = vpop.f32.mrb[0].mxu0
      %v1769 = vadd.f32 0.0, %v1768
      %v1770 = vpop.f32.mrb[0].mxu0
      %v1771 = vpop.f32.mrb[0].mxu0
      %v1772 = vadd.f32 0.0, %v1771
      %v1773 = vpop.f32.mrb[0].mxu0
      %1774 = vmatprep.mubr.bf16.mxu0 0
      %1775 = vmatmul.mubr.bf16.gmra.mrb[0].mxu0 %v1337
      %v1776 = vpop.f32.mrb[0].mxu0
      %v1777 = vadd.f32 0.0, %v1776
      %v1778 = vpop.f32.mrb[0].mxu0
      %v1779 = vpop.f32.mrb[0].mxu0
      %v1780 = vadd.f32 0.0, %v1779
      %v1781 = vpop.f32.mrb[0].mxu0
      %1782 = vmatprep.mubr.bf16.mxu0 0
      %1783 = vmatmul.mubr.bf16.gmra.mrb[0].mxu0 %v1340
      %v1784 = vpop.f32.mrb[0].mxu0
      %v1785 = vadd.f32 0.0, %v1784
      %v1786 = vpop.f32.mrb[0].mxu0
      %v1787 = vpop.f32.mrb[0].mxu0
      %v1788 = vadd.f32 0.0, %v1787
      %v1789 = vpop.f32.mrb[0].mxu0
      %1790 = vmatprep.mubr.bf16.mxu0 0
      %1791 = vmatmul.mubr.bf16.gmra.mrb[0].mxu0 %v1343
      %v1792 = vpop.f32.mrb[0].mxu0
      %v1793 = vadd.f32 0.0, %v1792
      %v1794 = vpop.f32.mrb[0].mxu0
      %v1795 = vpop.f32.mrb[0].mxu0
      %v1796 = vadd.f32 0.0, %v1795
      %v1797 = vpop.f32.mrb[0].mxu0
      %1798 = vmatprep.mubr.bf16.mxu0 0
      %1799 = vmatmul.mubr.bf16.gmra.mrb[0].mxu0 %v1346
      %v1800 = vpop.f32.mrb[0].mxu0
      %v1801 = vadd.f32 0.0, %v1800
      %v1802 = vpop.f32.mrb[0].mxu0
      %v1803 = vpop.f32.mrb[0].mxu0
      %v1804 = vadd.f32 0.0, %v1803
      %v1805 = vpop.f32.mrb[0].mxu0
      %1806 = vmatprep.mubr.bf16.mxu0 0
      %1807 = vmatmul.mubr.bf16.gmra.mrb[0].mxu0 %v1349
      %v1808 = vpop.f32.mrb[0].mxu0
      %v1809 = vadd.f32 0.0, %v1808
      %v1810 = vpop.f32.mrb[0].mxu0
      %v1811 = vpop.f32.mrb[0].mxu0
      %v1812 = vadd.f32 0.0, %v1811
      %v1813 = vpop.f32.mrb[0].mxu0
      %1814 = vdwg.mxu0
      %v1815 = vadd.f32 %v1656, %v1753
      %v1816 = vadd.f32 %v1659, %v1756
      %v1817 = vadd.f32 %v1664, %v1761
      %v1818 = vadd.f32 %v1667, %v1764
      %v1819 = vadd.f32 %v1672, %v1769
      %v1820 = vadd.f32 %v1675, %v1772
      %v1821 = vadd.f32 %v1680, %v1777
      %v1822 = vadd.f32 %v1683, %v1780
      %v1823 = vadd.f32 %v1688, %v1785
      %v1824 = vadd.f32 %v1691, %v1788
      %v1825 = vadd.f32 %v1696, %v1793
      %v1826 = vadd.f32 %v1699, %v1796
      %v1827 = vadd.f32 %v1704, %v1801
      %v1828 = vadd.f32 %v1707, %v1804
      %v1829 = vadd.f32 %v1712, %v1809
      %v1830 = vadd.f32 %v1715, %v1812
      %v1831 = vadd.f32 %v1815, %v1816
      %v1832 = vadd.f32 %v1831, %v1817
      %v1833 = vadd.f32 %v1832, %v1818
      %v1834 = vadd.f32 %v1833, %v1819
      %v1835 = vadd.f32 %v1834, %v1820
      %v1836 = vadd.f32 %v1835, %v1821
      %v1837 = vadd.f32 %v1836, %v1822
      %v1838 = vadd.f32 %v1837, %v1823
      %v1839 = vadd.f32 %v1838, %v1824
      %v1840 = vadd.f32 %v1839, %v1825
      %v1841 = vadd.f32 %v1840, %v1826
      %v1842 = vadd.f32 %v1841, %v1827
      %v1843 = vadd.f32 %v1842, %v1828
      %v1844 = vadd.f32 %v1843, %v1829
      %v1845 = vadd.f32 %v1844, %v1830
      %v1846 = vrot.slane %v1845, 4
      %v1847 = vadd.f32 %v1845, %v1846
      %v1848 = vrot.slane %v1847, 2
      %v1849 = vadd.f32 %v1847, %v1848
      %v1850 = vrot.slane %v1849, 1
      %v1851 = vadd.f32 %v1849, %v1850
      %v1852 = vadd.f32 %v1485, %v1851
      %v1853 = vmul.f32 %v1815, %v1815
      %v1854 = vmul.f32 %v1816, %v1816
      %v1855 = vmul.f32 %v1817, %v1817
      %v1856 = vmul.f32 %v1818, %v1818
      %v1857 = vmul.f32 %v1819, %v1819
      %v1858 = vmul.f32 %v1820, %v1820
      %v1859 = vmul.f32 %v1821, %v1821
      %v1860 = vmul.f32 %v1822, %v1822
      %v1861 = vmul.f32 %v1823, %v1823
      %v1862 = vmul.f32 %v1824, %v1824
      %v1863 = vmul.f32 %v1825, %v1825
      %v1864 = vmul.f32 %v1826, %v1826
      %v1865 = vmul.f32 %v1827, %v1827
      %v1866 = vmul.f32 %v1828, %v1828
      %v1867 = vmul.f32 %v1829, %v1829
      %v1868 = vmul.f32 %v1830, %v1830
      %v1869 = vadd.f32 %v1853, %v1854
      %v1870 = vadd.f32 %v1869, %v1855
      %v1871 = vadd.f32 %v1870, %v1856
      %v1872 = vadd.f32 %v1871, %v1857
      %v1873 = vadd.f32 %v1872, %v1858
      %v1874 = vadd.f32 %v1873, %v1859
      %v1875 = vadd.f32 %v1874, %v1860
      %v1876 = vadd.f32 %v1875, %v1861
      %v1877 = vadd.f32 %v1876, %v1862
      %v1878 = vadd.f32 %v1877, %v1863
      %v1879 = vadd.f32 %v1878, %v1864
      %v1880 = vadd.f32 %v1879, %v1865
      %v1881 = vadd.f32 %v1880, %v1866
      %v1882 = vadd.f32 %v1881, %v1867
      %v1883 = vadd.f32 %v1882, %v1868
      %v1884 = vrot.slane %v1883, 4
      %v1885 = vadd.f32 %v1883, %v1884
      %v1886 = vrot.slane %v1885, 2
      %v1887 = vadd.f32 %v1885, %v1886
      %v1888 = vrot.slane %v1887, 1
      %v1889 = vadd.f32 %v1887, %v1888
      %v1890 = vadd.f32 %v1523, %v1889
      %v1891 = vld [vmem:[%s162] sm:$0x3]
      %vm1892 = vcmask 1040384
      %v1893 = vsel %vm1892, %v1852, %v1890
      %v1894 = vadd.f32 %v1891, %v1893
      %1895 = vst [vmem:[%s162] sm:$0x3] %v1894
      %p1896 = scmp.lt.s32.totalorder %s17, 1
      %s1897 = scalar_select %p1896, %s17, 1
      %s1898 = smul.addr %s1897, 2
      %s1899 = scalar_lea.vmem %s2, %s1898
      // Predicated region
      $region33: #{proto_block_forward.2} parent=27 // pred_check
        %p1900 = pneg %p92
      $region34: #{proto_block_forward.2} parent=27 // pred_check_branch
        %1902 = sbr.rel (%p1900) target = $region36
      $region35: #{proto_block_forward.2} parent=27 // pred_region
        _
      $region36: #{proto_block_forward.2} parent=27 // pred_fallthru
        _
    $region28: #{proto_block_forward.2} parent=5 // pred_fallthru
      _
    %p1903 = scmp.le.s32.totalorder 2, %s8
    // Predicated region
    $region37: #{proto_block_forward.2} parent=5 // pred_check
      %p1904 = pneg %p1903
    $region38: #{proto_block_forward.2} parent=5 // pred_check_branch
      %1906 = sbr.rel (%p1904) target = $region40
    $region39: #{proto_block_forward.2} parent=5 // pred_region
      %s1907 = ssub.s32 %s8, 2
      // Predicated region
      $region41: #{proto_block_forward.2} parent=39 // pred_check
        %p1908 = pneg %p98
      $region42: #{proto_block_forward.2} parent=39 // pred_check_branch
        %1910 = sbr.rel (%p1908) target = $region44
      $region43: #{proto_block_forward.2} parent=39 // pred_region
        %p1911 = scmp.lt.s32.totalorder %s19, 1
        %s1912 = scalar_select %p1911, %s19, 1
        %s1913 = smul.addr %s1912, 2
        %s1914 = scalar_lea.vmem %s2, %s1913
      $region44: #{proto_block_forward.2} parent=39 // pred_fallthru
        _
    $region40: #{proto_block_forward.2} parent=5 // pred_fallthru
      _
  $region6: #{proto_block_forward.2} parent=0 // loop_footer
    %s12 = sadd.s32 1, %s8
  $region7: #{proto_block_forward.2} parent=0 // loop_footer_branch
    %7 = sbr.rel target = $region3
  $region8: #{proto_block_forward.2} parent=0 // loop_exit
    _

// kernel: proto_block_forward.3
$region0: #{proto_block_forward.3}
  #allocation0 [shape = 'u32[]', space=smem, size = 0x4, offset = 0x4, fixed_abs, tag = 'smem constant byte address 0x4 - core index']
  #allocation1 [shape = 'u32[144,128]{1,0:T(1,128)}', space=vmem, size = 0x12000, scoped, tag = 'internal scratch']
  %s0 = inlined_call_operand.vmem [shape: bf16[256,64], index: 0, kind: input, shape index: {}]
  %s1 = inlined_call_operand.vmem [shape: bf16[3,2,16,128], index: 1, kind: input, shape index: {}]
  %s2 = inlined_call_operand.vmem [shape: f32[1,128], index: 2, kind: input, shape index: {}]
  %s3 = inlined_call_operand.vmem [shape: f32[1,128], index: 3, kind: input, shape index: {}]
  %s4 = inlined_call_operand.vmem [shape: bf16[256,128], index: 4, kind: output, shape index: {}]
  %s5 = sld [smem:[#allocation0]]
  $region49: #{proto_block_forward.3} parent=0
    _
  %s7 = ssub.s32 1, %s5
  %s8 = scalar_select 0, %s7, %s5
  loop: start=0, step=1, limit=4
  $region2: #{proto_block_forward.3} parent=0 // loop_pre_header
    _
  $region3: #{proto_block_forward.3} parent=0 // loop_header
    %s10 = sphi 0, %s14
    %p11 = scmp.ge.s32.totalorder %s10, 4
    %s20 = sphi 0, %s22
    %s23 = sphi 0, %s20
    %s24 = sphi 0, %s23
    %s40 = sphi 0, %s24
    %s44 = sphi 0, %s44
    %s46 = sphi 0, %s44
    %s47 = sphi 0, %s46
    %s61 = sphi 0, %s47
    %s65 = sphi 0, %s65
    %s67 = sphi 0, %s65
    %s68 = sphi 0, %s67
    %s82 = sphi 0, %s68
    %s86 = sphi 0, %s86
    %s88 = sphi 0, %s86
    %s89 = sphi 0, %s88
    %s103 = sphi 0, %s89
    %s109 = sphi 0, %s111
    %s112 = sphi 0, %s109
    %s113 = sphi 0, %s112
    %s129 = sphi 0, %s113
  $region4: #{proto_block_forward.3} parent=0 // loop_header_branch
    %13 = sbr.rel (%p11) target = $region8
  $region5: #{proto_block_forward.3} parent=0 // loop_body
    %s15 = ssub.s32 %s10, 1
    %s16 = ssub.s32 %s10, 2
    %s17 = sadd.s32 %s10, 1
    %s18 = ssub.s32 %s10, %s17
    %p19 = scmp.eq.s32.totalorder %s18, 0
    %s21 = sadd.s32 %s20, 1
    %s22 = scalar_select %p19, %s20, %s21
    %p25 = pneg %p19
    %p26 = scmp.eq.s32.totalorder %s10, 1
    %p27 = por %p25, %p26
    %p28 = scmp.ne.s32.totalorder %s20, %s23
    %p29 = scmp.eq.s32.totalorder %s10, 0
    %p30 = por %p28, %p29
    %p31 = scmp.ne.s32.totalorder %s20, %s23
    %p32 = scmp.eq.s32.totalorder %s15, 1
    %p33 = por %p31, %p32
    %p34 = scmp.ne.s32.totalorder %s23, %s24
    %p35 = scmp.eq.s32.totalorder %s15, 0
    %p36 = por %p34, %p35
    %p37 = scmp.ne.s32.totalorder %s23, %s24
    %p38 = scmp.eq.s32.totalorder %s16, 1
    %p39 = por %p37, %p38
    %p41 = scmp.ne.s32.totalorder %s24, %s40
    %p42 = scmp.eq.s32.totalorder %s16, 0
    %p43 = por %p41, %p42
    %s45 = sadd.s32 %s44, 1
    %p48 = scmp.eq.s32.totalorder %s10, 1
    %p49 = scmp.ne.s32.totalorder %s44, %s46
    %p50 = scmp.eq.s32.totalorder %s10, 0
    %p51 = por %p49, %p50
    %p52 = scmp.ne.s32.totalorder %s44, %s46
    %p53 = scmp.eq.s32.totalorder %s15, 1
    %p54 = por %p52, %p53
    %p55 = scmp.ne.s32.totalorder %s46, %s47
    %p56 = scmp.eq.s32.totalorder %s15, 0
    %p57 = por %p55, %p56
    %p58 = scmp.ne.s32.totalorder %s46, %s47
    %p59 = scmp.eq.s32.totalorder %s16, 1
    %p60 = por %p58, %p59
    %p62 = scmp.ne.s32.totalorder %s47, %s61
    %p63 = scmp.eq.s32.totalorder %s16, 0
    %p64 = por %p62, %p63
    %s66 = sadd.s32 %s65, 1
    %p69 = scmp.eq.s32.totalorder %s10, 1
    %p70 = scmp.ne.s32.totalorder %s65, %s67
    %p71 = scmp.eq.s32.totalorder %s10, 0
    %p72 = por %p70, %p71
    %p73 = scmp.ne.s32.totalorder %s65, %s67
    %p74 = scmp.eq.s32.totalorder %s15, 1
    %p75 = por %p73, %p74
    %p76 = scmp.ne.s32.totalorder %s67, %s68
    %p77 = scmp.eq.s32.totalorder %s15, 0
    %p78 = por %p76, %p77
    %p79 = scmp.ne.s32.totalorder %s67, %s68
    %p80 = scmp.eq.s32.totalorder %s16, 1
    %p81 = por %p79, %p80
    %p83 = scmp.ne.s32.totalorder %s68, %s82
    %p84 = scmp.eq.s32.totalorder %s16, 0
    %p85 = por %p83, %p84
    %s87 = sadd.s32 %s86, 1
    %p90 = scmp.eq.s32.totalorder %s10, 1
    %p91 = scmp.ne.s32.totalorder %s86, %s88
    %p92 = scmp.eq.s32.totalorder %s10, 0
    %p93 = por %p91, %p92
    %p94 = scmp.ne.s32.totalorder %s86, %s88
    %p95 = scmp.eq.s32.totalorder %s15, 1
    %p96 = por %p94, %p95
    %p97 = scmp.ne.s32.totalorder %s88, %s89
    %p98 = scmp.eq.s32.totalorder %s15, 0
    %p99 = por %p97, %p98
    %p100 = scmp.ne.s32.totalorder %s88, %s89
    %p101 = scmp.eq.s32.totalorder %s16, 1
    %p102 = por %p100, %p101
    %p104 = scmp.ne.s32.totalorder %s89, %s103
    %p105 = scmp.eq.s32.totalorder %s16, 0
    %p106 = por %p104, %p105
    %s107 = ssub.s32 %s10, %s17
    %p108 = scmp.eq.s32.totalorder %s107, 0
    %s110 = sadd.s32 %s109, 1
    %s111 = scalar_select %p108, %s109, %s110
    %p114 = pneg %p108
    %p115 = scmp.eq.s32.totalorder %s10, 1
    %p116 = por %p114, %p115
    %p117 = scmp.ne.s32.totalorder %s109, %s112
    %p118 = scmp.eq.s32.totalorder %s10, 0
    %p119 = por %p117, %p118
    %p120 = scmp.ne.s32.totalorder %s109, %s112
    %p121 = scmp.eq.s32.totalorder %s15, 1
    %p122 = por %p120, %p121
    %p123 = scmp.ne.s32.totalorder %s112, %s113
    %p124 = scmp.eq.s32.totalorder %s15, 0
    %p125 = por %p123, %p124
    %p126 = scmp.ne.s32.totalorder %s112, %s113
    %p127 = scmp.eq.s32.totalorder %s16, 1
    %p128 = por %p126, %p127
    %p130 = scmp.ne.s32.totalorder %s113, %s129
    %p131 = scmp.eq.s32.totalorder %s16, 0
    %p132 = por %p130, %p131
    %p133 = scmp.le.s32.totalorder 1, %s10
    %p134 = scmp.lt.s32.totalorder %s10, 3
    %p135 = pnand %p133, %p134
    %p136 = pneg %p135
    // Predicated region
    $region9: #{proto_block_forward.3} parent=5 // pred_check
      _
    $region10: #{proto_block_forward.3} parent=5 // pred_check_branch
      %138 = sbr.rel (%p135) target = $region12
    $region11: #{proto_block_forward.3} parent=5 // pred_region
      %s139 = ssub.s32 %s10, 1
      // Predicated region
      $region13: #{proto_block_forward.3} parent=11 // pred_check
        %p140 = pneg %p57
      $region14: #{proto_block_forward.3} parent=11 // pred_check_branch
        %142 = sbr.rel (%p140) target = $region16
      $region15: #{proto_block_forward.3} parent=11 // pred_region
        _
      $region16: #{proto_block_forward.3} parent=11 // pred_fallthru
        _
      // Predicated region
      $region17: #{proto_block_forward.3} parent=11 // pred_check
        %p143 = pneg %p78
      $region18: #{proto_block_forward.3} parent=11 // pred_check_branch
        %145 = sbr.rel (%p143) target = $region20
      $region19: #{proto_block_forward.3} parent=11 // pred_region
        _
      $region20: #{proto_block_forward.3} parent=11 // pred_fallthru
        _
      // Predicated region
      $region21: #{proto_block_forward.3} parent=11 // pred_check
        %p146 = pneg %p99
      $region22: #{proto_block_forward.3} parent=11 // pred_check_branch
        %148 = sbr.rel (%p146) target = $region24
      $region23: #{proto_block_forward.3} parent=11 // pred_region
        _
      $region24: #{proto_block_forward.3} parent=11 // pred_fallthru
        _
    $region12: #{proto_block_forward.3} parent=5 // pred_fallthru
      _
    %p149 = scmp.lt.s32.totalorder %s10, 2
    // Predicated region
    $region25: #{proto_block_forward.3} parent=5 // pred_check
      %p150 = pneg %p149
    $region26: #{proto_block_forward.3} parent=5 // pred_check_branch
      %152 = sbr.rel (%p150) target = $region28
    $region27: #{proto_block_forward.3} parent=5 // pred_region
      // Predicated region
      $region29: #{proto_block_forward.3} parent=27 // pred_check
        %p153 = pneg %p30
      $region30: #{proto_block_forward.3} parent=27 // pred_check_branch
        %155 = sbr.rel (%p153) target = $region32
      $region31: #{proto_block_forward.3} parent=27 // pred_region
        %s156 = smul.u32 16, %s10
        %p157 = scmp.lt.s32.totalorder %s156, 31
        %s158 = scalar_select %p157, %s156, 31
        %s159 = smul.addr %s158, 4
        %s160 = scalar_lea.vmem %s0, %s159
        %s161 = smul.u32 16, %s10
      $region32: #{proto_block_forward.3} parent=27 // pred_fallthru
        _
    $region28: #{proto_block_forward.3} parent=5 // pred_fallthru
      _
    %p162 = scmp.le.s32.totalorder 1, %s10
    %p163 = scmp.lt.s32.totalorder %s10, 3
    %p164 = pnand %p162, %p163
    %p165 = pneg %p164
    // Predicated region
    $region33: #{proto_block_forward.3} parent=5 // pred_check
      _
    $region34: #{proto_block_forward.3} parent=5 // pred_check_branch
      %167 = sbr.rel (%p164) target = $region36
    $region35: #{proto_block_forward.3} parent=5 // pred_region
      %s168 = ssub.s32 %s10, 1
      %s169 = smul.u32 16, %s15
      %p170 = scmp.lt.s32.totalorder %s169, 31
      %s171 = scalar_select %p170, %s169, 31
      %s172 = smul.addr %s171, 4
      %s173 = scalar_lea.vmem %s0, %s172
      %p174 = pneg %p36
      %p175 = pneg %p33
      %p176 = pneg %p57
      %p177 = pneg %p54
      %p178 = pneg %p78
      %p179 = pneg %p75
      %p180 = pneg %p99
      %p181 = pneg %p96
      %p182 = pneg %p125
      %p183 = pneg %p122
      %s184 = smul.u32 16, %s15
      %p185 = scmp.lt.s32.totalorder %s184, 31
      %s186 = scalar_select %p185, %s184, 31
      %s187 = smul.addr %s186, 4
      %s188 = scalar_lea.vmem %s4, %s187
      %s189 = smul.u32 16, %s15
      %p190 = scmp.lt.s32.totalorder %s189, 31
      %s191 = scalar_select %p190, %s189, 31
      %s192 = smul.addr %s191, 4
      %s193 = scalar_lea.vmem %s0, %s192
      %s194 = smul.u32 16, %s15
      %s195 = smul.u32 16, %s15
      %p196 = scmp.lt.s32.totalorder %s195, 31
      %s197 = scalar_select %p196, %s195, 31
      %s198 = smul.addr %s197, 4
      %s199 = scalar_lea.vmem %s4, %s198
      %s200 = smul.u32 16, %s15
      %v202 = vld [vmem:[%s2] sm:$0x1]
      %v204 = vlaneseq
      %v205 = vshrl.u32 %v204, 7
      %v206 = vsub.s32 0, %v205
      %v207 = vrot.slane %v202, %v206
      %v209 = vld [vmem:[%s3] sm:$0x1]
      %v211 = vlaneseq
      %v212 = vshrl.u32 %v211, 7
      %v213 = vsub.s32 0, %v212
      %v214 = vrot.slane %v209, %v213
      %v216 = vld [vmem:[%s193] sm:$0xf]
      %v217 = vld [vmem:[%s193 + $0x4] sm:$0xf]
      %v218 = vld [vmem:[%s193 + $0x8] sm:$0xf]
      %v219 = vld [vmem:[%s193 + $0xc] sm:$0xf]
      %v220 = vld [vmem:[%s193 + $0x10] sm:$0xf]
      %v221 = vld [vmem:[%s193 + $0x14] sm:$0xf]
      %v222 = vld [vmem:[%s193 + $0x18] sm:$0xf]
      %v223 = vld [vmem:[%s193 + $0x1c] sm:$0xf]
      %v224 = vld [vmem:[%s193 + $0x20] sm:$0xf]
      %v225 = vld [vmem:[%s193 + $0x24] sm:$0xf]
      %v226 = vld [vmem:[%s193 + $0x28] sm:$0xf]
      %v227 = vld [vmem:[%s193 + $0x2c] sm:$0xf]
      %v228 = vld [vmem:[%s193 + $0x30] sm:$0xf]
      %v229 = vld [vmem:[%s193 + $0x34] sm:$0xf]
      %v230 = vld [vmem:[%s193 + $0x38] sm:$0xf]
      %v231 = vld [vmem:[%s193 + $0x3c] sm:$0xf]
      %v232 = vld [vmem:[%s1] sm:$0xf]
      %v233 = vld [vmem:[%s1 + $0x4] sm:$0xf]
      %s234 = scalar_lea.vmem %s1, 16
      %v235 = vld [vmem:[%s234] sm:$0xf]
      %v236 = vld [vmem:[%s234 + $0x4] sm:$0xf]
      %v253 = vunpack.c.l.b16 %v216
      %v254 = vunpack.c.l.b16 %v217
      %v255 = vunpack.c.l.b16 %v218
      %v256 = vunpack.c.l.b16 %v219
      %v257 = vunpack.c.l.b16 %v220
      %v258 = vunpack.c.l.b16 %v221
      %v259 = vunpack.c.l.b16 %v222
      %v260 = vunpack.c.l.b16 %v223
      %v261 = vunpack.c.l.b16 %v224
      %v262 = vunpack.c.l.b16 %v225
      %v263 = vunpack.c.l.b16 %v226
      %v264 = vunpack.c.l.b16 %v227
      %v265 = vunpack.c.l.b16 %v228
      %v266 = vunpack.c.l.b16 %v229
      %v267 = vunpack.c.l.b16 %v230
      %v268 = vunpack.c.l.b16 %v231
      %v269 = vpack.c.b16 %v254, %v253
      %v270 = vpack.c.b16 %v256, %v255
      %v271 = vpack.c.b16 %v258, %v257
      %v272 = vpack.c.b16 %v260, %v259
      %v273 = vpack.c.b16 %v262, %v261
      %v274 = vpack.c.b16 %v264, %v263
      %v275 = vpack.c.b16 %v266, %v265
      %v276 = vpack.c.b16 %v268, %v267
      %277 = vrot.lane.b32.xlu0 %v269, 112
      %v278 = vpop.permute.xlu0 %277
      %279 = vrot.lane.b32.xlu0 %v270, 112
      %v280 = vpop.permute.xlu0 %279
      %281 = vrot.lane.b32.xlu0 %v271, 112
      %v282 = vpop.permute.xlu0 %281
      %283 = vrot.lane.b32.xlu0 %v272, 112
      %v284 = vpop.permute.xlu0 %283
      %285 = vrot.lane.b32.xlu0 %v273, 112
      %v286 = vpop.permute.xlu0 %285
      %287 = vrot.lane.b32.xlu0 %v274, 112
      %v288 = vpop.permute.xlu0 %287
      %289 = vrot.lane.b32.xlu0 %v275, 112
      %v290 = vpop.permute.xlu0 %289
      %291 = vrot.lane.b32.xlu0 %v276, 112
      %v292 = vpop.permute.xlu0 %291
      %v295 = vunpack.c.l.b16 %v235
      %v296 = vunpack.c.l.b16 %v236
      %v297 = vpack.c.b16 %v296, %v295
      %vm299 = vcmask 130048
      %v301 = vsel %vm299, %v278, 0
      %v304 = vsel %vm299, %v280, 0
      %v307 = vsel %vm299, %v282, 0
      %v310 = vsel %vm299, %v284, 0
      %v313 = vsel %vm299, %v286, 0
      %v316 = vsel %vm299, %v288, 0
      %v319 = vsel %vm299, %v290, 0
      %v322 = vsel %vm299, %v292, 0
      %324 = vmatprep.subr.bf16.mxu0 0
      %325 = vmatpush1.bf16.msra.mxu0 %v297
      %326 = vmatprep.subr.bf16.mxu0 0
      %327 = vmatpush1.bf16.msra.mxu0 0
      %328 = vmatprep.subr.bf16.mxu0 0
      %329 = vmatpush1.bf16.msra.mxu0 0
      %330 = vmatprep.subr.bf16.mxu0 0
      %331 = vmatpush1.bf16.msra.mxu0 0
      %332 = vmatprep.subr.bf16.mxu0 0
      %333 = vmatpush1.bf16.msra.mxu0 0
      %334 = vmatprep.subr.bf16.mxu0 0
      %335 = vmatpush1.bf16.msra.mxu0 0
      %336 = vmatprep.subr.bf16.mxu0 0
      %337 = vmatpush1.bf16.msra.mxu0 0
      %338 = vmatprep.subr.bf16.mxu0 0
      %339 = vmatpush1.bf16.msra.mxu0 0
      %340 = vmatprep.subr.bf16.mxu0 0
      %341 = vmatpush1.bf16.msra.mxu0 0
      %342 = vmatprep.subr.bf16.mxu0 0
      %343 = vmatpush1.bf16.msra.mxu0 0
      %344 = vmatprep.subr.bf16.mxu0 0
      %345 = vmatpush1.bf16.msra.mxu0 0
      %346 = vmatprep.subr.bf16.mxu0 0
      %347 = vmatpush1.bf16.msra.mxu0 0
      %348 = vmatprep.subr.bf16.mxu0 0
      %349 = vmatpush1.bf16.msra.mxu0 0
      %350 = vmatprep.subr.bf16.mxu0 0
      %351 = vmatpush1.bf16.msra.mxu0 0
      %352 = vmatprep.subr.bf16.mxu0 0
      %353 = vmatpush1.bf16.msra.mxu0 0
      %354 = vmatprep.subr.bf16.mxu0 0
      %355 = vmatpush1.bf16.msra.mxu0 0
      %356 = vmatprep.mubr.bf16.mxu0 0
      %357 = vmatmul.mubr.bf16.gmra.mrb[0].mxu0 %v301
      %v358 = vpop.f32.mrb[0].mxu0
      %v359 = vadd.f32 0.0, %v358
      %v360 = vpop.f32.mrb[0].mxu0
      %v361 = vpop.f32.mrb[0].mxu0
      %v362 = vadd.f32 0.0, %v361
      %v363 = vpop.f32.mrb[0].mxu0
      %364 = vmatprep.mubr.bf16.mxu0 0
      %365 = vmatmul.mubr.bf16.gmra.mrb[0].mxu0 %v304
      %v366 = vpop.f32.mrb[0].mxu0
      %v367 = vadd.f32 0.0, %v366
      %v368 = vpop.f32.mrb[0].mxu0
      %v369 = vpop.f32.mrb[0].mxu0
      %v370 = vadd.f32 0.0, %v369
      %v371 = vpop.f32.mrb[0].mxu0
      %372 = vmatprep.mubr.bf16.mxu0 0
      %373 = vmatmul.mubr.bf16.gmra.mrb[0].mxu0 %v307
      %v374 = vpop.f32.mrb[0].mxu0
      %v375 = vadd.f32 0.0, %v374
      %v376 = vpop.f32.mrb[0].mxu0
      %v377 = vpop.f32.mrb[0].mxu0
      %v378 = vadd.f32 0.0, %v377
      %v379 = vpop.f32.mrb[0].mxu0
      %380 = vmatprep.mubr.bf16.mxu0 0
      %381 = vmatmul.mubr.bf16.gmra.mrb[0].mxu0 %v310
      %v382 = vpop.f32.mrb[0].mxu0
      %v383 = vadd.f32 0.0, %v382
      %v384 = vpop.f32.mrb[0].mxu0
      %v385 = vpop.f32.mrb[0].mxu0
      %v386 = vadd.f32 0.0, %v385
      %v387 = vpop.f32.mrb[0].mxu0
      %388 = vmatprep.mubr.bf16.mxu0 0
      %389 = vmatmul.mubr.bf16.gmra.mrb[0].mxu0 %v313
      %v390 = vpop.f32.mrb[0].mxu0
      %v391 = vadd.f32 0.0, %v390
      %v392 = vpop.f32.mrb[0].mxu0
      %v393 = vpop.f32.mrb[0].mxu0
      %v394 = vadd.f32 0.0, %v393
      %v395 = vpop.f32.mrb[0].mxu0
      %396 = vmatprep.mubr.bf16.mxu0 0
      %397 = vmatmul.mubr.bf16.gmra.mrb[0].mxu0 %v316
      %v398 = vpop.f32.mrb[0].mxu0
      %v399 = vadd.f32 0.0, %v398
      %v400 = vpop.f32.mrb[0].mxu0
      %v401 = vpop.f32.mrb[0].mxu0
      %v402 = vadd.f32 0.0, %v401
      %v403 = vpop.f32.mrb[0].mxu0
      %404 = vmatprep.mubr.bf16.mxu0 0
      %405 = vmatmul.mubr.bf16.gmra.mrb[0].mxu0 %v319
      %v406 = vpop.f32.mrb[0].mxu0
      %v407 = vadd.f32 0.0, %v406
      %v408 = vpop.f32.mrb[0].mxu0
      %v409 = vpop.f32.mrb[0].mxu0
      %v410 = vadd.f32 0.0, %v409
      %v411 = vpop.f32.mrb[0].mxu0
      %412 = vmatprep.mubr.bf16.mxu0 0
      %413 = vmatmul.mubr.bf16.gmra.mrb[0].mxu0 %v322
      %v414 = vpop.f32.mrb[0].mxu0
      %v415 = vadd.f32 0.0, %v414
      %v416 = vpop.f32.mrb[0].mxu0
      %v417 = vpop.f32.mrb[0].mxu0
      %v418 = vadd.f32 0.0, %v417
      %v419 = vpop.f32.mrb[0].mxu0
      %420 = vdwg.mxu0
      %v423 = vunpack.c.l.b16 %v232
      %v424 = vunpack.c.l.b16 %v233
      %v425 = vpack.c.b16 %v424, %v423
      %v428 = vsel %vm299, %v269, 0
      %v431 = vsel %vm299, %v270, 0
      %v434 = vsel %vm299, %v271, 0
      %v437 = vsel %vm299, %v272, 0
      %v440 = vsel %vm299, %v273, 0
      %v443 = vsel %vm299, %v274, 0
      %v446 = vsel %vm299, %v275, 0
      %v449 = vsel %vm299, %v276, 0
      %451 = vmatprep.subr.bf16.mxu0 0
      %452 = vmatpush1.bf16.msra.mxu0 %v425
      %453 = vmatprep.subr.bf16.mxu0 0
      %454 = vmatpush1.bf16.msra.mxu0 0
      %455 = vmatprep.subr.bf16.mxu0 0
      %456 = vmatpush1.bf16.msra.mxu0 0
      %457 = vmatprep.subr.bf16.mxu0 0
      %458 = vmatpush1.bf16.msra.mxu0 0
      %459 = vmatprep.subr.bf16.mxu0 0
      %460 = vmatpush1.bf16.msra.mxu0 0
      %461 = vmatprep.subr.bf16.mxu0 0
      %462 = vmatpush1.bf16.msra.mxu0 0
      %463 = vmatprep.subr.bf16.mxu0 0
      %464 = vmatpush1.bf16.msra.mxu0 0
      %465 = vmatprep.subr.bf16.mxu0 0
      %466 = vmatpush1.bf16.msra.mxu0 0
      %467 = vmatprep.subr.bf16.mxu0 0
      %468 = vmatpush1.bf16.msra.mxu0 0
      %469 = vmatprep.subr.bf16.mxu0 0
      %470 = vmatpush1.bf16.msra.mxu0 0
      %471 = vmatprep.subr.bf16.mxu0 0
      %472 = vmatpush1.bf16.msra.mxu0 0
      %473 = vmatprep.subr.bf16.mxu0 0
      %474 = vmatpush1.bf16.msra.mxu0 0
      %475 = vmatprep.subr.bf16.mxu0 0
      %476 = vmatpush1.bf16.msra.mxu0 0
      %477 = vmatprep.subr.bf16.mxu0 0
      %478 = vmatpush1.bf16.msra.mxu0 0
      %479 = vmatprep.subr.bf16.mxu0 0
      %480 = vmatpush1.bf16.msra.mxu0 0
      %481 = vmatprep.subr.bf16.mxu0 0
      %482 = vmatpush1.bf16.msra.mxu0 0
      %483 = vmatprep.mubr.bf16.mxu0 0
      %484 = vmatmul.mubr.bf16.gmra.mrb[0].mxu0 %v428
      %v485 = vpop.f32.mrb[0].mxu0
      %v486 = vadd.f32 %v359, %v485
      %v487 = vpop.f32.mrb[0].mxu0
      %v488 = vpop.f32.mrb[0].mxu0
      %v489 = vadd.f32 %v362, %v488
      %v490 = vpop.f32.mrb[0].mxu0
      %491 = vmatprep.mubr.bf16.mxu0 0
      %492 = vmatmul.mubr.bf16.gmra.mrb[0].mxu0 %v431
      %v493 = vpop.f32.mrb[0].mxu0
      %v494 = vadd.f32 %v367, %v493
      %v495 = vpop.f32.mrb[0].mxu0
      %v496 = vpop.f32.mrb[0].mxu0
      %v497 = vadd.f32 %v370, %v496
      %v498 = vpop.f32.mrb[0].mxu0
      %499 = vmatprep.mubr.bf16.mxu0 0
      %500 = vmatmul.mubr.bf16.gmra.mrb[0].mxu0 %v434
      %v501 = vpop.f32.mrb[0].mxu0
      %v502 = vadd.f32 %v375, %v501
      %v503 = vpop.f32.mrb[0].mxu0
      %v504 = vpop.f32.mrb[0].mxu0
      %v505 = vadd.f32 %v378, %v504
      %v506 = vpop.f32.mrb[0].mxu0
      %507 = vmatprep.mubr.bf16.mxu0 0
      %508 = vmatmul.mubr.bf16.gmra.mrb[0].mxu0 %v437
      %v509 = vpop.f32.mrb[0].mxu0
      %v510 = vadd.f32 %v383, %v509
      %v511 = vpop.f32.mrb[0].mxu0
      %v512 = vpop.f32.mrb[0].mxu0
      %v513 = vadd.f32 %v386, %v512
      %v514 = vpop.f32.mrb[0].mxu0
      %515 = vmatprep.mubr.bf16.mxu0 0
      %516 = vmatmul.mubr.bf16.gmra.mrb[0].mxu0 %v440
      %v517 = vpop.f32.mrb[0].mxu0
      %v518 = vadd.f32 %v391, %v517
      %v519 = vpop.f32.mrb[0].mxu0
      %v520 = vpop.f32.mrb[0].mxu0
      %v521 = vadd.f32 %v394, %v520
      %v522 = vpop.f32.mrb[0].mxu0
      %523 = vmatprep.mubr.bf16.mxu0 0
      %524 = vmatmul.mubr.bf16.gmra.mrb[0].mxu0 %v443
      %v525 = vpop.f32.mrb[0].mxu0
      %v526 = vadd.f32 %v399, %v525
      %v527 = vpop.f32.mrb[0].mxu0
      %v528 = vpop.f32.mrb[0].mxu0
      %v529 = vadd.f32 %v402, %v528
      %v530 = vpop.f32.mrb[0].mxu0
      %531 = vmatprep.mubr.bf16.mxu0 0
      %532 = vmatmul.mubr.bf16.gmra.mrb[0].mxu0 %v446
      %v533 = vpop.f32.mrb[0].mxu0
      %v534 = vadd.f32 %v407, %v533
      %v535 = vpop.f32.mrb[0].mxu0
      %v536 = vpop.f32.mrb[0].mxu0
      %v537 = vadd.f32 %v410, %v536
      %v538 = vpop.f32.mrb[0].mxu0
      %539 = vmatprep.mubr.bf16.mxu0 0
      %540 = vmatmul.mubr.bf16.gmra.mrb[0].mxu0 %v449
      %v541 = vpop.f32.mrb[0].mxu0
      %v542 = vadd.f32 %v415, %v541
      %v543 = vpop.f32.mrb[0].mxu0
      %v544 = vpop.f32.mrb[0].mxu0
      %v545 = vadd.f32 %v418, %v544
      %v546 = vpop.f32.mrb[0].mxu0
      %547 = vdwg.mxu0
      %s548 = scalar_lea.vmem %s1, 32
      %v549 = vld [vmem:[%s548] sm:$0xf]
      %v550 = vld [vmem:[%s548 + $0x4] sm:$0xf]
      %551 = vrot.lane.b32.xlu0 %v269, 96
      %v552 = vpop.permute.xlu0 %551
      %553 = vrot.lane.b32.xlu0 %v270, 96
      %v554 = vpop.permute.xlu0 %553
      %555 = vrot.lane.b32.xlu0 %v271, 96
      %v556 = vpop.permute.xlu0 %555
      %557 = vrot.lane.b32.xlu0 %v272, 96
      %v558 = vpop.permute.xlu0 %557
      %559 = vrot.lane.b32.xlu0 %v273, 96
      %v560 = vpop.permute.xlu0 %559
      %561 = vrot.lane.b32.xlu0 %v274, 96
      %v562 = vpop.permute.xlu0 %561
      %563 = vrot.lane.b32.xlu0 %v275, 96
      %v564 = vpop.permute.xlu0 %563
      %565 = vrot.lane.b32.xlu0 %v276, 96
      %v566 = vpop.permute.xlu0 %565
      %v569 = vunpack.c.l.b16 %v549
      %v570 = vunpack.c.l.b16 %v550
      %v571 = vpack.c.b16 %v570, %v569
      %v574 = vsel %vm299, %v552, 0
      %v577 = vsel %vm299, %v554, 0
      %v580 = vsel %vm299, %v556, 0
      %v583 = vsel %vm299, %v558, 0
      %v586 = vsel %vm299, %v560, 0
      %v589 = vsel %vm299, %v562, 0
      %v592 = vsel %vm299, %v564, 0
      %v595 = vsel %vm299, %v566, 0
      %597 = vmatprep.subr.bf16.mxu0 0
      %598 = vmatpush1.bf16.msra.mxu0 %v571
      %599 = vmatprep.subr.bf16.mxu0 0
      %600 = vmatpush1.bf16.msra.mxu0 0
      %601 = vmatprep.subr.bf16.mxu0 0
      %602 = vmatpush1.bf16.msra.mxu0 0
      %603 = vmatprep.subr.bf16.mxu0 0
      %604 = vmatpush1.bf16.msra.mxu0 0
      %605 = vmatprep.subr.bf16.mxu0 0
      %606 = vmatpush1.bf16.msra.mxu0 0
      %607 = vmatprep.subr.bf16.mxu0 0
      %608 = vmatpush1.bf16.msra.mxu0 0
      %609 = vmatprep.subr.bf16.mxu0 0
      %610 = vmatpush1.bf16.msra.mxu0 0
      %611 = vmatprep.subr.bf16.mxu0 0
      %612 = vmatpush1.bf16.msra.mxu0 0
      %613 = vmatprep.subr.bf16.mxu0 0
      %614 = vmatpush1.bf16.msra.mxu0 0
      %615 = vmatprep.subr.bf16.mxu0 0
      %616 = vmatpush1.bf16.msra.mxu0 0
      %617 = vmatprep.subr.bf16.mxu0 0
      %618 = vmatpush1.bf16.msra.mxu0 0
      %619 = vmatprep.subr.bf16.mxu0 0
      %620 = vmatpush1.bf16.msra.mxu0 0
      %621 = vmatprep.subr.bf16.mxu0 0
      %622 = vmatpush1.bf16.msra.mxu0 0
      %623 = vmatprep.subr.bf16.mxu0 0
      %624 = vmatpush1.bf16.msra.mxu0 0
      %625 = vmatprep.subr.bf16.mxu0 0
      %626 = vmatpush1.bf16.msra.mxu0 0
      %627 = vmatprep.subr.bf16.mxu0 0
      %628 = vmatpush1.bf16.msra.mxu0 0
      %629 = vmatprep.mubr.bf16.mxu0 0
      %630 = vmatmul.mubr.bf16.gmra.mrb[0].mxu0 %v574
      %v631 = vpop.f32.mrb[0].mxu0
      %v632 = vadd.f32 0.0, %v631
      %v633 = vpop.f32.mrb[0].mxu0
      %v634 = vpop.f32.mrb[0].mxu0
      %v635 = vadd.f32 0.0, %v634
      %v636 = vpop.f32.mrb[0].mxu0
      %637 = vmatprep.mubr.bf16.mxu0 0
      %638 = vmatmul.mubr.bf16.gmra.mrb[0].mxu0 %v577
      %v639 = vpop.f32.mrb[0].mxu0
      %v640 = vadd.f32 0.0, %v639
      %v641 = vpop.f32.mrb[0].mxu0
      %v642 = vpop.f32.mrb[0].mxu0
      %v643 = vadd.f32 0.0, %v642
      %v644 = vpop.f32.mrb[0].mxu0
      %645 = vmatprep.mubr.bf16.mxu0 0
      %646 = vmatmul.mubr.bf16.gmra.mrb[0].mxu0 %v580
      %v647 = vpop.f32.mrb[0].mxu0
      %v648 = vadd.f32 0.0, %v647
      %v649 = vpop.f32.mrb[0].mxu0
      %v650 = vpop.f32.mrb[0].mxu0
      %v651 = vadd.f32 0.0, %v650
      %v652 = vpop.f32.mrb[0].mxu0
      %653 = vmatprep.mubr.bf16.mxu0 0
      %654 = vmatmul.mubr.bf16.gmra.mrb[0].mxu0 %v583
      %v655 = vpop.f32.mrb[0].mxu0
      %v656 = vadd.f32 0.0, %v655
      %v657 = vpop.f32.mrb[0].mxu0
      %v658 = vpop.f32.mrb[0].mxu0
      %v659 = vadd.f32 0.0, %v658
      %v660 = vpop.f32.mrb[0].mxu0
      %661 = vmatprep.mubr.bf16.mxu0 0
      %662 = vmatmul.mubr.bf16.gmra.mrb[0].mxu0 %v586
      %v663 = vpop.f32.mrb[0].mxu0
      %v664 = vadd.f32 0.0, %v663
      %v665 = vpop.f32.mrb[0].mxu0
      %v666 = vpop.f32.mrb[0].mxu0
      %v667 = vadd.f32 0.0, %v666
      %v668 = vpop.f32.mrb[0].mxu0
      %669 = vmatprep.mubr.bf16.mxu0 0
      %670 = vmatmul.mubr.bf16.gmra.mrb[0].mxu0 %v589
      %v671 = vpop.f32.mrb[0].mxu0
      %v672 = vadd.f32 0.0, %v671
      %v673 = vpop.f32.mrb[0].mxu0
      %v674 = vpop.f32.mrb[0].mxu0
      %v675 = vadd.f32 0.0, %v674
      %v676 = vpop.f32.mrb[0].mxu0
      %677 = vmatprep.mubr.bf16.mxu0 0
      %678 = vmatmul.mubr.bf16.gmra.mrb[0].mxu0 %v592
      %v679 = vpop.f32.mrb[0].mxu0
      %v680 = vadd.f32 0.0, %v679
      %v681 = vpop.f32.mrb[0].mxu0
      %v682 = vpop.f32.mrb[0].mxu0
      %v683 = vadd.f32 0.0, %v682
      %v684 = vpop.f32.mrb[0].mxu0
      %685 = vmatprep.mubr.bf16.mxu0 0
      %686 = vmatmul.mubr.bf16.gmra.mrb[0].mxu0 %v595
      %v687 = vpop.f32.mrb[0].mxu0
      %v688 = vadd.f32 0.0, %v687
      %v689 = vpop.f32.mrb[0].mxu0
      %v690 = vpop.f32.mrb[0].mxu0
      %v691 = vadd.f32 0.0, %v690
      %v692 = vpop.f32.mrb[0].mxu0
      %693 = vdwg.mxu0
      %v694 = vadd.f32 %v486, %v632
      %v695 = vadd.f32 %v489, %v635
      %v696 = vadd.f32 %v494, %v640
      %v697 = vadd.f32 %v497, %v643
      %v698 = vadd.f32 %v502, %v648
      %v699 = vadd.f32 %v505, %v651
      %v700 = vadd.f32 %v510, %v656
      %v701 = vadd.f32 %v513, %v659
      %v702 = vadd.f32 %v518, %v664
      %v703 = vadd.f32 %v521, %v667
      %v704 = vadd.f32 %v526, %v672
      %v705 = vadd.f32 %v529, %v675
      %v706 = vadd.f32 %v534, %v680
      %v707 = vadd.f32 %v537, %v683
      %v708 = vadd.f32 %v542, %v688
      %v709 = vadd.f32 %v545, %v691
      %v710 = vmul.f32 %v694, %v207
      %v711 = vmul.f32 %v695, %v207
      %v712 = vmul.f32 %v696, %v207
      %v713 = vmul.f32 %v697, %v207
      %v714 = vmul.f32 %v698, %v207
      %v715 = vmul.f32 %v699, %v207
      %v716 = vmul.f32 %v700, %v207
      %v717 = vmul.f32 %v701, %v207
      %v718 = vmul.f32 %v702, %v207
      %v719 = vmul.f32 %v703, %v207
      %v720 = vmul.f32 %v704, %v207
      %v721 = vmul.f32 %v705, %v207
      %v722 = vmul.f32 %v706, %v207
      %v723 = vmul.f32 %v707, %v207
      %v724 = vmul.f32 %v708, %v207
      %v725 = vmul.f32 %v709, %v207
      %v726 = vadd.f32 %v710, %v214
      %v727 = vadd.f32 %v711, %v214
      %v728 = vadd.f32 %v712, %v214
      %v729 = vadd.f32 %v713, %v214
      %v730 = vadd.f32 %v714, %v214
      %v731 = vadd.f32 %v715, %v214
      %v732 = vadd.f32 %v716, %v214
      %v733 = vadd.f32 %v717, %v214
      %v734 = vadd.f32 %v718, %v214
      %v735 = vadd.f32 %v719, %v214
      %v736 = vadd.f32 %v720, %v214
      %v737 = vadd.f32 %v721, %v214
      %v738 = vadd.f32 %v722, %v214
      %v739 = vadd.f32 %v723, %v214
      %v740 = vadd.f32 %v724, %v214
      %v741 = vadd.f32 %v725, %v214
      %v742 = vmax.f32 %v726, 0.0
      %v743 = vmax.f32 %v727, 0.0
      %v744 = vmax.f32 %v728, 0.0
      %v745 = vmax.f32 %v729, 0.0
      %v746 = vmax.f32 %v730, 0.0
      %v747 = vmax.f32 %v731, 0.0
      %v748 = vmax.f32 %v732, 0.0
      %v749 = vmax.f32 %v733, 0.0
      %v750 = vmax.f32 %v734, 0.0
      %v751 = vmax.f32 %v735, 0.0
      %v752 = vmax.f32 %v736, 0.0
      %v753 = vmax.f32 %v737, 0.0
      %v754 = vmax.f32 %v738, 0.0
      %v755 = vmax.f32 %v739, 0.0
      %v756 = vmax.f32 %v740, 0.0
      %v757 = vmax.f32 %v741, 0.0
      %s758 = scalar_lea.vmem %s1, 8
      %v759 = vld [vmem:[%s758] sm:$0xf]
      %v760 = vld [vmem:[%s758 + $0x4] sm:$0xf]
      %s761 = scalar_lea.vmem %s1, 24
      %v762 = vld [vmem:[%s761] sm:$0xf]
      %v763 = vld [vmem:[%s761 + $0x4] sm:$0xf]
      %v766 = vunpack.c.l.b16 %v762
      %v767 = vunpack.c.l.b16 %v763
      %v768 = vpack.c.b16 %v767, %v766
      %770 = vmatprep.subr.bf16.mxu0 0
      %771 = vmatpush1.bf16.msra.mxu0 %v768
      %772 = vmatprep.subr.bf16.mxu0 0
      %773 = vmatpush1.bf16.msra.mxu0 0
      %774 = vmatprep.subr.bf16.mxu0 0
      %775 = vmatpush1.bf16.msra.mxu0 0
      %776 = vmatprep.subr.bf16.mxu0 0
      %777 = vmatpush1.bf16.msra.mxu0 0
      %778 = vmatprep.subr.bf16.mxu0 0
      %779 = vmatpush1.bf16.msra.mxu0 0
      %780 = vmatprep.subr.bf16.mxu0 0
      %781 = vmatpush1.bf16.msra.mxu0 0
      %782 = vmatprep.subr.bf16.mxu0 0
      %783 = vmatpush1.bf16.msra.mxu0 0
      %784 = vmatprep.subr.bf16.mxu0 0
      %785 = vmatpush1.bf16.msra.mxu0 0
      %786 = vmatprep.subr.bf16.mxu0 0
      %787 = vmatpush1.bf16.msra.mxu0 0
      %788 = vmatprep.subr.bf16.mxu0 0
      %789 = vmatpush1.bf16.msra.mxu0 0
      %790 = vmatprep.subr.bf16.mxu0 0
      %791 = vmatpush1.bf16.msra.mxu0 0
      %792 = vmatprep.subr.bf16.mxu0 0
      %793 = vmatpush1.bf16.msra.mxu0 0
      %794 = vmatprep.subr.bf16.mxu0 0
      %795 = vmatpush1.bf16.msra.mxu0 0
      %796 = vmatprep.subr.bf16.mxu0 0
      %797 = vmatpush1.bf16.msra.mxu0 0
      %798 = vmatprep.subr.bf16.mxu0 0
      %799 = vmatpush1.bf16.msra.mxu0 0
      %800 = vmatprep.subr.bf16.mxu0 0
      %801 = vmatpush1.bf16.msra.mxu0 0
      %802 = vmatprep.mubr.bf16.mxu0 0
      %803 = vmatmul.mubr.bf16.gmra.mrb[0].mxu0 %v301
      %v804 = vpop.f32.mrb[0].mxu0
      %v805 = vadd.f32 0.0, %v804
      %v806 = vpop.f32.mrb[0].mxu0
      %v807 = vpop.f32.mrb[0].mxu0
      %v808 = vadd.f32 0.0, %v807
      %v809 = vpop.f32.mrb[0].mxu0
      %810 = vmatprep.mubr.bf16.mxu0 0
      %811 = vmatmul.mubr.bf16.gmra.mrb[0].mxu0 %v304
      %v812 = vpop.f32.mrb[0].mxu0
      %v813 = vadd.f32 0.0, %v812
      %v814 = vpop.f32.mrb[0].mxu0
      %v815 = vpop.f32.mrb[0].mxu0
      %v816 = vadd.f32 0.0, %v815
      %v817 = vpop.f32.mrb[0].mxu0
      %818 = vmatprep.mubr.bf16.mxu0 0
      %819 = vmatmul.mubr.bf16.gmra.mrb[0].mxu0 %v307
      %v820 = vpop.f32.mrb[0].mxu0
      %v821 = vadd.f32 0.0, %v820
      %v822 = vpop.f32.mrb[0].mxu0
      %v823 = vpop.f32.mrb[0].mxu0
      %v824 = vadd.f32 0.0, %v823
      %v825 = vpop.f32.mrb[0].mxu0
      %826 = vmatprep.mubr.bf16.mxu0 0
      %827 = vmatmul.mubr.bf16.gmra.mrb[0].mxu0 %v310
      %v828 = vpop.f32.mrb[0].mxu0
      %v829 = vadd.f32 0.0, %v828
      %v830 = vpop.f32.mrb[0].mxu0
      %v831 = vpop.f32.mrb[0].mxu0
      %v832 = vadd.f32 0.0, %v831
      %v833 = vpop.f32.mrb[0].mxu0
      %834 = vmatprep.mubr.bf16.mxu0 0
      %835 = vmatmul.mubr.bf16.gmra.mrb[0].mxu0 %v313
      %v836 = vpop.f32.mrb[0].mxu0
      %v837 = vadd.f32 0.0, %v836
      %v838 = vpop.f32.mrb[0].mxu0
      %v839 = vpop.f32.mrb[0].mxu0
      %v840 = vadd.f32 0.0, %v839
      %v841 = vpop.f32.mrb[0].mxu0
      %842 = vmatprep.mubr.bf16.mxu0 0
      %843 = vmatmul.mubr.bf16.gmra.mrb[0].mxu0 %v316
      %v844 = vpop.f32.mrb[0].mxu0
      %v845 = vadd.f32 0.0, %v844
      %v846 = vpop.f32.mrb[0].mxu0
      %v847 = vpop.f32.mrb[0].mxu0
      %v848 = vadd.f32 0.0, %v847
      %v849 = vpop.f32.mrb[0].mxu0
      %850 = vmatprep.mubr.bf16.mxu0 0
      %851 = vmatmul.mubr.bf16.gmra.mrb[0].mxu0 %v319
      %v852 = vpop.f32.mrb[0].mxu0
      %v853 = vadd.f32 0.0, %v852
      %v854 = vpop.f32.mrb[0].mxu0
      %v855 = vpop.f32.mrb[0].mxu0
      %v856 = vadd.f32 0.0, %v855
      %v857 = vpop.f32.mrb[0].mxu0
      %858 = vmatprep.mubr.bf16.mxu0 0
      %859 = vmatmul.mubr.bf16.gmra.mrb[0].mxu0 %v322
      %v860 = vpop.f32.mrb[0].mxu0
      %v861 = vadd.f32 0.0, %v860
      %v862 = vpop.f32.mrb[0].mxu0
      %v863 = vpop.f32.mrb[0].mxu0
      %v864 = vadd.f32 0.0, %v863
      %v865 = vpop.f32.mrb[0].mxu0
      %866 = vdwg.mxu0
      %v869 = vunpack.c.l.b16 %v759
      %v870 = vunpack.c.l.b16 %v760
      %v871 = vpack.c.b16 %v870, %v869
      %873 = vmatprep.subr.bf16.mxu0 0
      %874 = vmatpush1.bf16.msra.mxu0 %v871
      %875 = vmatprep.subr.bf16.mxu0 0
      %876 = vmatpush1.bf16.msra.mxu0 0
      %877 = vmatprep.subr.bf16.mxu0 0
      %878 = vmatpush1.bf16.msra.mxu0 0
      %879 = vmatprep.subr.bf16.mxu0 0
      %880 = vmatpush1.bf16.msra.mxu0 0
      %881 = vmatprep.subr.bf16.mxu0 0
      %882 = vmatpush1.bf16.msra.mxu0 0
      %883 = vmatprep.subr.bf16.mxu0 0
      %884 = vmatpush1.bf16.msra.mxu0 0
      %885 = vmatprep.subr.bf16.mxu0 0
      %886 = vmatpush1.bf16.msra.mxu0 0
      %887 = vmatprep.subr.bf16.mxu0 0
      %888 = vmatpush1.bf16.msra.mxu0 0
      %889 = vmatprep.subr.bf16.mxu0 0
      %890 = vmatpush1.bf16.msra.mxu0 0
      %891 = vmatprep.subr.bf16.mxu0 0
      %892 = vmatpush1.bf16.msra.mxu0 0
      %893 = vmatprep.subr.bf16.mxu0 0
      %894 = vmatpush1.bf16.msra.mxu0 0
      %895 = vmatprep.subr.bf16.mxu0 0
      %896 = vmatpush1.bf16.msra.mxu0 0
      %897 = vmatprep.subr.bf16.mxu0 0
      %898 = vmatpush1.bf16.msra.mxu0 0
      %899 = vmatprep.subr.bf16.mxu0 0
      %900 = vmatpush1.bf16.msra.mxu0 0
      %901 = vmatprep.subr.bf16.mxu0 0
      %902 = vmatpush1.bf16.msra.mxu0 0
      %903 = vmatprep.subr.bf16.mxu0 0
      %904 = vmatpush1.bf16.msra.mxu0 0
      %905 = vmatprep.mubr.bf16.mxu0 0
      %906 = vmatmul.mubr.bf16.gmra.mrb[0].mxu0 %v428
      %v907 = vpop.f32.mrb[0].mxu0
      %v908 = vadd.f32 %v805, %v907
      %v909 = vpop.f32.mrb[0].mxu0
      %v910 = vpop.f32.mrb[0].mxu0
      %v911 = vadd.f32 %v808, %v910
      %v912 = vpop.f32.mrb[0].mxu0
      %913 = vmatprep.mubr.bf16.mxu0 0
      %914 = vmatmul.mubr.bf16.gmra.mrb[0].mxu0 %v431
      %v915 = vpop.f32.mrb[0].mxu0
      %v916 = vadd.f32 %v813, %v915
      %v917 = vpop.f32.mrb[0].mxu0
      %v918 = vpop.f32.mrb[0].mxu0
      %v919 = vadd.f32 %v816, %v918
      %v920 = vpop.f32.mrb[0].mxu0
      %921 = vmatprep.mubr.bf16.mxu0 0
      %922 = vmatmul.mubr.bf16.gmra.mrb[0].mxu0 %v434
      %v923 = vpop.f32.mrb[0].mxu0
      %v924 = vadd.f32 %v821, %v923
      %v925 = vpop.f32.mrb[0].mxu0
      %v926 = vpop.f32.mrb[0].mxu0
      %v927 = vadd.f32 %v824, %v926
      %v928 = vpop.f32.mrb[0].mxu0
      %929 = vmatprep.mubr.bf16.mxu0 0
      %930 = vmatmul.mubr.bf16.gmra.mrb[0].mxu0 %v437
      %v931 = vpop.f32.mrb[0].mxu0
      %v932 = vadd.f32 %v829, %v931
      %v933 = vpop.f32.mrb[0].mxu0
      %v934 = vpop.f32.mrb[0].mxu0
      %v935 = vadd.f32 %v832, %v934
      %v936 = vpop.f32.mrb[0].mxu0
      %937 = vmatprep.mubr.bf16.mxu0 0
      %938 = vmatmul.mubr.bf16.gmra.mrb[0].mxu0 %v440
      %v939 = vpop.f32.mrb[0].mxu0
      %v940 = vadd.f32 %v837, %v939
      %v941 = vpop.f32.mrb[0].mxu0
      %v942 = vpop.f32.mrb[0].mxu0
      %v943 = vadd.f32 %v840, %v942
      %v944 = vpop.f32.mrb[0].mxu0
      %945 = vmatprep.mubr.bf16.mxu0 0
      %946 = vmatmul.mubr.bf16.gmra.mrb[0].mxu0 %v443
      %v947 = vpop.f32.mrb[0].mxu0
      %v948 = vadd.f32 %v845, %v947
      %v949 = vpop.f32.mrb[0].mxu0
      %v950 = vpop.f32.mrb[0].mxu0
      %v951 = vadd.f32 %v848, %v950
      %v952 = vpop.f32.mrb[0].mxu0
      %953 = vmatprep.mubr.bf16.mxu0 0
      %954 = vmatmul.mubr.bf16.gmra.mrb[0].mxu0 %v446
      %v955 = vpop.f32.mrb[0].mxu0
      %v956 = vadd.f32 %v853, %v955
      %v957 = vpop.f32.mrb[0].mxu0
      %v958 = vpop.f32.mrb[0].mxu0
      %v959 = vadd.f32 %v856, %v958
      %v960 = vpop.f32.mrb[0].mxu0
      %961 = vmatprep.mubr.bf16.mxu0 0
      %962 = vmatmul.mubr.bf16.gmra.mrb[0].mxu0 %v449
      %v963 = vpop.f32.mrb[0].mxu0
      %v964 = vadd.f32 %v861, %v963
      %v965 = vpop.f32.mrb[0].mxu0
      %v966 = vpop.f32.mrb[0].mxu0
      %v967 = vadd.f32 %v864, %v966
      %v968 = vpop.f32.mrb[0].mxu0
      %969 = vdwg.mxu0
      %s970 = scalar_lea.vmem %s1, 40
      %v971 = vld [vmem:[%s970] sm:$0xf]
      %v972 = vld [vmem:[%s970 + $0x4] sm:$0xf]
      %v975 = vunpack.c.l.b16 %v971
      %v976 = vunpack.c.l.b16 %v972
      %v977 = vpack.c.b16 %v976, %v975
      %979 = vmatprep.subr.bf16.mxu0 0
      %980 = vmatpush1.bf16.msra.mxu0 %v977
      %981 = vmatprep.subr.bf16.mxu0 0
      %982 = vmatpush1.bf16.msra.mxu0 0
      %983 = vmatprep.subr.bf16.mxu0 0
      %984 = vmatpush1.bf16.msra.mxu0 0
      %985 = vmatprep.subr.bf16.mxu0 0
      %986 = vmatpush1.bf16.msra.mxu0 0
      %987 = vmatprep.subr.bf16.mxu0 0
      %988 = vmatpush1.bf16.msra.mxu0 0
      %989 = vmatprep.subr.bf16.mxu0 0
      %990 = vmatpush1.bf16.msra.mxu0 0
      %991 = vmatprep.subr.bf16.mxu0 0
      %992 = vmatpush1.bf16.msra.mxu0 0
      %993 = vmatprep.subr.bf16.mxu0 0
      %994 = vmatpush1.bf16.msra.mxu0 0
      %995 = vmatprep.subr.bf16.mxu0 0
      %996 = vmatpush1.bf16.msra.mxu0 0
      %997 = vmatprep.subr.bf16.mxu0 0
      %998 = vmatpush1.bf16.msra.mxu0 0
      %999 = vmatprep.subr.bf16.mxu0 0
      %1000 = vmatpush1.bf16.msra.mxu0 0
      %1001 = vmatprep.subr.bf16.mxu0 0
      %1002 = vmatpush1.bf16.msra.mxu0 0
      %1003 = vmatprep.subr.bf16.mxu0 0
      %1004 = vmatpush1.bf16.msra.mxu0 0
      %1005 = vmatprep.subr.bf16.mxu0 0
      %1006 = vmatpush1.bf16.msra.mxu0 0
      %1007 = vmatprep.subr.bf16.mxu0 0
      %1008 = vmatpush1.bf16.msra.mxu0 0
      %1009 = vmatprep.subr.bf16.mxu0 0
      %1010 = vmatpush1.bf16.msra.mxu0 0
      %1011 = vmatprep.mubr.bf16.mxu0 0
      %1012 = vmatmul.mubr.bf16.gmra.mrb[0].mxu0 %v574
      %v1013 = vpop.f32.mrb[0].mxu0
      %v1014 = vadd.f32 0.0, %v1013
      %v1015 = vpop.f32.mrb[0].mxu0
      %v1016 = vpop.f32.mrb[0].mxu0
      %v1017 = vadd.f32 0.0, %v1016
      %v1018 = vpop.f32.mrb[0].mxu0
      %1019 = vmatprep.mubr.bf16.mxu0 0
      %1020 = vmatmul.mubr.bf16.gmra.mrb[0].mxu0 %v577
      %v1021 = vpop.f32.mrb[0].mxu0
      %v1022 = vadd.f32 0.0, %v1021
      %v1023 = vpop.f32.mrb[0].mxu0
      %v1024 = vpop.f32.mrb[0].mxu0
      %v1025 = vadd.f32 0.0, %v1024
      %v1026 = vpop.f32.mrb[0].mxu0
      %1027 = vmatprep.mubr.bf16.mxu0 0
      %1028 = vmatmul.mubr.bf16.gmra.mrb[0].mxu0 %v580
      %v1029 = vpop.f32.mrb[0].mxu0
      %v1030 = vadd.f32 0.0, %v1029
      %v1031 = vpop.f32.mrb[0].mxu0
      %v1032 = vpop.f32.mrb[0].mxu0
      %v1033 = vadd.f32 0.0, %v1032
      %v1034 = vpop.f32.mrb[0].mxu0
      %1035 = vmatprep.mubr.bf16.mxu0 0
      %1036 = vmatmul.mubr.bf16.gmra.mrb[0].mxu0 %v583
      %v1037 = vpop.f32.mrb[0].mxu0
      %v1038 = vadd.f32 0.0, %v1037
      %v1039 = vpop.f32.mrb[0].mxu0
      %v1040 = vpop.f32.mrb[0].mxu0
      %v1041 = vadd.f32 0.0, %v1040
      %v1042 = vpop.f32.mrb[0].mxu0
      %1043 = vmatprep.mubr.bf16.mxu0 0
      %1044 = vmatmul.mubr.bf16.gmra.mrb[0].mxu0 %v586
      %v1045 = vpop.f32.mrb[0].mxu0
      %v1046 = vadd.f32 0.0, %v1045
      %v1047 = vpop.f32.mrb[0].mxu0
      %v1048 = vpop.f32.mrb[0].mxu0
      %v1049 = vadd.f32 0.0, %v1048
      %v1050 = vpop.f32.mrb[0].mxu0
      %1051 = vmatprep.mubr.bf16.mxu0 0
      %1052 = vmatmul.mubr.bf16.gmra.mrb[0].mxu0 %v589
      %v1053 = vpop.f32.mrb[0].mxu0
      %v1054 = vadd.f32 0.0, %v1053
      %v1055 = vpop.f32.mrb[0].mxu0
      %v1056 = vpop.f32.mrb[0].mxu0
      %v1057 = vadd.f32 0.0, %v1056
      %v1058 = vpop.f32.mrb[0].mxu0
      %1059 = vmatprep.mubr.bf16.mxu0 0
      %1060 = vmatmul.mubr.bf16.gmra.mrb[0].mxu0 %v592
      %v1061 = vpop.f32.mrb[0].mxu0
      %v1062 = vadd.f32 0.0, %v1061
      %v1063 = vpop.f32.mrb[0].mxu0
      %v1064 = vpop.f32.mrb[0].mxu0
      %v1065 = vadd.f32 0.0, %v1064
      %v1066 = vpop.f32.mrb[0].mxu0
      %1067 = vmatprep.mubr.bf16.mxu0 0
      %1068 = vmatmul.mubr.bf16.gmra.mrb[0].mxu0 %v595
      %v1069 = vpop.f32.mrb[0].mxu0
      %v1070 = vadd.f32 0.0, %v1069
      %v1071 = vpop.f32.mrb[0].mxu0
      %v1072 = vpop.f32.mrb[0].mxu0
      %v1073 = vadd.f32 0.0, %v1072
      %v1074 = vpop.f32.mrb[0].mxu0
      %1075 = vdwg.mxu0
      %v1076 = vadd.f32 %v908, %v1014
      %v1077 = vadd.f32 %v911, %v1017
      %v1078 = vadd.f32 %v916, %v1022
      %v1079 = vadd.f32 %v919, %v1025
      %v1080 = vadd.f32 %v924, %v1030
      %v1081 = vadd.f32 %v927, %v1033
      %v1082 = vadd.f32 %v932, %v1038
      %v1083 = vadd.f32 %v935, %v1041
      %v1084 = vadd.f32 %v940, %v1046
      %v1085 = vadd.f32 %v943, %v1049
      %v1086 = vadd.f32 %v948, %v1054
      %v1087 = vadd.f32 %v951, %v1057
      %v1088 = vadd.f32 %v956, %v1062
      %v1089 = vadd.f32 %v959, %v1065
      %v1090 = vadd.f32 %v964, %v1070
      %v1091 = vadd.f32 %v967, %v1073
      %v1092 = vmul.f32 %v1076, %v207
      %v1093 = vmul.f32 %v1077, %v207
      %v1094 = vmul.f32 %v1078, %v207
      %v1095 = vmul.f32 %v1079, %v207
      %v1096 = vmul.f32 %v1080, %v207
      %v1097 = vmul.f32 %v1081, %v207
      %v1098 = vmul.f32 %v1082, %v207
      %v1099 = vmul.f32 %v1083, %v207
      %v1100 = vmul.f32 %v1084, %v207
      %v1101 = vmul.f32 %v1085, %v207
      %v1102 = vmul.f32 %v1086, %v207
      %v1103 = vmul.f32 %v1087, %v207
      %v1104 = vmul.f32 %v1088, %v207
      %v1105 = vmul.f32 %v1089, %v207
      %v1106 = vmul.f32 %v1090, %v207
      %v1107 = vmul.f32 %v1091, %v207
      %v1108 = vadd.f32 %v1092, %v214
      %v1109 = vadd.f32 %v1093, %v214
      %v1110 = vadd.f32 %v1094, %v214
      %v1111 = vadd.f32 %v1095, %v214
      %v1112 = vadd.f32 %v1096, %v214
      %v1113 = vadd.f32 %v1097, %v214
      %v1114 = vadd.f32 %v1098, %v214
      %v1115 = vadd.f32 %v1099, %v214
      %v1116 = vadd.f32 %v1100, %v214
      %v1117 = vadd.f32 %v1101, %v214
      %v1118 = vadd.f32 %v1102, %v214
      %v1119 = vadd.f32 %v1103, %v214
      %v1120 = vadd.f32 %v1104, %v214
      %v1121 = vadd.f32 %v1105, %v214
      %v1122 = vadd.f32 %v1106, %v214
      %v1123 = vadd.f32 %v1107, %v214
      %v1124 = vmax.f32 %v1108, 0.0
      %v1125 = vmax.f32 %v1109, 0.0
      %v1126 = vmax.f32 %v1110, 0.0
      %v1127 = vmax.f32 %v1111, 0.0
      %v1128 = vmax.f32 %v1112, 0.0
      %v1129 = vmax.f32 %v1113, 0.0
      %v1130 = vmax.f32 %v1114, 0.0
      %v1131 = vmax.f32 %v1115, 0.0
      %v1132 = vmax.f32 %v1116, 0.0
      %v1133 = vmax.f32 %v1117, 0.0
      %v1134 = vmax.f32 %v1118, 0.0
      %v1135 = vmax.f32 %v1119, 0.0
      %v1136 = vmax.f32 %v1120, 0.0
      %v1137 = vmax.f32 %v1121, 0.0
      %v1138 = vmax.f32 %v1122, 0.0
      %v1139 = vmax.f32 %v1123, 0.0
      %v1140 = vmax.f32 %v742, %v1124
      %v1141 = vmax.f32 %v743, %v1125
      %v1142 = vmax.f32 %v744, %v1126
      %v1143 = vmax.f32 %v745, %v1127
      %v1144 = vmax.f32 %v746, %v1128
      %v1145 = vmax.f32 %v747, %v1129
      %v1146 = vmax.f32 %v748, %v1130
      %v1147 = vmax.f32 %v749, %v1131
      %v1148 = vmax.f32 %v750, %v1132
      %v1149 = vmax.f32 %v751, %v1133
      %v1150 = vmax.f32 %v752, %v1134
      %v1151 = vmax.f32 %v753, %v1135
      %v1152 = vmax.f32 %v754, %v1136
      %v1153 = vmax.f32 %v755, %v1137
      %v1154 = vmax.f32 %v756, %v1138
      %v1155 = vmax.f32 %v757, %v1139
      %1156 = vmatprep.subr.bf16.mxu0 0
      %1157 = vmatpush1.bf16.msra.mxu0 %v297
      %1158 = vmatprep.subr.bf16.mxu0 0
      %1159 = vmatpush1.bf16.msra.mxu0 0
      %1160 = vmatprep.subr.bf16.mxu0 0
      %1161 = vmatpush1.bf16.msra.mxu0 0
      %1162 = vmatprep.subr.bf16.mxu0 0
      %1163 = vmatpush1.bf16.msra.mxu0 0
      %1164 = vmatprep.subr.bf16.mxu0 0
      %1165 = vmatpush1.bf16.msra.mxu0 0
      %1166 = vmatprep.subr.bf16.mxu0 0
      %1167 = vmatpush1.bf16.msra.mxu0 0
      %1168 = vmatprep.subr.bf16.mxu0 0
      %1169 = vmatpush1.bf16.msra.mxu0 0
      %1170 = vmatprep.subr.bf16.mxu0 0
      %1171 = vmatpush1.bf16.msra.mxu0 0
      %1172 = vmatprep.subr.bf16.mxu0 0
      %1173 = vmatpush1.bf16.msra.mxu0 0
      %1174 = vmatprep.subr.bf16.mxu0 0
      %1175 = vmatpush1.bf16.msra.mxu0 0
      %1176 = vmatprep.subr.bf16.mxu0 0
      %1177 = vmatpush1.bf16.msra.mxu0 0
      %1178 = vmatprep.subr.bf16.mxu0 0
      %1179 = vmatpush1.bf16.msra.mxu0 0
      %1180 = vmatprep.subr.bf16.mxu0 0
      %1181 = vmatpush1.bf16.msra.mxu0 0
      %1182 = vmatprep.subr.bf16.mxu0 0
      %1183 = vmatpush1.bf16.msra.mxu0 0
      %1184 = vmatprep.subr.bf16.mxu0 0
      %1185 = vmatpush1.bf16.msra.mxu0 0
      %1186 = vmatprep.subr.bf16.mxu0 0
      %1187 = vmatpush1.bf16.msra.mxu0 0
      %1188 = vmatprep.mubr.bf16.mxu0 0
      %1189 = vmatmul.mubr.bf16.gmra.mrb[0].mxu0 %v574
      %v1190 = vpop.f32.mrb[0].mxu0
      %v1191 = vadd.f32 0.0, %v1190
      %v1192 = vpop.f32.mrb[0].mxu0
      %v1193 = vpop.f32.mrb[0].mxu0
      %v1194 = vadd.f32 0.0, %v1193
      %v1195 = vpop.f32.mrb[0].mxu0
      %1196 = vmatprep.mubr.bf16.mxu0 0
      %1197 = vmatmul.mubr.bf16.gmra.mrb[0].mxu0 %v577
      %v1198 = vpop.f32.mrb[0].mxu0
      %v1199 = vadd.f32 0.0, %v1198
      %v1200 = vpop.f32.mrb[0].mxu0
      %v1201 = vpop.f32.mrb[0].mxu0
      %v1202 = vadd.f32 0.0, %v1201
      %v1203 = vpop.f32.mrb[0].mxu0
      %1204 = vmatprep.mubr.bf16.mxu0 0
      %1205 = vmatmul.mubr.bf16.gmra.mrb[0].mxu0 %v580
      %v1206 = vpop.f32.mrb[0].mxu0
      %v1207 = vadd.f32 0.0, %v1206
      %v1208 = vpop.f32.mrb[0].mxu0
      %v1209 = vpop.f32.mrb[0].mxu0
      %v1210 = vadd.f32 0.0, %v1209
      %v1211 = vpop.f32.mrb[0].mxu0
      %1212 = vmatprep.mubr.bf16.mxu0 0
      %1213 = vmatmul.mubr.bf16.gmra.mrb[0].mxu0 %v583
      %v1214 = vpop.f32.mrb[0].mxu0
      %v1215 = vadd.f32 0.0, %v1214
      %v1216 = vpop.f32.mrb[0].mxu0
      %v1217 = vpop.f32.mrb[0].mxu0
      %v1218 = vadd.f32 0.0, %v1217
      %v1219 = vpop.f32.mrb[0].mxu0
      %1220 = vmatprep.mubr.bf16.mxu0 0
      %1221 = vmatmul.mubr.bf16.gmra.mrb[0].mxu0 %v586
      %v1222 = vpop.f32.mrb[0].mxu0
      %v1223 = vadd.f32 0.0, %v1222
      %v1224 = vpop.f32.mrb[0].mxu0
      %v1225 = vpop.f32.mrb[0].mxu0
      %v1226 = vadd.f32 0.0, %v1225
      %v1227 = vpop.f32.mrb[0].mxu0
      %1228 = vmatprep.mubr.bf16.mxu0 0
      %1229 = vmatmul.mubr.bf16.gmra.mrb[0].mxu0 %v589
      %v1230 = vpop.f32.mrb[0].mxu0
      %v1231 = vadd.f32 0.0, %v1230
      %v1232 = vpop.f32.mrb[0].mxu0
      %v1233 = vpop.f32.mrb[0].mxu0
      %v1234 = vadd.f32 0.0, %v1233
      %v1235 = vpop.f32.mrb[0].mxu0
      %1236 = vmatprep.mubr.bf16.mxu0 0
      %1237 = vmatmul.mubr.bf16.gmra.mrb[0].mxu0 %v592
      %v1238 = vpop.f32.mrb[0].mxu0
      %v1239 = vadd.f32 0.0, %v1238
      %v1240 = vpop.f32.mrb[0].mxu0
      %v1241 = vpop.f32.mrb[0].mxu0
      %v1242 = vadd.f32 0.0, %v1241
      %v1243 = vpop.f32.mrb[0].mxu0
      %1244 = vmatprep.mubr.bf16.mxu0 0
      %1245 = vmatmul.mubr.bf16.gmra.mrb[0].mxu0 %v595
      %v1246 = vpop.f32.mrb[0].mxu0
      %v1247 = vadd.f32 0.0, %v1246
      %v1248 = vpop.f32.mrb[0].mxu0
      %v1249 = vpop.f32.mrb[0].mxu0
      %v1250 = vadd.f32 0.0, %v1249
      %v1251 = vpop.f32.mrb[0].mxu0
      %1252 = vdwg.mxu0
      %1253 = vmatprep.subr.bf16.mxu0 0
      %1254 = vmatpush1.bf16.msra.mxu0 %v425
      %1255 = vmatprep.subr.bf16.mxu0 0
      %1256 = vmatpush1.bf16.msra.mxu0 0
      %1257 = vmatprep.subr.bf16.mxu0 0
      %1258 = vmatpush1.bf16.msra.mxu0 0
      %1259 = vmatprep.subr.bf16.mxu0 0
      %1260 = vmatpush1.bf16.msra.mxu0 0
      %1261 = vmatprep.subr.bf16.mxu0 0
      %1262 = vmatpush1.bf16.msra.mxu0 0
      %1263 = vmatprep.subr.bf16.mxu0 0
      %1264 = vmatpush1.bf16.msra.mxu0 0
      %1265 = vmatprep.subr.bf16.mxu0 0
      %1266 = vmatpush1.bf16.msra.mxu0 0
      %1267 = vmatprep.subr.bf16.mxu0 0
      %1268 = vmatpush1.bf16.msra.mxu0 0
      %1269 = vmatprep.subr.bf16.mxu0 0
      %1270 = vmatpush1.bf16.msra.mxu0 0
      %1271 = vmatprep.subr.bf16.mxu0 0
      %1272 = vmatpush1.bf16.msra.mxu0 0
      %1273 = vmatprep.subr.bf16.mxu0 0
      %1274 = vmatpush1.bf16.msra.mxu0 0
      %1275 = vmatprep.subr.bf16.mxu0 0
      %1276 = vmatpush1.bf16.msra.mxu0 0
      %1277 = vmatprep.subr.bf16.mxu0 0
      %1278 = vmatpush1.bf16.msra.mxu0 0
      %1279 = vmatprep.subr.bf16.mxu0 0
      %1280 = vmatpush1.bf16.msra.mxu0 0
      %1281 = vmatprep.subr.bf16.mxu0 0
      %1282 = vmatpush1.bf16.msra.mxu0 0
      %1283 = vmatprep.subr.bf16.mxu0 0
      %1284 = vmatpush1.bf16.msra.mxu0 0
      %1285 = vmatprep.mubr.bf16.mxu0 0
      %1286 = vmatmul.mubr.bf16.gmra.mrb[0].mxu0 %v301
      %v1287 = vpop.f32.mrb[0].mxu0
      %v1288 = vadd.f32 %v1191, %v1287
      %v1289 = vpop.f32.mrb[0].mxu0
      %v1290 = vpop.f32.mrb[0].mxu0
      %v1291 = vadd.f32 %v1194, %v1290
      %v1292 = vpop.f32.mrb[0].mxu0
      %1293 = vmatprep.mubr.bf16.mxu0 0
      %1294 = vmatmul.mubr.bf16.gmra.mrb[0].mxu0 %v304
      %v1295 = vpop.f32.mrb[0].mxu0
      %v1296 = vadd.f32 %v1199, %v1295
      %v1297 = vpop.f32.mrb[0].mxu0
      %v1298 = vpop.f32.mrb[0].mxu0
      %v1299 = vadd.f32 %v1202, %v1298
      %v1300 = vpop.f32.mrb[0].mxu0
      %1301 = vmatprep.mubr.bf16.mxu0 0
      %1302 = vmatmul.mubr.bf16.gmra.mrb[0].mxu0 %v307
      %v1303 = vpop.f32.mrb[0].mxu0
      %v1304 = vadd.f32 %v1207, %v1303
      %v1305 = vpop.f32.mrb[0].mxu0
      %v1306 = vpop.f32.mrb[0].mxu0
      %v1307 = vadd.f32 %v1210, %v1306
      %v1308 = vpop.f32.mrb[0].mxu0
      %1309 = vmatprep.mubr.bf16.mxu0 0
      %1310 = vmatmul.mubr.bf16.gmra.mrb[0].mxu0 %v310
      %v1311 = vpop.f32.mrb[0].mxu0
      %v1312 = vadd.f32 %v1215, %v1311
      %v1313 = vpop.f32.mrb[0].mxu0
      %v1314 = vpop.f32.mrb[0].mxu0
      %v1315 = vadd.f32 %v1218, %v1314
      %v1316 = vpop.f32.mrb[0].mxu0
      %1317 = vmatprep.mubr.bf16.mxu0 0
      %1318 = vmatmul.mubr.bf16.gmra.mrb[0].mxu0 %v313
      %v1319 = vpop.f32.mrb[0].mxu0
      %v1320 = vadd.f32 %v1223, %v1319
      %v1321 = vpop.f32.mrb[0].mxu0
      %v1322 = vpop.f32.mrb[0].mxu0
      %v1323 = vadd.f32 %v1226, %v1322
      %v1324 = vpop.f32.mrb[0].mxu0
      %1325 = vmatprep.mubr.bf16.mxu0 0
      %1326 = vmatmul.mubr.bf16.gmra.mrb[0].mxu0 %v316
      %v1327 = vpop.f32.mrb[0].mxu0
      %v1328 = vadd.f32 %v1231, %v1327
      %v1329 = vpop.f32.mrb[0].mxu0
      %v1330 = vpop.f32.mrb[0].mxu0
      %v1331 = vadd.f32 %v1234, %v1330
      %v1332 = vpop.f32.mrb[0].mxu0
      %1333 = vmatprep.mubr.bf16.mxu0 0
      %1334 = vmatmul.mubr.bf16.gmra.mrb[0].mxu0 %v319
      %v1335 = vpop.f32.mrb[0].mxu0
      %v1336 = vadd.f32 %v1239, %v1335
      %v1337 = vpop.f32.mrb[0].mxu0
      %v1338 = vpop.f32.mrb[0].mxu0
      %v1339 = vadd.f32 %v1242, %v1338
      %v1340 = vpop.f32.mrb[0].mxu0
      %1341 = vmatprep.mubr.bf16.mxu0 0
      %1342 = vmatmul.mubr.bf16.gmra.mrb[0].mxu0 %v322
      %v1343 = vpop.f32.mrb[0].mxu0
      %v1344 = vadd.f32 %v1247, %v1343
      %v1345 = vpop.f32.mrb[0].mxu0
      %v1346 = vpop.f32.mrb[0].mxu0
      %v1347 = vadd.f32 %v1250, %v1346
      %v1348 = vpop.f32.mrb[0].mxu0
      %1349 = vdwg.mxu0
      %1350 = vrot.lane.b32.xlu0 %v269, 80
      %v1351 = vpop.permute.xlu0 %1350
      %1352 = vrot.lane.b32.xlu0 %v270, 80
      %v1353 = vpop.permute.xlu0 %1352
      %1354 = vrot.lane.b32.xlu0 %v271, 80
      %v1355 = vpop.permute.xlu0 %1354
      %1356 = vrot.lane.b32.xlu0 %v272, 80
      %v1357 = vpop.permute.xlu0 %1356
      %1358 = vrot.lane.b32.xlu0 %v273, 80
      %v1359 = vpop.permute.xlu0 %1358
      %1360 = vrot.lane.b32.xlu0 %v274, 80
      %v1361 = vpop.permute.xlu0 %1360
      %1362 = vrot.lane.b32.xlu0 %v275, 80
      %v1363 = vpop.permute.xlu0 %1362
      %1364 = vrot.lane.b32.xlu0 %v276, 80
      %v1365 = vpop.permute.xlu0 %1364
      %v1367 = vsel %vm299, %v1351, 0
      %v1370 = vsel %vm299, %v1353, 0
      %v1373 = vsel %vm299, %v1355, 0
      %v1376 = vsel %vm299, %v1357, 0
      %v1379 = vsel %vm299, %v1359, 0
      %v1382 = vsel %vm299, %v1361, 0
      %v1385 = vsel %vm299, %v1363, 0
      %v1388 = vsel %vm299, %v1365, 0
      %1390 = vmatprep.subr.bf16.mxu0 0
      %1391 = vmatpush1.bf16.msra.mxu0 %v571
      %1392 = vmatprep.subr.bf16.mxu0 0
      %1393 = vmatpush1.bf16.msra.mxu0 0
      %1394 = vmatprep.subr.bf16.mxu0 0
      %1395 = vmatpush1.bf16.msra.mxu0 0
      %1396 = vmatprep.subr.bf16.mxu0 0
      %1397 = vmatpush1.bf16.msra.mxu0 0
      %1398 = vmatprep.subr.bf16.mxu0 0
      %1399 = vmatpush1.bf16.msra.mxu0 0
      %1400 = vmatprep.subr.bf16.mxu0 0
      %1401 = vmatpush1.bf16.msra.mxu0 0
      %1402 = vmatprep.subr.bf16.mxu0 0
      %1403 = vmatpush1.bf16.msra.mxu0 0
      %1404 = vmatprep.subr.bf16.mxu0 0
      %1405 = vmatpush1.bf16.msra.mxu0 0
      %1406 = vmatprep.subr.bf16.mxu0 0
      %1407 = vmatpush1.bf16.msra.mxu0 0
      %1408 = vmatprep.subr.bf16.mxu0 0
      %1409 = vmatpush1.bf16.msra.mxu0 0
      %1410 = vmatprep.subr.bf16.mxu0 0
      %1411 = vmatpush1.bf16.msra.mxu0 0
      %1412 = vmatprep.subr.bf16.mxu0 0
      %1413 = vmatpush1.bf16.msra.mxu0 0
      %1414 = vmatprep.subr.bf16.mxu0 0
      %1415 = vmatpush1.bf16.msra.mxu0 0
      %1416 = vmatprep.subr.bf16.mxu0 0
      %1417 = vmatpush1.bf16.msra.mxu0 0
      %1418 = vmatprep.subr.bf16.mxu0 0
      %1419 = vmatpush1.bf16.msra.mxu0 0
      %1420 = vmatprep.subr.bf16.mxu0 0
      %1421 = vmatpush1.bf16.msra.mxu0 0
      %1422 = vmatprep.mubr.bf16.mxu0 0
      %1423 = vmatmul.mubr.bf16.gmra.mrb[0].mxu0 %v1367
      %v1424 = vpop.f32.mrb[0].mxu0
      %v1425 = vadd.f32 0.0, %v1424
      %v1426 = vpop.f32.mrb[0].mxu0
      %v1427 = vpop.f32.mrb[0].mxu0
      %v1428 = vadd.f32 0.0, %v1427
      %v1429 = vpop.f32.mrb[0].mxu0
      %1430 = vmatprep.mubr.bf16.mxu0 0
      %1431 = vmatmul.mubr.bf16.gmra.mrb[0].mxu0 %v1370
      %v1432 = vpop.f32.mrb[0].mxu0
      %v1433 = vadd.f32 0.0, %v1432
      %v1434 = vpop.f32.mrb[0].mxu0
      %v1435 = vpop.f32.mrb[0].mxu0
      %v1436 = vadd.f32 0.0, %v1435
      %v1437 = vpop.f32.mrb[0].mxu0
      %1438 = vmatprep.mubr.bf16.mxu0 0
      %1439 = vmatmul.mubr.bf16.gmra.mrb[0].mxu0 %v1373
      %v1440 = vpop.f32.mrb[0].mxu0
      %v1441 = vadd.f32 0.0, %v1440
      %v1442 = vpop.f32.mrb[0].mxu0
      %v1443 = vpop.f32.mrb[0].mxu0
      %v1444 = vadd.f32 0.0, %v1443
      %v1445 = vpop.f32.mrb[0].mxu0
      %1446 = vmatprep.mubr.bf16.mxu0 0
      %1447 = vmatmul.mubr.bf16.gmra.mrb[0].mxu0 %v1376
      %v1448 = vpop.f32.mrb[0].mxu0
      %v1449 = vadd.f32 0.0, %v1448
      %v1450 = vpop.f32.mrb[0].mxu0
      %v1451 = vpop.f32.mrb[0].mxu0
      %v1452 = vadd.f32 0.0, %v1451
      %v1453 = vpop.f32.mrb[0].mxu0
      %1454 = vmatprep.mubr.bf16.mxu0 0
      %1455 = vmatmul.mubr.bf16.gmra.mrb[0].mxu0 %v1379
      %v1456 = vpop.f32.mrb[0].mxu0
      %v1457 = vadd.f32 0.0, %v1456
      %v1458 = vpop.f32.mrb[0].mxu0
      %v1459 = vpop.f32.mrb[0].mxu0
      %v1460 = vadd.f32 0.0, %v1459
      %v1461 = vpop.f32.mrb[0].mxu0
      %1462 = vmatprep.mubr.bf16.mxu0 0
      %1463 = vmatmul.mubr.bf16.gmra.mrb[0].mxu0 %v1382
      %v1464 = vpop.f32.mrb[0].mxu0
      %v1465 = vadd.f32 0.0, %v1464
      %v1466 = vpop.f32.mrb[0].mxu0
      %v1467 = vpop.f32.mrb[0].mxu0
      %v1468 = vadd.f32 0.0, %v1467
      %v1469 = vpop.f32.mrb[0].mxu0
      %1470 = vmatprep.mubr.bf16.mxu0 0
      %1471 = vmatmul.mubr.bf16.gmra.mrb[0].mxu0 %v1385
      %v1472 = vpop.f32.mrb[0].mxu0
      %v1473 = vadd.f32 0.0, %v1472
      %v1474 = vpop.f32.mrb[0].mxu0
      %v1475 = vpop.f32.mrb[0].mxu0
      %v1476 = vadd.f32 0.0, %v1475
      %v1477 = vpop.f32.mrb[0].mxu0
      %1478 = vmatprep.mubr.bf16.mxu0 0
      %1479 = vmatmul.mubr.bf16.gmra.mrb[0].mxu0 %v1388
      %v1480 = vpop.f32.mrb[0].mxu0
      %v1481 = vadd.f32 0.0, %v1480
      %v1482 = vpop.f32.mrb[0].mxu0
      %v1483 = vpop.f32.mrb[0].mxu0
      %v1484 = vadd.f32 0.0, %v1483
      %v1485 = vpop.f32.mrb[0].mxu0
      %1486 = vdwg.mxu0
      %v1487 = vadd.f32 %v1288, %v1425
      %v1488 = vadd.f32 %v1291, %v1428
      %v1489 = vadd.f32 %v1296, %v1433
      %v1490 = vadd.f32 %v1299, %v1436
      %v1491 = vadd.f32 %v1304, %v1441
      %v1492 = vadd.f32 %v1307, %v1444
      %v1493 = vadd.f32 %v1312, %v1449
      %v1494 = vadd.f32 %v1315, %v1452
      %v1495 = vadd.f32 %v1320, %v1457
      %v1496 = vadd.f32 %v1323, %v1460
      %v1497 = vadd.f32 %v1328, %v1465
      %v1498 = vadd.f32 %v1331, %v1468
      %v1499 = vadd.f32 %v1336, %v1473
      %v1500 = vadd.f32 %v1339, %v1476
      %v1501 = vadd.f32 %v1344, %v1481
      %v1502 = vadd.f32 %v1347, %v1484
      %v1503 = vmul.f32 %v1487, %v207
      %v1504 = vmul.f32 %v1488, %v207
      %v1505 = vmul.f32 %v1489, %v207
      %v1506 = vmul.f32 %v1490, %v207
      %v1507 = vmul.f32 %v1491, %v207
      %v1508 = vmul.f32 %v1492, %v207
      %v1509 = vmul.f32 %v1493, %v207
      %v1510 = vmul.f32 %v1494, %v207
      %v1511 = vmul.f32 %v1495, %v207
      %v1512 = vmul.f32 %v1496, %v207
      %v1513 = vmul.f32 %v1497, %v207
      %v1514 = vmul.f32 %v1498, %v207
      %v1515 = vmul.f32 %v1499, %v207
      %v1516 = vmul.f32 %v1500, %v207
      %v1517 = vmul.f32 %v1501, %v207
      %v1518 = vmul.f32 %v1502, %v207
      %v1519 = vadd.f32 %v1503, %v214
      %v1520 = vadd.f32 %v1504, %v214
      %v1521 = vadd.f32 %v1505, %v214
      %v1522 = vadd.f32 %v1506, %v214
      %v1523 = vadd.f32 %v1507, %v214
      %v1524 = vadd.f32 %v1508, %v214
      %v1525 = vadd.f32 %v1509, %v214
      %v1526 = vadd.f32 %v1510, %v214
      %v1527 = vadd.f32 %v1511, %v214
      %v1528 = vadd.f32 %v1512, %v214
      %v1529 = vadd.f32 %v1513, %v214
      %v1530 = vadd.f32 %v1514, %v214
      %v1531 = vadd.f32 %v1515, %v214
      %v1532 = vadd.f32 %v1516, %v214
      %v1533 = vadd.f32 %v1517, %v214
      %v1534 = vadd.f32 %v1518, %v214
      %v1535 = vmax.f32 %v1519, 0.0
      %v1536 = vmax.f32 %v1520, 0.0
      %v1537 = vmax.f32 %v1521, 0.0
      %v1538 = vmax.f32 %v1522, 0.0
      %v1539 = vmax.f32 %v1523, 0.0
      %v1540 = vmax.f32 %v1524, 0.0
      %v1541 = vmax.f32 %v1525, 0.0
      %v1542 = vmax.f32 %v1526, 0.0
      %v1543 = vmax.f32 %v1527, 0.0
      %v1544 = vmax.f32 %v1528, 0.0
      %v1545 = vmax.f32 %v1529, 0.0
      %v1546 = vmax.f32 %v1530, 0.0
      %v1547 = vmax.f32 %v1531, 0.0
      %v1548 = vmax.f32 %v1532, 0.0
      %v1549 = vmax.f32 %v1533, 0.0
      %v1550 = vmax.f32 %v1534, 0.0
      %v1551 = vmax.f32 %v1140, %v1535
      %v1552 = vmax.f32 %v1141, %v1536
      %v1553 = vmax.f32 %v1142, %v1537
      %v1554 = vmax.f32 %v1143, %v1538
      %v1555 = vmax.f32 %v1144, %v1539
      %v1556 = vmax.f32 %v1145, %v1540
      %v1557 = vmax.f32 %v1146, %v1541
      %v1558 = vmax.f32 %v1147, %v1542
      %v1559 = vmax.f32 %v1148, %v1543
      %v1560 = vmax.f32 %v1149, %v1544
      %v1561 = vmax.f32 %v1150, %v1545
      %v1562 = vmax.f32 %v1151, %v1546
      %v1563 = vmax.f32 %v1152, %v1547
      %v1564 = vmax.f32 %v1153, %v1548
      %v1565 = vmax.f32 %v1154, %v1549
      %v1566 = vmax.f32 %v1155, %v1550
      %1567 = vmatprep.subr.bf16.mxu0 0
      %1568 = vmatpush1.bf16.msra.mxu0 %v768
      %1569 = vmatprep.subr.bf16.mxu0 0
      %1570 = vmatpush1.bf16.msra.mxu0 0
      %1571 = vmatprep.subr.bf16.mxu0 0
      %1572 = vmatpush1.bf16.msra.mxu0 0
      %1573 = vmatprep.subr.bf16.mxu0 0
      %1574 = vmatpush1.bf16.msra.mxu0 0
      %1575 = vmatprep.subr.bf16.mxu0 0
      %1576 = vmatpush1.bf16.msra.mxu0 0
      %1577 = vmatprep.subr.bf16.mxu0 0
      %1578 = vmatpush1.bf16.msra.mxu0 0
      %1579 = vmatprep.subr.bf16.mxu0 0
      %1580 = vmatpush1.bf16.msra.mxu0 0
      %1581 = vmatprep.subr.bf16.mxu0 0
      %1582 = vmatpush1.bf16.msra.mxu0 0
      %1583 = vmatprep.subr.bf16.mxu0 0
      %1584 = vmatpush1.bf16.msra.mxu0 0
      %1585 = vmatprep.subr.bf16.mxu0 0
      %1586 = vmatpush1.bf16.msra.mxu0 0
      %1587 = vmatprep.subr.bf16.mxu0 0
      %1588 = vmatpush1.bf16.msra.mxu0 0
      %1589 = vmatprep.subr.bf16.mxu0 0
      %1590 = vmatpush1.bf16.msra.mxu0 0
      %1591 = vmatprep.subr.bf16.mxu0 0
      %1592 = vmatpush1.bf16.msra.mxu0 0
      %1593 = vmatprep.subr.bf16.mxu0 0
      %1594 = vmatpush1.bf16.msra.mxu0 0
      %1595 = vmatprep.subr.bf16.mxu0 0
      %1596 = vmatpush1.bf16.msra.mxu0 0
      %1597 = vmatprep.subr.bf16.mxu0 0
      %1598 = vmatpush1.bf16.msra.mxu0 0
      %1599 = vmatprep.mubr.bf16.mxu0 0
      %1600 = vmatmul.mubr.bf16.gmra.mrb[0].mxu0 %v574
      %v1601 = vpop.f32.mrb[0].mxu0
      %v1602 = vadd.f32 0.0, %v1601
      %v1603 = vpop.f32.mrb[0].mxu0
      %v1604 = vpop.f32.mrb[0].mxu0
      %v1605 = vadd.f32 0.0, %v1604
      %v1606 = vpop.f32.mrb[0].mxu0
      %1607 = vmatprep.mubr.bf16.mxu0 0
      %1608 = vmatmul.mubr.bf16.gmra.mrb[0].mxu0 %v577
      %v1609 = vpop.f32.mrb[0].mxu0
      %v1610 = vadd.f32 0.0, %v1609
      %v1611 = vpop.f32.mrb[0].mxu0
      %v1612 = vpop.f32.mrb[0].mxu0
      %v1613 = vadd.f32 0.0, %v1612
      %v1614 = vpop.f32.mrb[0].mxu0
      %1615 = vmatprep.mubr.bf16.mxu0 0
      %1616 = vmatmul.mubr.bf16.gmra.mrb[0].mxu0 %v580
      %v1617 = vpop.f32.mrb[0].mxu0
      %v1618 = vadd.f32 0.0, %v1617
      %v1619 = vpop.f32.mrb[0].mxu0
      %v1620 = vpop.f32.mrb[0].mxu0
      %v1621 = vadd.f32 0.0, %v1620
      %v1622 = vpop.f32.mrb[0].mxu0
      %1623 = vmatprep.mubr.bf16.mxu0 0
      %1624 = vmatmul.mubr.bf16.gmra.mrb[0].mxu0 %v583
      %v1625 = vpop.f32.mrb[0].mxu0
      %v1626 = vadd.f32 0.0, %v1625
      %v1627 = vpop.f32.mrb[0].mxu0
      %v1628 = vpop.f32.mrb[0].mxu0
      %v1629 = vadd.f32 0.0, %v1628
      %v1630 = vpop.f32.mrb[0].mxu0
      %1631 = vmatprep.mubr.bf16.mxu0 0
      %1632 = vmatmul.mubr.bf16.gmra.mrb[0].mxu0 %v586
      %v1633 = vpop.f32.mrb[0].mxu0
      %v1634 = vadd.f32 0.0, %v1633
      %v1635 = vpop.f32.mrb[0].mxu0
      %v1636 = vpop.f32.mrb[0].mxu0
      %v1637 = vadd.f32 0.0, %v1636
      %v1638 = vpop.f32.mrb[0].mxu0
      %1639 = vmatprep.mubr.bf16.mxu0 0
      %1640 = vmatmul.mubr.bf16.gmra.mrb[0].mxu0 %v589
      %v1641 = vpop.f32.mrb[0].mxu0
      %v1642 = vadd.f32 0.0, %v1641
      %v1643 = vpop.f32.mrb[0].mxu0
      %v1644 = vpop.f32.mrb[0].mxu0
      %v1645 = vadd.f32 0.0, %v1644
      %v1646 = vpop.f32.mrb[0].mxu0
      %1647 = vmatprep.mubr.bf16.mxu0 0
      %1648 = vmatmul.mubr.bf16.gmra.mrb[0].mxu0 %v592
      %v1649 = vpop.f32.mrb[0].mxu0
      %v1650 = vadd.f32 0.0, %v1649
      %v1651 = vpop.f32.mrb[0].mxu0
      %v1652 = vpop.f32.mrb[0].mxu0
      %v1653 = vadd.f32 0.0, %v1652
      %v1654 = vpop.f32.mrb[0].mxu0
      %1655 = vmatprep.mubr.bf16.mxu0 0
      %1656 = vmatmul.mubr.bf16.gmra.mrb[0].mxu0 %v595
      %v1657 = vpop.f32.mrb[0].mxu0
      %v1658 = vadd.f32 0.0, %v1657
      %v1659 = vpop.f32.mrb[0].mxu0
      %v1660 = vpop.f32.mrb[0].mxu0
      %v1661 = vadd.f32 0.0, %v1660
      %v1662 = vpop.f32.mrb[0].mxu0
      %1663 = vdwg.mxu0
      %1664 = vmatprep.subr.bf16.mxu0 0
      %1665 = vmatpush1.bf16.msra.mxu0 %v871
      %1666 = vmatprep.subr.bf16.mxu0 0
      %1667 = vmatpush1.bf16.msra.mxu0 0
      %1668 = vmatprep.subr.bf16.mxu0 0
      %1669 = vmatpush1.bf16.msra.mxu0 0
      %1670 = vmatprep.subr.bf16.mxu0 0
      %1671 = vmatpush1.bf16.msra.mxu0 0
      %1672 = vmatprep.subr.bf16.mxu0 0
      %1673 = vmatpush1.bf16.msra.mxu0 0
      %1674 = vmatprep.subr.bf16.mxu0 0
      %1675 = vmatpush1.bf16.msra.mxu0 0
      %1676 = vmatprep.subr.bf16.mxu0 0
      %1677 = vmatpush1.bf16.msra.mxu0 0
      %1678 = vmatprep.subr.bf16.mxu0 0
      %1679 = vmatpush1.bf16.msra.mxu0 0
      %1680 = vmatprep.subr.bf16.mxu0 0
      %1681 = vmatpush1.bf16.msra.mxu0 0
      %1682 = vmatprep.subr.bf16.mxu0 0
      %1683 = vmatpush1.bf16.msra.mxu0 0
      %1684 = vmatprep.subr.bf16.mxu0 0
      %1685 = vmatpush1.bf16.msra.mxu0 0
      %1686 = vmatprep.subr.bf16.mxu0 0
      %1687 = vmatpush1.bf16.msra.mxu0 0
      %1688 = vmatprep.subr.bf16.mxu0 0
      %1689 = vmatpush1.bf16.msra.mxu0 0
      %1690 = vmatprep.subr.bf16.mxu0 0
      %1691 = vmatpush1.bf16.msra.mxu0 0
      %1692 = vmatprep.subr.bf16.mxu0 0
      %1693 = vmatpush1.bf16.msra.mxu0 0
      %1694 = vmatprep.subr.bf16.mxu0 0
      %1695 = vmatpush1.bf16.msra.mxu0 0
      %1696 = vmatprep.mubr.bf16.mxu0 0
      %1697 = vmatmul.mubr.bf16.gmra.mrb[0].mxu0 %v301
      %v1698 = vpop.f32.mrb[0].mxu0
      %v1699 = vadd.f32 %v1602, %v1698
      %v1700 = vpop.f32.mrb[0].mxu0
      %v1701 = vpop.f32.mrb[0].mxu0
      %v1702 = vadd.f32 %v1605, %v1701
      %v1703 = vpop.f32.mrb[0].mxu0
      %1704 = vmatprep.mubr.bf16.mxu0 0
      %1705 = vmatmul.mubr.bf16.gmra.mrb[0].mxu0 %v304
      %v1706 = vpop.f32.mrb[0].mxu0
      %v1707 = vadd.f32 %v1610, %v1706
      %v1708 = vpop.f32.mrb[0].mxu0
      %v1709 = vpop.f32.mrb[0].mxu0
      %v1710 = vadd.f32 %v1613, %v1709
      %v1711 = vpop.f32.mrb[0].mxu0
      %1712 = vmatprep.mubr.bf16.mxu0 0
      %1713 = vmatmul.mubr.bf16.gmra.mrb[0].mxu0 %v307
      %v1714 = vpop.f32.mrb[0].mxu0
      %v1715 = vadd.f32 %v1618, %v1714
      %v1716 = vpop.f32.mrb[0].mxu0
      %v1717 = vpop.f32.mrb[0].mxu0
      %v1718 = vadd.f32 %v1621, %v1717
      %v1719 = vpop.f32.mrb[0].mxu0
      %1720 = vmatprep.mubr.bf16.mxu0 0
      %1721 = vmatmul.mubr.bf16.gmra.mrb[0].mxu0 %v310
      %v1722 = vpop.f32.mrb[0].mxu0
      %v1723 = vadd.f32 %v1626, %v1722
      %v1724 = vpop.f32.mrb[0].mxu0
      %v1725 = vpop.f32.mrb[0].mxu0
      %v1726 = vadd.f32 %v1629, %v1725
      %v1727 = vpop.f32.mrb[0].mxu0
      %1728 = vmatprep.mubr.bf16.mxu0 0
      %1729 = vmatmul.mubr.bf16.gmra.mrb[0].mxu0 %v313
      %v1730 = vpop.f32.mrb[0].mxu0
      %v1731 = vadd.f32 %v1634, %v1730
      %v1732 = vpop.f32.mrb[0].mxu0
      %v1733 = vpop.f32.mrb[0].mxu0
      %v1734 = vadd.f32 %v1637, %v1733
      %v1735 = vpop.f32.mrb[0].mxu0
      %1736 = vmatprep.mubr.bf16.mxu0 0
      %1737 = vmatmul.mubr.bf16.gmra.mrb[0].mxu0 %v316
      %v1738 = vpop.f32.mrb[0].mxu0
      %v1739 = vadd.f32 %v1642, %v1738
      %v1740 = vpop.f32.mrb[0].mxu0
      %v1741 = vpop.f32.mrb[0].mxu0
      %v1742 = vadd.f32 %v1645, %v1741
      %v1743 = vpop.f32.mrb[0].mxu0
      %1744 = vmatprep.mubr.bf16.mxu0 0
      %1745 = vmatmul.mubr.bf16.gmra.mrb[0].mxu0 %v319
      %v1746 = vpop.f32.mrb[0].mxu0
      %v1747 = vadd.f32 %v1650, %v1746
      %v1748 = vpop.f32.mrb[0].mxu0
      %v1749 = vpop.f32.mrb[0].mxu0
      %v1750 = vadd.f32 %v1653, %v1749
      %v1751 = vpop.f32.mrb[0].mxu0
      %1752 = vmatprep.mubr.bf16.mxu0 0
      %1753 = vmatmul.mubr.bf16.gmra.mrb[0].mxu0 %v322
      %v1754 = vpop.f32.mrb[0].mxu0
      %v1755 = vadd.f32 %v1658, %v1754
      %v1756 = vpop.f32.mrb[0].mxu0
      %v1757 = vpop.f32.mrb[0].mxu0
      %v1758 = vadd.f32 %v1661, %v1757
      %v1759 = vpop.f32.mrb[0].mxu0
      %1760 = vdwg.mxu0
      %1761 = vmatprep.subr.bf16.mxu0 0
      %1762 = vmatpush1.bf16.msra.mxu0 %v977
      %1763 = vmatprep.subr.bf16.mxu0 0
      %1764 = vmatpush1.bf16.msra.mxu0 0
      %1765 = vmatprep.subr.bf16.mxu0 0
      %1766 = vmatpush1.bf16.msra.mxu0 0
      %1767 = vmatprep.subr.bf16.mxu0 0
      %1768 = vmatpush1.bf16.msra.mxu0 0
      %1769 = vmatprep.subr.bf16.mxu0 0
      %1770 = vmatpush1.bf16.msra.mxu0 0
      %1771 = vmatprep.subr.bf16.mxu0 0
      %1772 = vmatpush1.bf16.msra.mxu0 0
      %1773 = vmatprep.subr.bf16.mxu0 0
      %1774 = vmatpush1.bf16.msra.mxu0 0
      %1775 = vmatprep.subr.bf16.mxu0 0
      %1776 = vmatpush1.bf16.msra.mxu0 0
      %1777 = vmatprep.subr.bf16.mxu0 0
      %1778 = vmatpush1.bf16.msra.mxu0 0
      %1779 = vmatprep.subr.bf16.mxu0 0
      %1780 = vmatpush1.bf16.msra.mxu0 0
      %1781 = vmatprep.subr.bf16.mxu0 0
      %1782 = vmatpush1.bf16.msra.mxu0 0
      %1783 = vmatprep.subr.bf16.mxu0 0
      %1784 = vmatpush1.bf16.msra.mxu0 0
      %1785 = vmatprep.subr.bf16.mxu0 0
      %1786 = vmatpush1.bf16.msra.mxu0 0
      %1787 = vmatprep.subr.bf16.mxu0 0
      %1788 = vmatpush1.bf16.msra.mxu0 0
      %1789 = vmatprep.subr.bf16.mxu0 0
      %1790 = vmatpush1.bf16.msra.mxu0 0
      %1791 = vmatprep.subr.bf16.mxu0 0
      %1792 = vmatpush1.bf16.msra.mxu0 0
      %1793 = vmatprep.mubr.bf16.mxu0 0
      %1794 = vmatmul.mubr.bf16.gmra.mrb[0].mxu0 %v1367
      %v1795 = vpop.f32.mrb[0].mxu0
      %v1796 = vadd.f32 0.0, %v1795
      %v1797 = vpop.f32.mrb[0].mxu0
      %v1798 = vpop.f32.mrb[0].mxu0
      %v1799 = vadd.f32 0.0, %v1798
      %v1800 = vpop.f32.mrb[0].mxu0
      %1801 = vmatprep.mubr.bf16.mxu0 0
      %1802 = vmatmul.mubr.bf16.gmra.mrb[0].mxu0 %v1370
      %v1803 = vpop.f32.mrb[0].mxu0
      %v1804 = vadd.f32 0.0, %v1803
      %v1805 = vpop.f32.mrb[0].mxu0
      %v1806 = vpop.f32.mrb[0].mxu0
      %v1807 = vadd.f32 0.0, %v1806
      %v1808 = vpop.f32.mrb[0].mxu0
      %1809 = vmatprep.mubr.bf16.mxu0 0
      %1810 = vmatmul.mubr.bf16.gmra.mrb[0].mxu0 %v1373
      %v1811 = vpop.f32.mrb[0].mxu0
      %v1812 = vadd.f32 0.0, %v1811
      %v1813 = vpop.f32.mrb[0].mxu0
      %v1814 = vpop.f32.mrb[0].mxu0
      %v1815 = vadd.f32 0.0, %v1814
      %v1816 = vpop.f32.mrb[0].mxu0
      %1817 = vmatprep.mubr.bf16.mxu0 0
      %1818 = vmatmul.mubr.bf16.gmra.mrb[0].mxu0 %v1376
      %v1819 = vpop.f32.mrb[0].mxu0
      %v1820 = vadd.f32 0.0, %v1819
      %v1821 = vpop.f32.mrb[0].mxu0
      %v1822 = vpop.f32.mrb[0].mxu0
      %v1823 = vadd.f32 0.0, %v1822
      %v1824 = vpop.f32.mrb[0].mxu0
      %1825 = vmatprep.mubr.bf16.mxu0 0
      %1826 = vmatmul.mubr.bf16.gmra.mrb[0].mxu0 %v1379
      %v1827 = vpop.f32.mrb[0].mxu0
      %v1828 = vadd.f32 0.0, %v1827
      %v1829 = vpop.f32.mrb[0].mxu0
      %v1830 = vpop.f32.mrb[0].mxu0
      %v1831 = vadd.f32 0.0, %v1830
      %v1832 = vpop.f32.mrb[0].mxu0
      %1833 = vmatprep.mubr.bf16.mxu0 0
      %1834 = vmatmul.mubr.bf16.gmra.mrb[0].mxu0 %v1382
      %v1835 = vpop.f32.mrb[0].mxu0
      %v1836 = vadd.f32 0.0, %v1835
      %v1837 = vpop.f32.mrb[0].mxu0
      %v1838 = vpop.f32.mrb[0].mxu0
      %v1839 = vadd.f32 0.0, %v1838
      %v1840 = vpop.f32.mrb[0].mxu0
      %1841 = vmatprep.mubr.bf16.mxu0 0
      %1842 = vmatmul.mubr.bf16.gmra.mrb[0].mxu0 %v1385
      %v1843 = vpop.f32.mrb[0].mxu0
      %v1844 = vadd.f32 0.0, %v1843
      %v1845 = vpop.f32.mrb[0].mxu0
      %v1846 = vpop.f32.mrb[0].mxu0
      %v1847 = vadd.f32 0.0, %v1846
      %v1848 = vpop.f32.mrb[0].mxu0
      %1849 = vmatprep.mubr.bf16.mxu0 0
      %1850 = vmatmul.mubr.bf16.gmra.mrb[0].mxu0 %v1388
      %v1851 = vpop.f32.mrb[0].mxu0
      %v1852 = vadd.f32 0.0, %v1851
      %v1853 = vpop.f32.mrb[0].mxu0
      %v1854 = vpop.f32.mrb[0].mxu0
      %v1855 = vadd.f32 0.0, %v1854
      %v1856 = vpop.f32.mrb[0].mxu0
      %1857 = vdwg.mxu0
      %v1858 = vadd.f32 %v1699, %v1796
      %v1859 = vadd.f32 %v1702, %v1799
      %v1860 = vadd.f32 %v1707, %v1804
      %v1861 = vadd.f32 %v1710, %v1807
      %v1862 = vadd.f32 %v1715, %v1812
      %v1863 = vadd.f32 %v1718, %v1815
      %v1864 = vadd.f32 %v1723, %v1820
      %v1865 = vadd.f32 %v1726, %v1823
      %v1866 = vadd.f32 %v1731, %v1828
      %v1867 = vadd.f32 %v1734, %v1831
      %v1868 = vadd.f32 %v1739, %v1836
      %v1869 = vadd.f32 %v1742, %v1839
      %v1870 = vadd.f32 %v1747, %v1844
      %v1871 = vadd.f32 %v1750, %v1847
      %v1872 = vadd.f32 %v1755, %v1852
      %v1873 = vadd.f32 %v1758, %v1855
      %v1874 = vmul.f32 %v1858, %v207
      %v1875 = vmul.f32 %v1859, %v207
      %v1876 = vmul.f32 %v1860, %v207
      %v1877 = vmul.f32 %v1861, %v207
      %v1878 = vmul.f32 %v1862, %v207
      %v1879 = vmul.f32 %v1863, %v207
      %v1880 = vmul.f32 %v1864, %v207
      %v1881 = vmul.f32 %v1865, %v207
      %v1882 = vmul.f32 %v1866, %v207
      %v1883 = vmul.f32 %v1867, %v207
      %v1884 = vmul.f32 %v1868, %v207
      %v1885 = vmul.f32 %v1869, %v207
      %v1886 = vmul.f32 %v1870, %v207
      %v1887 = vmul.f32 %v1871, %v207
      %v1888 = vmul.f32 %v1872, %v207
      %v1889 = vmul.f32 %v1873, %v207
      %v1890 = vadd.f32 %v1874, %v214
      %v1891 = vadd.f32 %v1875, %v214
      %v1892 = vadd.f32 %v1876, %v214
      %v1893 = vadd.f32 %v1877, %v214
      %v1894 = vadd.f32 %v1878, %v214
      %v1895 = vadd.f32 %v1879, %v214
      %v1896 = vadd.f32 %v1880, %v214
      %v1897 = vadd.f32 %v1881, %v214
      %v1898 = vadd.f32 %v1882, %v214
      %v1899 = vadd.f32 %v1883, %v214
      %v1900 = vadd.f32 %v1884, %v214
      %v1901 = vadd.f32 %v1885, %v214
      %v1902 = vadd.f32 %v1886, %v214
      %v1903 = vadd.f32 %v1887, %v214
      %v1904 = vadd.f32 %v1888, %v214
      %v1905 = vadd.f32 %v1889, %v214
      %v1906 = vmax.f32 %v1890, 0.0
      %v1907 = vmax.f32 %v1891, 0.0
      %v1908 = vmax.f32 %v1892, 0.0
      %v1909 = vmax.f32 %v1893, 0.0
      %v1910 = vmax.f32 %v1894, 0.0
      %v1911 = vmax.f32 %v1895, 0.0
      %v1912 = vmax.f32 %v1896, 0.0
      %v1913 = vmax.f32 %v1897, 0.0
      %v1914 = vmax.f32 %v1898, 0.0
      %v1915 = vmax.f32 %v1899, 0.0
      %v1916 = vmax.f32 %v1900, 0.0
      %v1917 = vmax.f32 %v1901, 0.0
      %v1918 = vmax.f32 %v1902, 0.0
      %v1919 = vmax.f32 %v1903, 0.0
      %v1920 = vmax.f32 %v1904, 0.0
      %v1921 = vmax.f32 %v1905, 0.0
      %v1922 = vmax.f32 %v1551, %v1906
      %v1923 = vmax.f32 %v1552, %v1907
      %v1924 = vmax.f32 %v1553, %v1908
      %v1925 = vmax.f32 %v1554, %v1909
      %v1926 = vmax.f32 %v1555, %v1910
      %v1927 = vmax.f32 %v1556, %v1911
      %v1928 = vmax.f32 %v1557, %v1912
      %v1929 = vmax.f32 %v1558, %v1913
      %v1930 = vmax.f32 %v1559, %v1914
      %v1931 = vmax.f32 %v1560, %v1915
      %v1932 = vmax.f32 %v1561, %v1916
      %v1933 = vmax.f32 %v1562, %v1917
      %v1934 = vmax.f32 %v1563, %v1918
      %v1935 = vmax.f32 %v1564, %v1919
      %v1936 = vmax.f32 %v1565, %v1920
      %v1937 = vmax.f32 %v1566, %v1921
      %v1938 = vpack.c.bf16 %v1923, %v1922
      %v1939 = vpack.c.bf16 %v1925, %v1924
      %v1940 = vpack.c.bf16 %v1927, %v1926
      %v1941 = vpack.c.bf16 %v1929, %v1928
      %v1942 = vpack.c.bf16 %v1931, %v1930
      %v1943 = vpack.c.bf16 %v1933, %v1932
      %v1944 = vpack.c.bf16 %v1935, %v1934
      %v1945 = vpack.c.bf16 %v1937, %v1936
      %v1954 = vunpack.c.l.b16 %v1938
      %v1955 = vunpack.c.h.b16 %v1938
      %v1956 = vunpack.c.l.b16 %v1939
      %v1957 = vunpack.c.h.b16 %v1939
      %v1958 = vunpack.c.l.b16 %v1940
      %v1959 = vunpack.c.h.b16 %v1940
      %v1960 = vunpack.c.l.b16 %v1941
      %v1961 = vunpack.c.h.b16 %v1941
      %v1962 = vunpack.c.l.b16 %v1942
      %v1963 = vunpack.c.h.b16 %v1942
      %v1964 = vunpack.c.l.b16 %v1943
      %v1965 = vunpack.c.h.b16 %v1943
      %v1966 = vunpack.c.l.b16 %v1944
      %v1967 = vunpack.c.h.b16 %v1944
      %v1968 = vunpack.c.l.b16 %v1945
      %v1969 = vunpack.c.h.b16 %v1945
      %v1970 = vpack.c.b16 %v1954, %v1954
      %v1971 = vpack.c.b16 %v1955, %v1955
      %v1972 = vpack.c.b16 %v1956, %v1956
      %v1973 = vpack.c.b16 %v1957, %v1957
      %v1974 = vpack.c.b16 %v1958, %v1958
      %v1975 = vpack.c.b16 %v1959, %v1959
      %v1976 = vpack.c.b16 %v1960, %v1960
      %v1977 = vpack.c.b16 %v1961, %v1961
      %v1978 = vpack.c.b16 %v1962, %v1962
      %v1979 = vpack.c.b16 %v1963, %v1963
      %v1980 = vpack.c.b16 %v1964, %v1964
      %v1981 = vpack.c.b16 %v1965, %v1965
      %v1982 = vpack.c.b16 %v1966, %v1966
      %v1983 = vpack.c.b16 %v1967, %v1967
      %v1984 = vpack.c.b16 %v1968, %v1968
      %v1985 = vpack.c.b16 %v1969, %v1969
      %2002 = vst [vmem:[%s199] sm:$0xf] %v1970
      %2003 = vst [vmem:[%s199 + $0x4] sm:$0xf] %v1971
      %2004 = vst [vmem:[%s199 + $0x8] sm:$0xf] %v1972
      %2005 = vst [vmem:[%s199 + $0xc] sm:$0xf] %v1973
      %2006 = vst [vmem:[%s199 + $0x10] sm:$0xf] %v1974
      %2007 = vst [vmem:[%s199 + $0x14] sm:$0xf] %v1975
      %2008 = vst [vmem:[%s199 + $0x18] sm:$0xf] %v1976
      %2009 = vst [vmem:[%s199 + $0x1c] sm:$0xf] %v1977
      %2010 = vst [vmem:[%s199 + $0x20] sm:$0xf] %v1978
      %2011 = vst [vmem:[%s199 + $0x24] sm:$0xf] %v1979
      %2012 = vst [vmem:[%s199 + $0x28] sm:$0xf] %v1980
      %2013 = vst [vmem:[%s199 + $0x2c] sm:$0xf] %v1981
      %2014 = vst [vmem:[%s199 + $0x30] sm:$0xf] %v1982
      %2015 = vst [vmem:[%s199 + $0x34] sm:$0xf] %v1983
      %2016 = vst [vmem:[%s199 + $0x38] sm:$0xf] %v1984
      %2017 = vst [vmem:[%s199 + $0x3c] sm:$0xf] %v1985
      %s2018 = smul.u32 16, %s15
      %p2019 = scmp.lt.s32.totalorder %s2018, 31
      %s2020 = scalar_select %p2019, %s2018, 31
      %s2021 = smul.addr %s2020, 4
      %s2022 = scalar_lea.vmem %s4, %s2021
      // Predicated region
      $region37: #{proto_block_forward.3} parent=35 // pred_check
        %p2023 = pneg %p122
      $region38: #{proto_block_forward.3} parent=35 // pred_check_branch
        %2025 = sbr.rel (%p2023) target = $region40
      $region39: #{proto_block_forward.3} parent=35 // pred_region
        %s2026 = smul.u32 16, %s15
      $region40: #{proto_block_forward.3} parent=35 // pred_fallthru
        _
    $region36: #{proto_block_forward.3} parent=5 // pred_fallthru
      _
    %p2027 = scmp.le.s32.totalorder 2, %s10
    // Predicated region
    $region41: #{proto_block_forward.3} parent=5 // pred_check
      %p2028 = pneg %p2027
    $region42: #{proto_block_forward.3} parent=5 // pred_check_branch
      %2030 = sbr.rel (%p2028) target = $region44
    $region43: #{proto_block_forward.3} parent=5 // pred_region
      %s2031 = ssub.s32 %s10, 2
      // Predicated region
      $region45: #{proto_block_forward.3} parent=43 // pred_check
        %p2032 = pneg %p128
      $region46: #{proto_block_forward.3} parent=43 // pred_check_branch
        %2034 = sbr.rel (%p2032) target = $region48
      $region47: #{proto_block_forward.3} parent=43 // pred_region
        %s2035 = smul.u32 16, %s16
        %p2036 = scmp.lt.s32.totalorder %s2035, 31
        %s2037 = scalar_select %p2036, %s2035, 31
        %s2038 = smul.addr %s2037, 4
        %s2039 = scalar_lea.vmem %s4, %s2038
      $region48: #{proto_block_forward.3} parent=43 // pred_fallthru
        _
    $region44: #{proto_block_forward.3} parent=5 // pred_fallthru
      _
  $region6: #{proto_block_forward.3} parent=0 // loop_footer
    %s14 = sadd.s32 1, %s10
  $region7: #{proto_block_forward.3} parent=0 // loop_footer_branch
    %9 = sbr.rel target = $region3
  $region8: #{proto_block_forward.3} parent=0 // loop_exit
    _

</llo_original>
